<compile_context>
chip_gen: v7x
topology: tpu7x:2x2x1
jax: 0.10.0
libtpu: 0.0.40
codegen_flags: <defaults>
</compile_context>

<pallas_src>
import jax
import jax.numpy as jnp
from jax import lax
from jax.experimental import pallas as pl
from jax.experimental.pallas import tpu as pltpu

EPS = 1e-5      # nn.BatchNorm2d default eps
SLOPE = 0.01    # nn.LeakyReLU default negative_slope

# Everything is far below budget on all generations (v7x VMEM = 64 MiB);
# set the scoped limit explicitly so the fused design stays portable.
_CP = pltpu.CompilerParams(vmem_limit_bytes=32 * 1024 * 1024)


def _leaky(y):
    return jnp.where(y > 0, y, SLOPE * y)


def _bn_apply(h, gamma, beta):
    """Training-mode BatchNorm on an f32 (M, C) tile resident in VMEM.

    Two-pass variance (sum of (x - mean)^2): numerically safe and cheap since
    the whole tile is already in VMEM.  Biased variance, matching PyTorch's
    training-mode normalization.
    """
    m = h.shape[0]
    mean = jnp.sum(h, axis=0, keepdims=True) * (1.0 / m)
    d = h - mean
    var = jnp.sum(d * d, axis=0, keepdims=True) * (1.0 / m)
    return d * (gamma * lax.rsqrt(var + EPS)) + beta
    # TODO(synk): running-mean/var buffer updates are omitted; they do not
    # affect the training-mode forward output.


# ---------------------------------------------------------------- fused kernels

def _make_conv_bn_kernel(act):
    """patches @ W (MXU, bf16 in / f32 acc) -> BatchNorm -> optional LeakyReLU."""
    def kernel(p_ref, w_ref, g_ref, b_ref, o_ref):
        h = jnp.dot(p_ref[...], w_ref[...], preferred_element_type=jnp.float32)
        y = _bn_apply(h, g_ref[...], b_ref[...])
        if act:
            y = _leaky(y)
        o_ref[...] = y
    return kernel


def _make_resblock_kernel(final_act):
    """Entire Residual block in one call:
       3x3 conv -> BN -> LeakyReLU -> 1x1 conv -> BN -> skip add
       (+ optional trailing ResidualStack activation fused into the last block).
       The pre-activation LeakyReLU on x is applied in the im2col glue outside."""
    def kernel(x_ref, p_ref, w3_ref, ga_ref, ba_ref, w1_ref, gb_ref, bb_ref, o_ref):
        h = jnp.dot(p_ref[...], w3_ref[...], preferred_element_type=jnp.float32)
        h = _leaky(_bn_apply(h, ga_ref[...], ba_ref[...]))
        h = jnp.dot(h.astype(jnp.bfloat16), w1_ref[...],
                    preferred_element_type=jnp.float32)
        h = _bn_apply(h, gb_ref[...], bb_ref[...])
        y = x_ref[...] + h
        if final_act:
            y = _leaky(y)
        o_ref[...] = y
    return kernel


def _projector_kernel(x_ref, w_ref, b_ref, o_ref):
    """Final Linear: matmul with the bias add fused into the epilogue."""
    o_ref[...] = jnp.dot(x_ref[...], w_ref[...],
                         preferred_element_type=jnp.float32) + b_ref[...]


# ---------------------------------------------------------------- JAX glue

def _im2col(x4d, stride, pre_act=False):
    """3x3, pad=1 im2col in plain JAX (XLA fuses the pad/slice/concat); bf16 out.

    pre_act fuses the LeakyReLU that precedes each residual 3x3 conv into the
    patch construction (no extra kernel launch, no extra HBM pass).
    """
    if pre_act:
        x4d = _leaky(x4d)
    N, H, W, C = x4d.shape
    xp = jnp.pad(x4d, ((0, 0), (1, 1), (1, 1), (0, 0)))
    Ho = (H + 2 - 3) // stride + 1
    Wo = (W + 2 - 3) // stride + 1
    cols = [xp[:, i:i + stride * Ho:stride, j:j + stride * Wo:stride, :]
            for i in range(3) for j in range(3)]
    patches = jnp.concatenate(cols, axis=-1).reshape(N * Ho * Wo, 9 * C)
    return patches.astype(jnp.bfloat16), (N, Ho, Wo)


def conv_bn(x4d, w2d, gamma, beta, stride, act):
    """Fused 3x3 conv (stride s, pad 1) + training BatchNorm + optional LeakyReLU."""
    patches, (N, Ho, Wo) = _im2col(x4d, stride)
    C_out = w2d.shape[1]
    out = pl.pallas_call(
        _make_conv_bn_kernel(act),
        out_shape=jax.ShapeDtypeStruct((N * Ho * Wo, C_out), jnp.float32),
        compiler_params=_CP,
    )(patches, w2d, gamma, beta)
    return out, (N, Ho, Wo, C_out)


def residual_block(x2d, shp, blk, final_act):
    N, H, W, C = shp
    patches, _ = _im2col(x2d.reshape(N, H, W, C), stride=1, pre_act=True)
    return pl.pallas_call(
        _make_resblock_kernel(final_act),
        out_shape=jax.ShapeDtypeStruct((N * H * W, C), jnp.float32),
        compiler_params=_CP,
    )(x2d, patches, blk["w3"], blk["ga"], blk["ba"],
      blk["w1"], blk["gb"], blk["bb"])


def projector(flat, w2d, bias):
    N = flat.shape[0]
    latent = w2d.shape[1]
    return pl.pallas_call(
        _projector_kernel,
        out_shape=jax.ShapeDtypeStruct((N, latent), jnp.float32),
        compiler_params=_CP,
    )(flat.astype(jnp.bfloat16), w2d, bias)


# ---------------------------------------------------------------- parameters

def init_params(key, in_channels=1, base=8, latent=10, input_size=32, layers=4):
    """PyTorch-convention parameters (conv weights OIHW, Linear weight (out, in))."""
    def conv_w(k, o, c, ks):
        fan_in = c * ks * ks
        return jax.random.normal(k, (o, c, ks, ks), jnp.float32) / jnp.sqrt(fan_in)

    def bn(c):
        # PyTorch BatchNorm2d default init: weight=1, bias=0
        return (jnp.ones((c,), jnp.float32), jnp.zeros((c,), jnp.float32))

    keys = iter(jax.random.split(key, 64))
    p = {}
    p["conv1"], p["bn1"] = conv_w(next(keys), base, in_channels, 3), bn(base)
    p["conv2"], p["bn2"] = conv_w(next(keys), 2 * base, base, 3), bn(2 * base)
    p["stack1"] = []
    for _ in range(layers):
        c = 2 * base
        p["stack1"].append(dict(w3=conv_w(next(keys), c, c, 3), bn_a=bn(c),
                                w1=conv_w(next(keys), c, c, 1), bn_b=bn(c)))
    p["conv3"], p["bn3"] = conv_w(next(keys), 4 * base, 2 * base, 3), bn(4 * base)
    p["conv4"], p["bn4"] = conv_w(next(keys), 8 * base, 4 * base, 3), bn(8 * base)
    p["stack2"] = []
    for _ in range(layers):
        c = 8 * base
        p["stack2"].append(dict(w3=conv_w(next(keys), c, c, 3), bn_a=bn(c),
                                w1=conv_w(next(keys), c, c, 1), bn_b=bn(c)))
    feat = 8 * base * (input_size // 2 ** layers) ** 2
    p["proj_w"] = jax.random.normal(next(keys), (latent, feat), jnp.float32) / jnp.sqrt(feat)
    p["proj_b"] = jnp.zeros((latent,), jnp.float32)
    return p


def prepare_params(p):
    """One-time layout prep (done once, outside the hot path):
       conv weights (O,Cin,kh,kw) -> (kh*kw*Cin, O) bf16 matmul layout,
       BN gamma/beta -> (1, C) f32,
       projector weight pre-transposed to (feat, latent) bf16, bias -> (1, latent)."""
    def conv(w):  # matches the im2col tap ordering (i, j, cin)
        O, Cin, kh, kw = w.shape
        return jnp.transpose(w, (2, 3, 1, 0)).reshape(kh * kw * Cin, O).astype(jnp.bfloat16)

    def bn(gb):
        g, b = gb
        return (g.reshape(1, -1).astype(jnp.float32),
                b.reshape(1, -1).astype(jnp.float32))

    q = {}
    for name in ("conv1", "conv2", "conv3", "conv4"):
        q[name] = conv(p[name])
    for name in ("bn1", "bn2", "bn3", "bn4"):
        q[name] = bn(p[name])
    for s in ("stack1", "stack2"):
        q[s] = []
        for blk in p[s]:
            ga, ba = bn(blk["bn_a"])
            gb, bb = bn(blk["bn_b"])
            q[s].append(dict(w3=conv(blk["w3"]), ga=ga, ba=ba,
                             w1=conv(blk["w1"]), gb=gb, bb=bb))
    q["proj_w"] = jnp.transpose(p["proj_w"]).astype(jnp.bfloat16)   # (feat, latent)
    q["proj_b"] = p["proj_b"].reshape(1, -1).astype(jnp.float32)
    return q


# ---------------------------------------------------------------- forward

def encoder_forward(prep, x_nchw):
    x = jnp.transpose(x_nchw, (0, 2, 3, 1)).astype(jnp.float32)   # NCHW -> NHWC

    h, shp = conv_bn(x, prep["conv1"], *prep["bn1"], stride=2, act=True)
    h, shp = conv_bn(h.reshape(shp), prep["conv2"], *prep["bn2"], stride=2, act=False)
    n1 = len(prep["stack1"])
    for i, blk in enumerate(prep["stack1"]):
        h = residual_block(h, shp, blk, final_act=(i == n1 - 1))   # stack tail act fused
    h, shp = conv_bn(h.reshape(shp), prep["conv3"], *prep["bn3"], stride=2, act=True)
    h, shp = conv_bn(h.reshape(shp), prep["conv4"], *prep["bn4"], stride=2, act=False)
    n2 = len(prep["stack2"])
    for i, blk in enumerate(prep["stack2"]):
        h = residual_block(h, shp, blk, final_act=(i == n2 - 1))

    # Flatten in PyTorch NCHW order, then fused Linear projector (matmul + bias).
    N, H, W, C = shp
    flat = jnp.transpose(h.reshape(N, H, W, C), (0, 3, 1, 2)).reshape(N, C * H * W)
    return projector(flat, prep["proj_w"], prep["proj_b"])


if __name__ == "__main__":
    key = jax.random.PRNGKey(0)
    pkey, xkey = jax.random.split(key)
    # small config: in_channels=1, base_channels=8, latent_dim=10, input_size=32, layers=4
    params = init_params(pkey, in_channels=1, base=8, latent=10, input_size=32, layers=4)
    prep = prepare_params(params)                        # one-time weight layout prep
    x = jax.random.normal(xkey, (2, 1, 32, 32), jnp.float32)  # NCHW like PyTorch
    fwd = jax.jit(encoder_forward)
    out = jax.block_until_ready(fwd(prep, x))
    assert out.shape == (2, 10), out.shape
    assert bool(jnp.all(jnp.isfinite(out)))
    print("KERNEL_OK")
</pallas_src>

<mosaic_0001>
module attributes {stable_mosaic.version = 11 : i64} {
  func.func @kernel(%arg0: memref<512x9xbf16, #tpu.memory_space<vmem>>, %arg1: memref<9x8xbf16, #tpu.memory_space<vmem>>, %arg2: memref<1x8xf32, #tpu.memory_space<vmem>>, %arg3: memref<1x8xf32, #tpu.memory_space<vmem>>, %arg4: memref<512x8xf32, #tpu.memory_space<vmem>>) attributes {dimension_semantics = [], scalar_prefetch = 0 : i64, scratch_operands = 0 : i64, tpu.core_type = #tpu.core_type<tc>} {
    %c0 = arith.constant 0 : index
    %c0_0 = arith.constant 0 : index
    %0 = vector.load %arg0[%c0, %c0_0] : memref<512x9xbf16, #tpu.memory_space<vmem>>, vector<512x9xbf16>
    %c0_1 = arith.constant 0 : index
    %c0_2 = arith.constant 0 : index
    %1 = vector.load %arg1[%c0_1, %c0_2] : memref<9x8xbf16, #tpu.memory_space<vmem>>, vector<9x8xbf16>
    %cst = arith.constant dense<0.000000e+00> : vector<512x8xf32>
    %2 = tpu.matmul %0, %1, %cst {dimension_numbers = #tpu.dot_dimension_numbers<[1], [0], [0], [1], [0, 0, 1, 1], [], []>} : vector<512x9xbf16>, vector<9x8xbf16>, vector<512x8xf32> -> vector<512x8xf32>
    %c0_3 = arith.constant 0 : index
    %c0_4 = arith.constant 0 : index
    %3 = vector.load %arg2[%c0_3, %c0_4] : memref<1x8xf32, #tpu.memory_space<vmem>>, vector<1x8xf32>
    %c0_5 = arith.constant 0 : index
    %c0_6 = arith.constant 0 : index
    %4 = vector.load %arg3[%c0_5, %c0_6] : memref<1x8xf32, #tpu.memory_space<vmem>>, vector<1x8xf32>
    %cst_7 = arith.constant dense<0.000000e+00> : vector<8xf32>
    %5 = vector.multi_reduction <add>, %2, %cst_7 [0] : vector<512x8xf32> to vector<8xf32>
    %6 = vector.shape_cast %5 : vector<8xf32> to vector<1x8xf32>
    %cst_8 = arith.constant 0.001953125 : f32
    %7 = vector.broadcast %cst_8 : f32 to vector<1x8xf32>
    %8 = arith.mulf %6, %7 : vector<1x8xf32>
    %9 = vector.broadcast %8 : vector<1x8xf32> to vector<512x8xf32>
    %10 = arith.subf %2, %9 : vector<512x8xf32>
    %11 = arith.mulf %10, %10 : vector<512x8xf32>
    %cst_9 = arith.constant dense<0.000000e+00> : vector<8xf32>
    %12 = vector.multi_reduction <add>, %11, %cst_9 [0] : vector<512x8xf32> to vector<8xf32>
    %13 = vector.shape_cast %12 : vector<8xf32> to vector<1x8xf32>
    %cst_10 = arith.constant 0.001953125 : f32
    %14 = vector.broadcast %cst_10 : f32 to vector<1x8xf32>
    %15 = arith.mulf %13, %14 : vector<1x8xf32>
    %cst_11 = arith.constant 9.99999974E-6 : f32
    %16 = vector.broadcast %cst_11 : f32 to vector<1x8xf32>
    %17 = arith.addf %15, %16 : vector<1x8xf32>
    %18 = math.rsqrt %17 : vector<1x8xf32>
    %19 = arith.mulf %3, %18 : vector<1x8xf32>
    %20 = vector.broadcast %19 : vector<1x8xf32> to vector<512x8xf32>
    %21 = arith.mulf %10, %20 : vector<512x8xf32>
    %22 = vector.broadcast %4 : vector<1x8xf32> to vector<512x8xf32>
    %23 = arith.addf %21, %22 : vector<512x8xf32>
    %cst_12 = arith.constant 0.000000e+00 : f32
    %24 = vector.broadcast %cst_12 : f32 to vector<512x8xf32>
    %25 = arith.cmpf ogt, %23, %24 : vector<512x8xf32>
    %cst_13 = arith.constant 0.00999999977 : f32
    %26 = vector.broadcast %cst_13 : f32 to vector<512x8xf32>
    %27 = arith.mulf %26, %23 : vector<512x8xf32>
    %28 = arith.select %25, %23, %27 : vector<512x8xi1>, vector<512x8xf32>
    %c0_14 = arith.constant 0 : index
    %c0_15 = arith.constant 0 : index
    %29 = vector.load %arg4[%c0_14, %c0_15] : memref<512x8xf32, #tpu.memory_space<vmem>>, vector<512x8xf32>
    tpu.vector_store %arg4[%c0_14, %c0_15], %28 {strides = array<i32>} : memref<512x8xf32, #tpu.memory_space<vmem>>, vector<512x8xf32>,
    return
  }
}

module attributes {stable_mosaic.version = 11 : i64} {
  func.func @kernel(%arg0: memref<128x72xbf16, #tpu.memory_space<vmem>>, %arg1: memref<72x16xbf16, #tpu.memory_space<vmem>>, %arg2: memref<1x16xf32, #tpu.memory_space<vmem>>, %arg3: memref<1x16xf32, #tpu.memory_space<vmem>>, %arg4: memref<128x16xf32, #tpu.memory_space<vmem>>) attributes {dimension_semantics = [], scalar_prefetch = 0 : i64, scratch_operands = 0 : i64, tpu.core_type = #tpu.core_type<tc>} {
    %c0 = arith.constant 0 : index
    %c0_0 = arith.constant 0 : index
    %0 = vector.load %arg0[%c0, %c0_0] : memref<128x72xbf16, #tpu.memory_space<vmem>>, vector<128x72xbf16>
    %c0_1 = arith.constant 0 : index
    %c0_2 = arith.constant 0 : index
    %1 = vector.load %arg1[%c0_1, %c0_2] : memref<72x16xbf16, #tpu.memory_space<vmem>>, vector<72x16xbf16>
    %cst = arith.constant dense<0.000000e+00> : vector<128x16xf32>
    %2 = tpu.matmul %0, %1, %cst {dimension_numbers = #tpu.dot_dimension_numbers<[1], [0], [0], [1], [0, 0, 1, 1], [], []>} : vector<128x72xbf16>, vector<72x16xbf16>, vector<128x16xf32> -> vector<128x16xf32>
    %c0_3 = arith.constant 0 : index
    %c0_4 = arith.constant 0 : index
    %3 = vector.load %arg2[%c0_3, %c0_4] : memref<1x16xf32, #tpu.memory_space<vmem>>, vector<1x16xf32>
    %c0_5 = arith.constant 0 : index
    %c0_6 = arith.constant 0 : index
    %4 = vector.load %arg3[%c0_5, %c0_6] : memref<1x16xf32, #tpu.memory_space<vmem>>, vector<1x16xf32>
    %cst_7 = arith.constant dense<0.000000e+00> : vector<16xf32>
    %5 = vector.multi_reduction <add>, %2, %cst_7 [0] : vector<128x16xf32> to vector<16xf32>
    %6 = vector.shape_cast %5 : vector<16xf32> to vector<1x16xf32>
    %cst_8 = arith.constant 7.812500e-03 : f32
    %7 = vector.broadcast %cst_8 : f32 to vector<1x16xf32>
    %8 = arith.mulf %6, %7 : vector<1x16xf32>
    %9 = vector.broadcast %8 : vector<1x16xf32> to vector<128x16xf32>
    %10 = arith.subf %2, %9 : vector<128x16xf32>
    %11 = arith.mulf %10, %10 : vector<128x16xf32>
    %cst_9 = arith.constant dense<0.000000e+00> : vector<16xf32>
    %12 = vector.multi_reduction <add>, %11, %cst_9 [0] : vector<128x16xf32> to vector<16xf32>
    %13 = vector.shape_cast %12 : vector<16xf32> to vector<1x16xf32>
    %cst_10 = arith.constant 7.812500e-03 : f32
    %14 = vector.broadcast %cst_10 : f32 to vector<1x16xf32>
    %15 = arith.mulf %13, %14 : vector<1x16xf32>
    %cst_11 = arith.constant 9.99999974E-6 : f32
    %16 = vector.broadcast %cst_11 : f32 to vector<1x16xf32>
    %17 = arith.addf %15, %16 : vector<1x16xf32>
    %18 = math.rsqrt %17 : vector<1x16xf32>
    %19 = arith.mulf %3, %18 : vector<1x16xf32>
    %20 = vector.broadcast %19 : vector<1x16xf32> to vector<128x16xf32>
    %21 = arith.mulf %10, %20 : vector<128x16xf32>
    %22 = vector.broadcast %4 : vector<1x16xf32> to vector<128x16xf32>
    %23 = arith.addf %21, %22 : vector<128x16xf32>
    %c0_12 = arith.constant 0 : index
    %c0_13 = arith.constant 0 : index
    %24 = vector.load %arg4[%c0_12, %c0_13] : memref<128x16xf32, #tpu.memory_space<vmem>>, vector<128x16xf32>
    tpu.vector_store %arg4[%c0_12, %c0_13], %23 {strides = array<i32>} : memref<128x16xf32, #tpu.memory_space<vmem>>, vector<128x16xf32>,
    return
  }
}

module attributes {stable_mosaic.version = 11 : i64} {
  func.func @kernel(%arg0: memref<128x16xf32, #tpu.memory_space<vmem>>, %arg1: memref<128x144xbf16, #tpu.memory_space<vmem>>, %arg2: memref<144x16xbf16, #tpu.memory_space<vmem>>, %arg3: memref<1x16xf32, #tpu.memory_space<vmem>>, %arg4: memref<1x16xf32, #tpu.memory_space<vmem>>, %arg5: memref<16x16xbf16, #tpu.memory_space<vmem>>, %arg6: memref<1x16xf32, #tpu.memory_space<vmem>>, %arg7: memref<1x16xf32, #tpu.memory_space<vmem>>, %arg8: memref<128x16xf32, #tpu.memory_space<vmem>>) attributes {dimension_semantics = [], scalar_prefetch = 0 : i64, scratch_operands = 0 : i64, tpu.core_type = #tpu.core_type<tc>} {
    %c0 = arith.constant 0 : index
    %c0_0 = arith.constant 0 : index
    %0 = vector.load %arg1[%c0, %c0_0] : memref<128x144xbf16, #tpu.memory_space<vmem>>, vector<128x144xbf16>
    %c0_1 = arith.constant 0 : index
    %c0_2 = arith.constant 0 : index
    %1 = vector.load %arg2[%c0_1, %c0_2] : memref<144x16xbf16, #tpu.memory_space<vmem>>, vector<144x16xbf16>
    %cst = arith.constant dense<0.000000e+00> : vector<128x16xf32>
    %2 = tpu.matmul %0, %1, %cst {dimension_numbers = #tpu.dot_dimension_numbers<[1], [0], [0], [1], [0, 0, 1, 1], [], []>} : vector<128x144xbf16>, vector<144x16xbf16>, vector<128x16xf32> -> vector<128x16xf32>
    %c0_3 = arith.constant 0 : index
    %c0_4 = arith.constant 0 : index
    %3 = vector.load %arg3[%c0_3, %c0_4] : memref<1x16xf32, #tpu.memory_space<vmem>>, vector<1x16xf32>
    %c0_5 = arith.constant 0 : index
    %c0_6 = arith.constant 0 : index
    %4 = vector.load %arg4[%c0_5, %c0_6] : memref<1x16xf32, #tpu.memory_space<vmem>>, vector<1x16xf32>
    %cst_7 = arith.constant dense<0.000000e+00> : vector<16xf32>
    %5 = vector.multi_reduction <add>, %2, %cst_7 [0] : vector<128x16xf32> to vector<16xf32>
    %6 = vector.shape_cast %5 : vector<16xf32> to vector<1x16xf32>
    %cst_8 = arith.constant 7.812500e-03 : f32
    %7 = vector.broadcast %cst_8 : f32 to vector<1x16xf32>
    %8 = arith.mulf %6, %7 : vector<1x16xf32>
    %9 = vector.broadcast %8 : vector<1x16xf32> to vector<128x16xf32>
    %10 = arith.subf %2, %9 : vector<128x16xf32>
    %11 = arith.mulf %10, %10 : vector<128x16xf32>
    %cst_9 = arith.constant dense<0.000000e+00> : vector<16xf32>
    %12 = vector.multi_reduction <add>, %11, %cst_9 [0] : vector<128x16xf32> to vector<16xf32>
    %13 = vector.shape_cast %12 : vector<16xf32> to vector<1x16xf32>
    %cst_10 = arith.constant 7.812500e-03 : f32
    %14 = vector.broadcast %cst_10 : f32 to vector<1x16xf32>
    %15 = arith.mulf %13, %14 : vector<1x16xf32>
    %cst_11 = arith.constant 9.99999974E-6 : f32
    %16 = vector.broadcast %cst_11 : f32 to vector<1x16xf32>
    %17 = arith.addf %15, %16 : vector<1x16xf32>
    %18 = math.rsqrt %17 : vector<1x16xf32>
    %19 = arith.mulf %3, %18 : vector<1x16xf32>
    %20 = vector.broadcast %19 : vector<1x16xf32> to vector<128x16xf32>
    %21 = arith.mulf %10, %20 : vector<128x16xf32>
    %22 = vector.broadcast %4 : vector<1x16xf32> to vector<128x16xf32>
    %23 = arith.addf %21, %22 : vector<128x16xf32>
    %cst_12 = arith.constant 0.000000e+00 : f32
    %24 = vector.broadcast %cst_12 : f32 to vector<128x16xf32>
    %25 = arith.cmpf ogt, %23, %24 : vector<128x16xf32>
    %cst_13 = arith.constant 0.00999999977 : f32
    %26 = vector.broadcast %cst_13 : f32 to vector<128x16xf32>
    %27 = arith.mulf %26, %23 : vector<128x16xf32>
    %28 = arith.select %25, %23, %27 : vector<128x16xi1>, vector<128x16xf32>
    %29 = arith.truncf %28 : vector<128x16xf32> to vector<128x16xbf16>
    %c0_14 = arith.constant 0 : index
    %c0_15 = arith.constant 0 : index
    %30 = vector.load %arg5[%c0_14, %c0_15] : memref<16x16xbf16, #tpu.memory_space<vmem>>, vector<16x16xbf16>
    %cst_16 = arith.constant dense<0.000000e+00> : vector<128x16xf32>
    %31 = tpu.matmul %29, %30, %cst_16 {dimension_numbers = #tpu.dot_dimension_numbers<[1], [0], [0], [1], [0, 0, 1, 1], [], []>} : vector<128x16xbf16>, vector<16x16xbf16>, vector<128x16xf32> -> vector<128x16xf32>
    %c0_17 = arith.constant 0 : index
    %c0_18 = arith.constant 0 : index
    %32 = vector.load %arg6[%c0_17, %c0_18] : memref<1x16xf32, #tpu.memory_space<vmem>>, vector<1x16xf32>
    %c0_19 = arith.constant 0 : index
    %c0_20 = arith.constant 0 : index
    %33 = vector.load %arg7[%c0_19, %c0_20] : memref<1x16xf32, #tpu.memory_space<vmem>>, vector<1x16xf32>
    %cst_21 = arith.constant dense<0.000000e+00> : vector<16xf32>
    %34 = vector.multi_reduction <add>, %31, %cst_21 [0] : vector<128x16xf32> to vector<16xf32>
    %35 = vector.shape_cast %34 : vector<16xf32> to vector<1x16xf32>
    %cst_22 = arith.constant 7.812500e-03 : f32
    %36 = vector.broadcast %cst_22 : f32 to vector<1x16xf32>
    %37 = arith.mulf %35, %36 : vector<1x16xf32>
    %38 = vector.broadcast %37 : vector<1x16xf32> to vector<128x16xf32>
    %39 = arith.subf %31, %38 : vector<128x16xf32>
    %40 = arith.mulf %39, %39 : vector<128x16xf32>
    %cst_23 = arith.constant dense<0.000000e+00> : vector<16xf32>
    %41 = vector.multi_reduction <add>, %40, %cst_23 [0] : vector<128x16xf32> to vector<16xf32>
    %42 = vector.shape_cast %41 : vector<16xf32> to vector<1x16xf32>
    %cst_24 = arith.constant 7.812500e-03 : f32
    %43 = vector.broadcast %cst_24 : f32 to vector<1x16xf32>
    %44 = arith.mulf %42, %43 : vector<1x16xf32>
    %cst_25 = arith.constant 9.99999974E-6 : f32
    %45 = vector.broadcast %cst_25 : f32 to vector<1x16xf32>
    %46 = arith.addf %44, %45 : vector<1x16xf32>
    %47 = math.rsqrt %46 : vector<1x16xf32>
    %48 = arith.mulf %32, %47 : vector<1x16xf32>
    %49 = vector.broadcast %48 : vector<1x16xf32> to vector<128x16xf32>
    %50 = arith.mulf %39, %49 : vector<128x16xf32>
    %51 = vector.broadcast %33 : vector<1x16xf32> to vector<128x16xf32>
    %52 = arith.addf %50, %51 : vector<128x16xf32>
    %c0_26 = arith.constant 0 : index
    %c0_27 = arith.constant 0 : index
    %53 = vector.load %arg0[%c0_26, %c0_27] : memref<128x16xf32, #tpu.memory_space<vmem>>, vector<128x16xf32>
    %54 = arith.addf %53, %52 : vector<128x16xf32>
    %cst_28 = arith.constant 0.000000e+00 : f32
    %55 = vector.broadcast %cst_28 : f32 to vector<128x16xf32>
    %56 = arith.cmpf ogt, %54, %55 : vector<128x16xf32>
    %cst_29 = arith.constant 0.00999999977 : f32
    %57 = vector.broadcast %cst_29 : f32 to vector<128x16xf32>
    %58 = arith.mulf %57, %54 : vector<128x16xf32>
    %59 = arith.select %56, %54, %58 : vector<128x16xi1>, vector<128x16xf32>
    %c0_30 = arith.constant 0 : index
    %c0_31 = arith.constant 0 : index
    %60 = vector.load %arg8[%c0_30, %c0_31] : memref<128x16xf32, #tpu.memory_space<vmem>>, vector<128x16xf32>
    tpu.vector_store %arg8[%c0_30, %c0_31], %59 {strides = array<i32>} : memref<128x16xf32, #tpu.memory_space<vmem>>, vector<128x16xf32>,
    return
  }
}

module attributes {stable_mosaic.version = 11 : i64} {
  func.func @kernel(%arg0: memref<128x16xf32, #tpu.memory_space<vmem>>, %arg1: memref<128x144xbf16, #tpu.memory_space<vmem>>, %arg2: memref<144x16xbf16, #tpu.memory_space<vmem>>, %arg3: memref<1x16xf32, #tpu.memory_space<vmem>>, %arg4: memref<1x16xf32, #tpu.memory_space<vmem>>, %arg5: memref<16x16xbf16, #tpu.memory_space<vmem>>, %arg6: memref<1x16xf32, #tpu.memory_space<vmem>>, %arg7: memref<1x16xf32, #tpu.memory_space<vmem>>, %arg8: memref<128x16xf32, #tpu.memory_space<vmem>>) attributes {dimension_semantics = [], scalar_prefetch = 0 : i64, scratch_operands = 0 : i64, tpu.core_type = #tpu.core_type<tc>} {
    %c0 = arith.constant 0 : index
    %c0_0 = arith.constant 0 : index
    %0 = vector.load %arg1[%c0, %c0_0] : memref<128x144xbf16, #tpu.memory_space<vmem>>, vector<128x144xbf16>
    %c0_1 = arith.constant 0 : index
    %c0_2 = arith.constant 0 : index
    %1 = vector.load %arg2[%c0_1, %c0_2] : memref<144x16xbf16, #tpu.memory_space<vmem>>, vector<144x16xbf16>
    %cst = arith.constant dense<0.000000e+00> : vector<128x16xf32>
    %2 = tpu.matmul %0, %1, %cst {dimension_numbers = #tpu.dot_dimension_numbers<[1], [0], [0], [1], [0, 0, 1, 1], [], []>} : vector<128x144xbf16>, vector<144x16xbf16>, vector<128x16xf32> -> vector<128x16xf32>
    %c0_3 = arith.constant 0 : index
    %c0_4 = arith.constant 0 : index
    %3 = vector.load %arg3[%c0_3, %c0_4] : memref<1x16xf32, #tpu.memory_space<vmem>>, vector<1x16xf32>
    %c0_5 = arith.constant 0 : index
    %c0_6 = arith.constant 0 : index
    %4 = vector.load %arg4[%c0_5, %c0_6] : memref<1x16xf32, #tpu.memory_space<vmem>>, vector<1x16xf32>
    %cst_7 = arith.constant dense<0.000000e+00> : vector<16xf32>
    %5 = vector.multi_reduction <add>, %2, %cst_7 [0] : vector<128x16xf32> to vector<16xf32>
    %6 = vector.shape_cast %5 : vector<16xf32> to vector<1x16xf32>
    %cst_8 = arith.constant 7.812500e-03 : f32
    %7 = vector.broadcast %cst_8 : f32 to vector<1x16xf32>
    %8 = arith.mulf %6, %7 : vector<1x16xf32>
    %9 = vector.broadcast %8 : vector<1x16xf32> to vector<128x16xf32>
    %10 = arith.subf %2, %9 : vector<128x16xf32>
    %11 = arith.mulf %10, %10 : vector<128x16xf32>
    %cst_9 = arith.constant dense<0.000000e+00> : vector<16xf32>
    %12 = vector.multi_reduction <add>, %11, %cst_9 [0] : vector<128x16xf32> to vector<16xf32>
    %13 = vector.shape_cast %12 : vector<16xf32> to vector<1x16xf32>
    %cst_10 = arith.constant 7.812500e-03 : f32
    %14 = vector.broadcast %cst_10 : f32 to vector<1x16xf32>
    %15 = arith.mulf %13, %14 : vector<1x16xf32>
    %cst_11 = arith.constant 9.99999974E-6 : f32
    %16 = vector.broadcast %cst_11 : f32 to vector<1x16xf32>
    %17 = arith.addf %15, %16 : vector<1x16xf32>
    %18 = math.rsqrt %17 : vector<1x16xf32>
    %19 = arith.mulf %3, %18 : vector<1x16xf32>
    %20 = vector.broadcast %19 : vector<1x16xf32> to vector<128x16xf32>
    %21 = arith.mulf %10, %20 : vector<128x16xf32>
    %22 = vector.broadcast %4 : vector<1x16xf32> to vector<128x16xf32>
    %23 = arith.addf %21, %22 : vector<128x16xf32>
    %cst_12 = arith.constant 0.000000e+00 : f32
    %24 = vector.broadcast %cst_12 : f32 to vector<128x16xf32>
    %25 = arith.cmpf ogt, %23, %24 : vector<128x16xf32>
    %cst_13 = arith.constant 0.00999999977 : f32
    %26 = vector.broadcast %cst_13 : f32 to vector<128x16xf32>
    %27 = arith.mulf %26, %23 : vector<128x16xf32>
    %28 = arith.select %25, %23, %27 : vector<128x16xi1>, vector<128x16xf32>
    %29 = arith.truncf %28 : vector<128x16xf32> to vector<128x16xbf16>
    %c0_14 = arith.constant 0 : index
    %c0_15 = arith.constant 0 : index
    %30 = vector.load %arg5[%c0_14, %c0_15] : memref<16x16xbf16, #tpu.memory_space<vmem>>, vector<16x16xbf16>
    %cst_16 = arith.constant dense<0.000000e+00> : vector<128x16xf32>
    %31 = tpu.matmul %29, %30, %cst_16 {dimension_numbers = #tpu.dot_dimension_numbers<[1], [0], [0], [1], [0, 0, 1, 1], [], []>} : vector<128x16xbf16>, vector<16x16xbf16>, vector<128x16xf32> -> vector<128x16xf32>
    %c0_17 = arith.constant 0 : index
    %c0_18 = arith.constant 0 : index
    %32 = vector.load %arg6[%c0_17, %c0_18] : memref<1x16xf32, #tpu.memory_space<vmem>>, vector<1x16xf32>
    %c0_19 = arith.constant 0 : index
    %c0_20 = arith.constant 0 : index
    %33 = vector.load %arg7[%c0_19, %c0_20] : memref<1x16xf32, #tpu.memory_space<vmem>>, vector<1x16xf32>
    %cst_21 = arith.constant dense<0.000000e+00> : vector<16xf32>
    %34 = vector.multi_reduction <add>, %31, %cst_21 [0] : vector<128x16xf32> to vector<16xf32>
    %35 = vector.shape_cast %34 : vector<16xf32> to vector<1x16xf32>
    %cst_22 = arith.constant 7.812500e-03 : f32
    %36 = vector.broadcast %cst_22 : f32 to vector<1x16xf32>
    %37 = arith.mulf %35, %36 : vector<1x16xf32>
    %38 = vector.broadcast %37 : vector<1x16xf32> to vector<128x16xf32>
    %39 = arith.subf %31, %38 : vector<128x16xf32>
    %40 = arith.mulf %39, %39 : vector<128x16xf32>
    %cst_23 = arith.constant dense<0.000000e+00> : vector<16xf32>
    %41 = vector.multi_reduction <add>, %40, %cst_23 [0] : vector<128x16xf32> to vector<16xf32>
    %42 = vector.shape_cast %41 : vector<16xf32> to vector<1x16xf32>
    %cst_24 = arith.constant 7.812500e-03 : f32
    %43 = vector.broadcast %cst_24 : f32 to vector<1x16xf32>
    %44 = arith.mulf %42, %43 : vector<1x16xf32>
    %cst_25 = arith.constant 9.99999974E-6 : f32
    %45 = vector.broadcast %cst_25 : f32 to vector<1x16xf32>
    %46 = arith.addf %44, %45 : vector<1x16xf32>
    %47 = math.rsqrt %46 : vector<1x16xf32>
    %48 = arith.mulf %32, %47 : vector<1x16xf32>
    %49 = vector.broadcast %48 : vector<1x16xf32> to vector<128x16xf32>
    %50 = arith.mulf %39, %49 : vector<128x16xf32>
    %51 = vector.broadcast %33 : vector<1x16xf32> to vector<128x16xf32>
    %52 = arith.addf %50, %51 : vector<128x16xf32>
    %c0_26 = arith.constant 0 : index
    %c0_27 = arith.constant 0 : index
    %53 = vector.load %arg0[%c0_26, %c0_27] : memref<128x16xf32, #tpu.memory_space<vmem>>, vector<128x16xf32>
    %54 = arith.addf %53, %52 : vector<128x16xf32>
    %c0_28 = arith.constant 0 : index
    %c0_29 = arith.constant 0 : index
    %55 = vector.load %arg8[%c0_28, %c0_29] : memref<128x16xf32, #tpu.memory_space<vmem>>, vector<128x16xf32>
    tpu.vector_store %arg8[%c0_28, %c0_29], %54 {strides = array<i32>} : memref<128x16xf32, #tpu.memory_space<vmem>>, vector<128x16xf32>,
    return
  }
}

module attributes {stable_mosaic.version = 11 : i64} {
  func.func @kernel(%arg0: memref<32x144xbf16, #tpu.memory_space<vmem>>, %arg1: memref<144x32xbf16, #tpu.memory_space<vmem>>, %arg2: memref<1x32xf32, #tpu.memory_space<vmem>>, %arg3: memref<1x32xf32, #tpu.memory_space<vmem>>, %arg4: memref<32x32xf32, #tpu.memory_space<vmem>>) attributes {dimension_semantics = [], scalar_prefetch = 0 : i64, scratch_operands = 0 : i64, tpu.core_type = #tpu.core_type<tc>} {
    %c0 = arith.constant 0 : index
    %c0_0 = arith.constant 0 : index
    %0 = vector.load %arg0[%c0, %c0_0] : memref<32x144xbf16, #tpu.memory_space<vmem>>, vector<32x144xbf16>
    %c0_1 = arith.constant 0 : index
    %c0_2 = arith.constant 0 : index
    %1 = vector.load %arg1[%c0_1, %c0_2] : memref<144x32xbf16, #tpu.memory_space<vmem>>, vector<144x32xbf16>
    %cst = arith.constant dense<0.000000e+00> : vector<32x32xf32>
    %2 = tpu.matmul %0, %1, %cst {dimension_numbers = #tpu.dot_dimension_numbers<[1], [0], [0], [1], [0, 0, 1, 1], [], []>} : vector<32x144xbf16>, vector<144x32xbf16>, vector<32x32xf32> -> vector<32x32xf32>
    %c0_3 = arith.constant 0 : index
    %c0_4 = arith.constant 0 : index
    %3 = vector.load %arg2[%c0_3, %c0_4] : memref<1x32xf32, #tpu.memory_space<vmem>>, vector<1x32xf32>
    %c0_5 = arith.constant 0 : index
    %c0_6 = arith.constant 0 : index
    %4 = vector.load %arg3[%c0_5, %c0_6] : memref<1x32xf32, #tpu.memory_space<vmem>>, vector<1x32xf32>
    %cst_7 = arith.constant dense<0.000000e+00> : vector<32xf32>
    %5 = vector.multi_reduction <add>, %2, %cst_7 [0] : vector<32x32xf32> to vector<32xf32>
    %6 = vector.shape_cast %5 : vector<32xf32> to vector<1x32xf32>
    %cst_8 = arith.constant 3.125000e-02 : f32
    %7 = vector.broadcast %cst_8 : f32 to vector<1x32xf32>
    %8 = arith.mulf %6, %7 : vector<1x32xf32>
    %9 = vector.broadcast %8 : vector<1x32xf32> to vector<32x32xf32>
    %10 = arith.subf %2, %9 : vector<32x32xf32>
    %11 = arith.mulf %10, %10 : vector<32x32xf32>
    %cst_9 = arith.constant dense<0.000000e+00> : vector<32xf32>
    %12 = vector.multi_reduction <add>, %11, %cst_9 [0] : vector<32x32xf32> to vector<32xf32>
    %13 = vector.shape_cast %12 : vector<32xf32> to vector<1x32xf32>
    %cst_10 = arith.constant 3.125000e-02 : f32
    %14 = vector.broadcast %cst_10 : f32 to vector<1x32xf32>
    %15 = arith.mulf %13, %14 : vector<1x32xf32>
    %cst_11 = arith.constant 9.99999974E-6 : f32
    %16 = vector.broadcast %cst_11 : f32 to vector<1x32xf32>
    %17 = arith.addf %15, %16 : vector<1x32xf32>
    %18 = math.rsqrt %17 : vector<1x32xf32>
    %19 = arith.mulf %3, %18 : vector<1x32xf32>
    %20 = vector.broadcast %19 : vector<1x32xf32> to vector<32x32xf32>
    %21 = arith.mulf %10, %20 : vector<32x32xf32>
    %22 = vector.broadcast %4 : vector<1x32xf32> to vector<32x32xf32>
    %23 = arith.addf %21, %22 : vector<32x32xf32>
    %cst_12 = arith.constant 0.000000e+00 : f32
    %24 = vector.broadcast %cst_12 : f32 to vector<32x32xf32>
    %25 = arith.cmpf ogt, %23, %24 : vector<32x32xf32>
    %cst_13 = arith.constant 0.00999999977 : f32
    %26 = vector.broadcast %cst_13 : f32 to vector<32x32xf32>
    %27 = arith.mulf %26, %23 : vector<32x32xf32>
    %28 = arith.select %25, %23, %27 : vector<32x32xi1>, vector<32x32xf32>
    %c0_14 = arith.constant 0 : index
    %c0_15 = arith.constant 0 : index
    %29 = vector.load %arg4[%c0_14, %c0_15] : memref<32x32xf32, #tpu.memory_space<vmem>>, vector<32x32xf32>
    tpu.vector_store %arg4[%c0_14, %c0_15], %28 {strides = array<i32>} : memref<32x32xf32, #tpu.memory_space<vmem>>, vector<32x32xf32>,
    return
  }
}

module attributes {stable_mosaic.version = 11 : i64} {
  func.func @kernel(%arg0: memref<8x288xbf16, #tpu.memory_space<vmem>>, %arg1: memref<288x64xbf16, #tpu.memory_space<vmem>>, %arg2: memref<1x64xf32, #tpu.memory_space<vmem>>, %arg3: memref<1x64xf32, #tpu.memory_space<vmem>>, %arg4: memref<8x64xf32, #tpu.memory_space<vmem>>) attributes {dimension_semantics = [], scalar_prefetch = 0 : i64, scratch_operands = 0 : i64, tpu.core_type = #tpu.core_type<tc>} {
    %c0 = arith.constant 0 : index
    %c0_0 = arith.constant 0 : index
    %0 = vector.load %arg0[%c0, %c0_0] : memref<8x288xbf16, #tpu.memory_space<vmem>>, vector<8x288xbf16>
    %c0_1 = arith.constant 0 : index
    %c0_2 = arith.constant 0 : index
    %1 = vector.load %arg1[%c0_1, %c0_2] : memref<288x64xbf16, #tpu.memory_space<vmem>>, vector<288x64xbf16>
    %cst = arith.constant dense<0.000000e+00> : vector<8x64xf32>
    %2 = tpu.matmul %0, %1, %cst {dimension_numbers = #tpu.dot_dimension_numbers<[1], [0], [0], [1], [0, 0, 1, 1], [], []>} : vector<8x288xbf16>, vector<288x64xbf16>, vector<8x64xf32> -> vector<8x64xf32>
    %c0_3 = arith.constant 0 : index
    %c0_4 = arith.constant 0 : index
    %3 = vector.load %arg2[%c0_3, %c0_4] : memref<1x64xf32, #tpu.memory_space<vmem>>, vector<1x64xf32>
    %c0_5 = arith.constant 0 : index
    %c0_6 = arith.constant 0 : index
    %4 = vector.load %arg3[%c0_5, %c0_6] : memref<1x64xf32, #tpu.memory_space<vmem>>, vector<1x64xf32>
    %cst_7 = arith.constant dense<0.000000e+00> : vector<64xf32>
    %5 = vector.multi_reduction <add>, %2, %cst_7 [0] : vector<8x64xf32> to vector<64xf32>
    %6 = vector.shape_cast %5 : vector<64xf32> to vector<1x64xf32>
    %cst_8 = arith.constant 1.250000e-01 : f32
    %7 = vector.broadcast %cst_8 : f32 to vector<1x64xf32>
    %8 = arith.mulf %6, %7 : vector<1x64xf32>
    %9 = vector.broadcast %8 : vector<1x64xf32> to vector<8x64xf32>
    %10 = arith.subf %2, %9 : vector<8x64xf32>
    %11 = arith.mulf %10, %10 : vector<8x64xf32>
    %cst_9 = arith.constant dense<0.000000e+00> : vector<64xf32>
    %12 = vector.multi_reduction <add>, %11, %cst_9 [0] : vector<8x64xf32> to vector<64xf32>
    %13 = vector.shape_cast %12 : vector<64xf32> to vector<1x64xf32>
    %cst_10 = arith.constant 1.250000e-01 : f32
    %14 = vector.broadcast %cst_10 : f32 to vector<1x64xf32>
    %15 = arith.mulf %13, %14 : vector<1x64xf32>
    %cst_11 = arith.constant 9.99999974E-6 : f32
    %16 = vector.broadcast %cst_11 : f32 to vector<1x64xf32>
    %17 = arith.addf %15, %16 : vector<1x64xf32>
    %18 = math.rsqrt %17 : vector<1x64xf32>
    %19 = arith.mulf %3, %18 : vector<1x64xf32>
    %20 = vector.broadcast %19 : vector<1x64xf32> to vector<8x64xf32>
    %21 = arith.mulf %10, %20 : vector<8x64xf32>
    %22 = vector.broadcast %4 : vector<1x64xf32> to vector<8x64xf32>
    %23 = arith.addf %21, %22 : vector<8x64xf32>
    %c0_12 = arith.constant 0 : index
    %c0_13 = arith.constant 0 : index
    %24 = vector.load %arg4[%c0_12, %c0_13] : memref<8x64xf32, #tpu.memory_space<vmem>>, vector<8x64xf32>
    tpu.vector_store %arg4[%c0_12, %c0_13], %23 {strides = array<i32>} : memref<8x64xf32, #tpu.memory_space<vmem>>, vector<8x64xf32>,
    return
  }
}

module attributes {stable_mosaic.version = 11 : i64} {
  func.func @kernel(%arg0: memref<8x64xf32, #tpu.memory_space<vmem>>, %arg1: memref<8x576xbf16, #tpu.memory_space<vmem>>, %arg2: memref<576x64xbf16, #tpu.memory_space<vmem>>, %arg3: memref<1x64xf32, #tpu.memory_space<vmem>>, %arg4: memref<1x64xf32, #tpu.memory_space<vmem>>, %arg5: memref<64x64xbf16, #tpu.memory_space<vmem>>, %arg6: memref<1x64xf32, #tpu.memory_space<vmem>>, %arg7: memref<1x64xf32, #tpu.memory_space<vmem>>, %arg8: memref<8x64xf32, #tpu.memory_space<vmem>>) attributes {dimension_semantics = [], scalar_prefetch = 0 : i64, scratch_operands = 0 : i64, tpu.core_type = #tpu.core_type<tc>} {
    %c0 = arith.constant 0 : index
    %c0_0 = arith.constant 0 : index
    %0 = vector.load %arg1[%c0, %c0_0] : memref<8x576xbf16, #tpu.memory_space<vmem>>, vector<8x576xbf16>
    %c0_1 = arith.constant 0 : index
    %c0_2 = arith.constant 0 : index
    %1 = vector.load %arg2[%c0_1, %c0_2] : memref<576x64xbf16, #tpu.memory_space<vmem>>, vector<576x64xbf16>
    %cst = arith.constant dense<0.000000e+00> : vector<8x64xf32>
    %2 = tpu.matmul %0, %1, %cst {dimension_numbers = #tpu.dot_dimension_numbers<[1], [0], [0], [1], [0, 0, 1, 1], [], []>} : vector<8x576xbf16>, vector<576x64xbf16>, vector<8x64xf32> -> vector<8x64xf32>
    %c0_3 = arith.constant 0 : index
    %c0_4 = arith.constant 0 : index
    %3 = vector.load %arg3[%c0_3, %c0_4] : memref<1x64xf32, #tpu.memory_space<vmem>>, vector<1x64xf32>
    %c0_5 = arith.constant 0 : index
    %c0_6 = arith.constant 0 : index
    %4 = vector.load %arg4[%c0_5, %c0_6] : memref<1x64xf32, #tpu.memory_space<vmem>>, vector<1x64xf32>
    %cst_7 = arith.constant dense<0.000000e+00> : vector<64xf32>
    %5 = vector.multi_reduction <add>, %2, %cst_7 [0] : vector<8x64xf32> to vector<64xf32>
    %6 = vector.shape_cast %5 : vector<64xf32> to vector<1x64xf32>
    %cst_8 = arith.constant 1.250000e-01 : f32
    %7 = vector.broadcast %cst_8 : f32 to vector<1x64xf32>
    %8 = arith.mulf %6, %7 : vector<1x64xf32>
    %9 = vector.broadcast %8 : vector<1x64xf32> to vector<8x64xf32>
    %10 = arith.subf %2, %9 : vector<8x64xf32>
    %11 = arith.mulf %10, %10 : vector<8x64xf32>
    %cst_9 = arith.constant dense<0.000000e+00> : vector<64xf32>
    %12 = vector.multi_reduction <add>, %11, %cst_9 [0] : vector<8x64xf32> to vector<64xf32>
    %13 = vector.shape_cast %12 : vector<64xf32> to vector<1x64xf32>
    %cst_10 = arith.constant 1.250000e-01 : f32
    %14 = vector.broadcast %cst_10 : f32 to vector<1x64xf32>
    %15 = arith.mulf %13, %14 : vector<1x64xf32>
    %cst_11 = arith.constant 9.99999974E-6 : f32
    %16 = vector.broadcast %cst_11 : f32 to vector<1x64xf32>
    %17 = arith.addf %15, %16 : vector<1x64xf32>
    %18 = math.rsqrt %17 : vector<1x64xf32>
    %19 = arith.mulf %3, %18 : vector<1x64xf32>
    %20 = vector.broadcast %19 : vector<1x64xf32> to vector<8x64xf32>
    %21 = arith.mulf %10, %20 : vector<8x64xf32>
    %22 = vector.broadcast %4 : vector<1x64xf32> to vector<8x64xf32>
    %23 = arith.addf %21, %22 : vector<8x64xf32>
    %cst_12 = arith.constant 0.000000e+00 : f32
    %24 = vector.broadcast %cst_12 : f32 to vector<8x64xf32>
    %25 = arith.cmpf ogt, %23, %24 : vector<8x64xf32>
    %cst_13 = arith.constant 0.00999999977 : f32
    %26 = vector.broadcast %cst_13 : f32 to vector<8x64xf32>
    %27 = arith.mulf %26, %23 : vector<8x64xf32>
    %28 = arith.select %25, %23, %27 : vector<8x64xi1>, vector<8x64xf32>
    %29 = arith.truncf %28 : vector<8x64xf32> to vector<8x64xbf16>
    %c0_14 = arith.constant 0 : index
    %c0_15 = arith.constant 0 : index
    %30 = vector.load %arg5[%c0_14, %c0_15] : memref<64x64xbf16, #tpu.memory_space<vmem>>, vector<64x64xbf16>
    %cst_16 = arith.constant dense<0.000000e+00> : vector<8x64xf32>
    %31 = tpu.matmul %29, %30, %cst_16 {dimension_numbers = #tpu.dot_dimension_numbers<[1], [0], [0], [1], [0, 0, 1, 1], [], []>} : vector<8x64xbf16>, vector<64x64xbf16>, vector<8x64xf32> -> vector<8x64xf32>
    %c0_17 = arith.constant 0 : index
    %c0_18 = arith.constant 0 : index
    %32 = vector.load %arg6[%c0_17, %c0_18] : memref<1x64xf32, #tpu.memory_space<vmem>>, vector<1x64xf32>
    %c0_19 = arith.constant 0 : index
    %c0_20 = arith.constant 0 : index
    %33 = vector.load %arg7[%c0_19, %c0_20] : memref<1x64xf32, #tpu.memory_space<vmem>>, vector<1x64xf32>
    %cst_21 = arith.constant dense<0.000000e+00> : vector<64xf32>
    %34 = vector.multi_reduction <add>, %31, %cst_21 [0] : vector<8x64xf32> to vector<64xf32>
    %35 = vector.shape_cast %34 : vector<64xf32> to vector<1x64xf32>
    %cst_22 = arith.constant 1.250000e-01 : f32
    %36 = vector.broadcast %cst_22 : f32 to vector<1x64xf32>
    %37 = arith.mulf %35, %36 : vector<1x64xf32>
    %38 = vector.broadcast %37 : vector<1x64xf32> to vector<8x64xf32>
    %39 = arith.subf %31, %38 : vector<8x64xf32>
    %40 = arith.mulf %39, %39 : vector<8x64xf32>
    %cst_23 = arith.constant dense<0.000000e+00> : vector<64xf32>
    %41 = vector.multi_reduction <add>, %40, %cst_23 [0] : vector<8x64xf32> to vector<64xf32>
    %42 = vector.shape_cast %41 : vector<64xf32> to vector<1x64xf32>
    %cst_24 = arith.constant 1.250000e-01 : f32
    %43 = vector.broadcast %cst_24 : f32 to vector<1x64xf32>
    %44 = arith.mulf %42, %43 : vector<1x64xf32>
    %cst_25 = arith.constant 9.99999974E-6 : f32
    %45 = vector.broadcast %cst_25 : f32 to vector<1x64xf32>
    %46 = arith.addf %44, %45 : vector<1x64xf32>
    %47 = math.rsqrt %46 : vector<1x64xf32>
    %48 = arith.mulf %32, %47 : vector<1x64xf32>
    %49 = vector.broadcast %48 : vector<1x64xf32> to vector<8x64xf32>
    %50 = arith.mulf %39, %49 : vector<8x64xf32>
    %51 = vector.broadcast %33 : vector<1x64xf32> to vector<8x64xf32>
    %52 = arith.addf %50, %51 : vector<8x64xf32>
    %c0_26 = arith.constant 0 : index
    %c0_27 = arith.constant 0 : index
    %53 = vector.load %arg0[%c0_26, %c0_27] : memref<8x64xf32, #tpu.memory_space<vmem>>, vector<8x64xf32>
    %54 = arith.addf %53, %52 : vector<8x64xf32>
    %c0_28 = arith.constant 0 : index
    %c0_29 = arith.constant 0 : index
    %55 = vector.load %arg8[%c0_28, %c0_29] : memref<8x64xf32, #tpu.memory_space<vmem>>, vector<8x64xf32>
    tpu.vector_store %arg8[%c0_28, %c0_29], %54 {strides = array<i32>} : memref<8x64xf32, #tpu.memory_space<vmem>>, vector<8x64xf32>,
    return
  }
}

module attributes {stable_mosaic.version = 11 : i64} {
  func.func @kernel(%arg0: memref<8x64xf32, #tpu.memory_space<vmem>>, %arg1: memref<8x576xbf16, #tpu.memory_space<vmem>>, %arg2: memref<576x64xbf16, #tpu.memory_space<vmem>>, %arg3: memref<1x64xf32, #tpu.memory_space<vmem>>, %arg4: memref<1x64xf32, #tpu.memory_space<vmem>>, %arg5: memref<64x64xbf16, #tpu.memory_space<vmem>>, %arg6: memref<1x64xf32, #tpu.memory_space<vmem>>, %arg7: memref<1x64xf32, #tpu.memory_space<vmem>>, %arg8: memref<8x64xf32, #tpu.memory_space<vmem>>) attributes {dimension_semantics = [], scalar_prefetch = 0 : i64, scratch_operands = 0 : i64, tpu.core_type = #tpu.core_type<tc>} {
    %c0 = arith.constant 0 : index
    %c0_0 = arith.constant 0 : index
    %0 = vector.load %arg1[%c0, %c0_0] : memref<8x576xbf16, #tpu.memory_space<vmem>>, vector<8x576xbf16>
    %c0_1 = arith.constant 0 : index
    %c0_2 = arith.constant 0 : index
    %1 = vector.load %arg2[%c0_1, %c0_2] : memref<576x64xbf16, #tpu.memory_space<vmem>>, vector<576x64xbf16>
    %cst = arith.constant dense<0.000000e+00> : vector<8x64xf32>
    %2 = tpu.matmul %0, %1, %cst {dimension_numbers = #tpu.dot_dimension_numbers<[1], [0], [0], [1], [0, 0, 1, 1], [], []>} : vector<8x576xbf16>, vector<576x64xbf16>, vector<8x64xf32> -> vector<8x64xf32>
    %c0_3 = arith.constant 0 : index
    %c0_4 = arith.constant 0 : index
    %3 = vector.load %arg3[%c0_3, %c0_4] : memref<1x64xf32, #tpu.memory_space<vmem>>, vector<1x64xf32>
    %c0_5 = arith.constant 0 : index
    %c0_6 = arith.constant 0 : index
    %4 = vector.load %arg4[%c0_5, %c0_6] : memref<1x64xf32, #tpu.memory_space<vmem>>, vector<1x64xf32>
    %cst_7 = arith.constant dense<0.000000e+00> : vector<64xf32>
    %5 = vector.multi_reduction <add>, %2, %cst_7 [0] : vector<8x64xf32> to vector<64xf32>
    %6 = vector.shape_cast %5 : vector<64xf32> to vector<1x64xf32>
    %cst_8 = arith.constant 1.250000e-01 : f32
    %7 = vector.broadcast %cst_8 : f32 to vector<1x64xf32>
    %8 = arith.mulf %6, %7 : vector<1x64xf32>
    %9 = vector.broadcast %8 : vector<1x64xf32> to vector<8x64xf32>
    %10 = arith.subf %2, %9 : vector<8x64xf32>
    %11 = arith.mulf %10, %10 : vector<8x64xf32>
    %cst_9 = arith.constant dense<0.000000e+00> : vector<64xf32>
    %12 = vector.multi_reduction <add>, %11, %cst_9 [0] : vector<8x64xf32> to vector<64xf32>
    %13 = vector.shape_cast %12 : vector<64xf32> to vector<1x64xf32>
    %cst_10 = arith.constant 1.250000e-01 : f32
    %14 = vector.broadcast %cst_10 : f32 to vector<1x64xf32>
    %15 = arith.mulf %13, %14 : vector<1x64xf32>
    %cst_11 = arith.constant 9.99999974E-6 : f32
    %16 = vector.broadcast %cst_11 : f32 to vector<1x64xf32>
    %17 = arith.addf %15, %16 : vector<1x64xf32>
    %18 = math.rsqrt %17 : vector<1x64xf32>
    %19 = arith.mulf %3, %18 : vector<1x64xf32>
    %20 = vector.broadcast %19 : vector<1x64xf32> to vector<8x64xf32>
    %21 = arith.mulf %10, %20 : vector<8x64xf32>
    %22 = vector.broadcast %4 : vector<1x64xf32> to vector<8x64xf32>
    %23 = arith.addf %21, %22 : vector<8x64xf32>
    %cst_12 = arith.constant 0.000000e+00 : f32
    %24 = vector.broadcast %cst_12 : f32 to vector<8x64xf32>
    %25 = arith.cmpf ogt, %23, %24 : vector<8x64xf32>
    %cst_13 = arith.constant 0.00999999977 : f32
    %26 = vector.broadcast %cst_13 : f32 to vector<8x64xf32>
    %27 = arith.mulf %26, %23 : vector<8x64xf32>
    %28 = arith.select %25, %23, %27 : vector<8x64xi1>, vector<8x64xf32>
    %29 = arith.truncf %28 : vector<8x64xf32> to vector<8x64xbf16>
    %c0_14 = arith.constant 0 : index
    %c0_15 = arith.constant 0 : index
    %30 = vector.load %arg5[%c0_14, %c0_15] : memref<64x64xbf16, #tpu.memory_space<vmem>>, vector<64x64xbf16>
    %cst_16 = arith.constant dense<0.000000e+00> : vector<8x64xf32>
    %31 = tpu.matmul %29, %30, %cst_16 {dimension_numbers = #tpu.dot_dimension_numbers<[1], [0], [0], [1], [0, 0, 1, 1], [], []>} : vector<8x64xbf16>, vector<64x64xbf16>, vector<8x64xf32> -> vector<8x64xf32>
    %c0_17 = arith.constant 0 : index
    %c0_18 = arith.constant 0 : index
    %32 = vector.load %arg6[%c0_17, %c0_18] : memref<1x64xf32, #tpu.memory_space<vmem>>, vector<1x64xf32>
    %c0_19 = arith.constant 0 : index
    %c0_20 = arith.constant 0 : index
    %33 = vector.load %arg7[%c0_19, %c0_20] : memref<1x64xf32, #tpu.memory_space<vmem>>, vector<1x64xf32>
    %cst_21 = arith.constant dense<0.000000e+00> : vector<64xf32>
    %34 = vector.multi_reduction <add>, %31, %cst_21 [0] : vector<8x64xf32> to vector<64xf32>
    %35 = vector.shape_cast %34 : vector<64xf32> to vector<1x64xf32>
    %cst_22 = arith.constant 1.250000e-01 : f32
    %36 = vector.broadcast %cst_22 : f32 to vector<1x64xf32>
    %37 = arith.mulf %35, %36 : vector<1x64xf32>
    %38 = vector.broadcast %37 : vector<1x64xf32> to vector<8x64xf32>
    %39 = arith.subf %31, %38 : vector<8x64xf32>
    %40 = arith.mulf %39, %39 : vector<8x64xf32>
    %cst_23 = arith.constant dense<0.000000e+00> : vector<64xf32>
    %41 = vector.multi_reduction <add>, %40, %cst_23 [0] : vector<8x64xf32> to vector<64xf32>
    %42 = vector.shape_cast %41 : vector<64xf32> to vector<1x64xf32>
    %cst_24 = arith.constant 1.250000e-01 : f32
    %43 = vector.broadcast %cst_24 : f32 to vector<1x64xf32>
    %44 = arith.mulf %42, %43 : vector<1x64xf32>
    %cst_25 = arith.constant 9.99999974E-6 : f32
    %45 = vector.broadcast %cst_25 : f32 to vector<1x64xf32>
    %46 = arith.addf %44, %45 : vector<1x64xf32>
    %47 = math.rsqrt %46 : vector<1x64xf32>
    %48 = arith.mulf %32, %47 : vector<1x64xf32>
    %49 = vector.broadcast %48 : vector<1x64xf32> to vector<8x64xf32>
    %50 = arith.mulf %39, %49 : vector<8x64xf32>
    %51 = vector.broadcast %33 : vector<1x64xf32> to vector<8x64xf32>
    %52 = arith.addf %50, %51 : vector<8x64xf32>
    %c0_26 = arith.constant 0 : index
    %c0_27 = arith.constant 0 : index
    %53 = vector.load %arg0[%c0_26, %c0_27] : memref<8x64xf32, #tpu.memory_space<vmem>>, vector<8x64xf32>
    %54 = arith.addf %53, %52 : vector<8x64xf32>
    %cst_28 = arith.constant 0.000000e+00 : f32
    %55 = vector.broadcast %cst_28 : f32 to vector<8x64xf32>
    %56 = arith.cmpf ogt, %54, %55 : vector<8x64xf32>
    %cst_29 = arith.constant 0.00999999977 : f32
    %57 = vector.broadcast %cst_29 : f32 to vector<8x64xf32>
    %58 = arith.mulf %57, %54 : vector<8x64xf32>
    %59 = arith.select %56, %54, %58 : vector<8x64xi1>, vector<8x64xf32>
    %c0_30 = arith.constant 0 : index
    %c0_31 = arith.constant 0 : index
    %60 = vector.load %arg8[%c0_30, %c0_31] : memref<8x64xf32, #tpu.memory_space<vmem>>, vector<8x64xf32>
    tpu.vector_store %arg8[%c0_30, %c0_31], %59 {strides = array<i32>} : memref<8x64xf32, #tpu.memory_space<vmem>>, vector<8x64xf32>,
    return
  }
}

module attributes {stable_mosaic.version = 11 : i64} {
  func.func @_projector_kernel(%arg0: memref<2x256xbf16, #tpu.memory_space<vmem>>, %arg1: memref<256x10xbf16, #tpu.memory_space<vmem>>, %arg2: memref<1x10xf32, #tpu.memory_space<vmem>>, %arg3: memref<2x10xf32, #tpu.memory_space<vmem>>) attributes {dimension_semantics = [], scalar_prefetch = 0 : i64, scratch_operands = 0 : i64, tpu.core_type = #tpu.core_type<tc>} {
    %c0 = arith.constant 0 : index
    %c0_0 = arith.constant 0 : index
    %0 = vector.load %arg0[%c0, %c0_0] : memref<2x256xbf16, #tpu.memory_space<vmem>>, vector<2x256xbf16>
    %c0_1 = arith.constant 0 : index
    %c0_2 = arith.constant 0 : index
    %1 = vector.load %arg1[%c0_1, %c0_2] : memref<256x10xbf16, #tpu.memory_space<vmem>>, vector<256x10xbf16>
    %cst = arith.constant dense<0.000000e+00> : vector<2x10xf32>
    %2 = tpu.matmul %0, %1, %cst {dimension_numbers = #tpu.dot_dimension_numbers<[1], [0], [0], [1], [0, 0, 1, 1], [], []>} : vector<2x256xbf16>, vector<256x10xbf16>, vector<2x10xf32> -> vector<2x10xf32>
    %c0_3 = arith.constant 0 : index
    %c0_4 = arith.constant 0 : index
    %3 = vector.load %arg2[%c0_3, %c0_4] : memref<1x10xf32, #tpu.memory_space<vmem>>, vector<1x10xf32>
    %4 = vector.broadcast %3 : vector<1x10xf32> to vector<2x10xf32>
    %5 = arith.addf %2, %4 : vector<2x10xf32>
    %c0_5 = arith.constant 0 : index
    %c0_6 = arith.constant 0 : index
    %6 = vector.load %arg3[%c0_5, %c0_6] : memref<2x10xf32, #tpu.memory_space<vmem>>, vector<2x10xf32>
    tpu.vector_store %arg3[%c0_5, %c0_6], %5 {strides = array<i32>} : memref<2x10xf32, #tpu.memory_space<vmem>>, vector<2x10xf32>,
    return
  }
}

</mosaic_0001>

<llo_original>
// kernel: encoder_forward.14
$region0: #{encoder_forward.14}
  #allocation0 [shape = 'u32[]', space=smem, size = 0x4, offset = 0x4, fixed_abs, tag = 'smem constant byte address 0x4 - core index']
  #allocation1 [shape = 'u32[144,128]{1,0:T(1,128)}', space=vmem, size = 0x12000, scoped, tag = 'internal scratch']
  %s0 = inlined_call_operand.vmem [shape: bf16[128,72], index: 0, kind: input, shape index: {}]
  %s1 = inlined_call_operand.vmem [shape: bf16[72,16], index: 1, kind: input, shape index: {}]
  %s2 = inlined_call_operand.vmem [shape: f32[1,16], index: 2, kind: input, shape index: {}]
  %s3 = inlined_call_operand.vmem [shape: f32[1,16], index: 3, kind: input, shape index: {}]
  %s4 = inlined_call_operand.vmem [shape: f32[128,16], index: 4, kind: output, shape index: {}]
  %s5 = sld [smem:[#allocation0]]
  $region26: #{encoder_forward.14} parent=0
    _
  %s7 = ssub.s32 1, %s5
  %s8 = scalar_select 0, %s7, %s5
  // Predicated region
  $region2: #{encoder_forward.14} parent=0 // pred_check
    _
  $region3: #{encoder_forward.14} parent=0 // pred_check_branch
    %10 = sbr.rel (0) target = $region5
  $region4: #{encoder_forward.14} parent=0 // pred_region
    _
  $region5: #{encoder_forward.14} parent=0 // pred_fallthru
    _
  // Predicated region
  $region6: #{encoder_forward.14} parent=0 // pred_check
    _
  $region7: #{encoder_forward.14} parent=0 // pred_check_branch
    %12 = sbr.rel (0) target = $region9
  $region8: #{encoder_forward.14} parent=0 // pred_region
    _
  $region9: #{encoder_forward.14} parent=0 // pred_fallthru
    _
  // Predicated region
  $region10: #{encoder_forward.14} parent=0 // pred_check
    _
  $region11: #{encoder_forward.14} parent=0 // pred_check_branch
    %14 = sbr.rel (0) target = $region13
  $region12: #{encoder_forward.14} parent=0 // pred_region
    _
  $region13: #{encoder_forward.14} parent=0 // pred_fallthru
    _
  // Predicated region
  $region14: #{encoder_forward.14} parent=0 // pred_check
    _
  $region15: #{encoder_forward.14} parent=0 // pred_check_branch
    %16 = sbr.rel (0) target = $region17
  $region16: #{encoder_forward.14} parent=0 // pred_region
    _
  $region17: #{encoder_forward.14} parent=0 // pred_fallthru
    _
  %v18 = vld [vmem:[%s0] sm:$0xf]
  %v19 = vld [vmem:[%s0 + $0x4] sm:$0xf]
  %v20 = vld [vmem:[%s0 + $0x8] sm:$0xf]
  %v21 = vld [vmem:[%s0 + $0xc] sm:$0xf]
  %v22 = vld [vmem:[%s0 + $0x10] sm:$0xf]
  %v23 = vld [vmem:[%s0 + $0x14] sm:$0xf]
  %v24 = vld [vmem:[%s0 + $0x18] sm:$0xf]
  %v25 = vld [vmem:[%s0 + $0x1c] sm:$0xf]
  %v26 = vld [vmem:[%s0 + $0x20] sm:$0xf]
  %v27 = vld [vmem:[%s0 + $0x24] sm:$0xf]
  %v28 = vld [vmem:[%s0 + $0x28] sm:$0xf]
  %v29 = vld [vmem:[%s0 + $0x2c] sm:$0xf]
  %v30 = vld [vmem:[%s0 + $0x30] sm:$0xf]
  %v31 = vld [vmem:[%s0 + $0x34] sm:$0xf]
  %v32 = vld [vmem:[%s0 + $0x38] sm:$0xf]
  %v33 = vld [vmem:[%s0 + $0x3c] sm:$0xf]
  %v34 = vld [vmem:[%s1] sm:$0xf]
  %v35 = vld [vmem:[%s1 + $0x4] sm:$0xf]
  %v36 = vld [vmem:[%s1 + $0x8] sm:$0xf]
  %v37 = vld [vmem:[%s1 + $0xc] sm:$0xf]
  %v38 = vld [vmem:[%s1 + $0x10] sm:$0xf]
  %v39 = vld [vmem:[%s1 + $0x14] sm:$0xf]
  %v40 = vld [vmem:[%s1 + $0x18] sm:$0xf]
  %v41 = vld [vmem:[%s1 + $0x1c] sm:$0xf]
  %v42 = vld [vmem:[%s1 + $0x20] sm:$0xf]
  %v59 = vunpack.c.l.b16 %v18
  %v60 = vunpack.c.l.b16 %v19
  %v61 = vunpack.c.l.b16 %v20
  %v62 = vunpack.c.l.b16 %v21
  %v63 = vunpack.c.l.b16 %v22
  %v64 = vunpack.c.l.b16 %v23
  %v65 = vunpack.c.l.b16 %v24
  %v66 = vunpack.c.l.b16 %v25
  %v67 = vunpack.c.l.b16 %v26
  %v68 = vunpack.c.l.b16 %v27
  %v69 = vunpack.c.l.b16 %v28
  %v70 = vunpack.c.l.b16 %v29
  %v71 = vunpack.c.l.b16 %v30
  %v72 = vunpack.c.l.b16 %v31
  %v73 = vunpack.c.l.b16 %v32
  %v74 = vunpack.c.l.b16 %v33
  %v75 = vpack.c.b16 %v60, %v59
  %v76 = vpack.c.b16 %v62, %v61
  %v77 = vpack.c.b16 %v64, %v63
  %v78 = vpack.c.b16 %v66, %v65
  %v79 = vpack.c.b16 %v68, %v67
  %v80 = vpack.c.b16 %v70, %v69
  %v81 = vpack.c.b16 %v72, %v71
  %v82 = vpack.c.b16 %v74, %v73
  %v92 = vunpack.c.l.b16 %v34
  %v93 = vunpack.c.l.b16 %v35
  %v94 = vunpack.c.l.b16 %v36
  %v95 = vunpack.c.l.b16 %v37
  %v96 = vunpack.c.l.b16 %v38
  %v97 = vunpack.c.l.b16 %v39
  %v98 = vunpack.c.l.b16 %v40
  %v99 = vunpack.c.l.b16 %v41
  %v100 = vunpack.c.l.b16 %v42
  %v101 = vpack.c.b16 %v93, %v92
  %v102 = vpack.c.b16 %v95, %v94
  %v103 = vpack.c.b16 %v97, %v96
  %v104 = vpack.c.b16 %v99, %v98
  %v105 = vpack.c.b16 %v100, %v100
  %vm110 = vcmask 588800
  %v112 = vsel %vm110, %v75, 0
  %v115 = vsel %vm110, %v76, 0
  %v118 = vsel %vm110, %v77, 0
  %v121 = vsel %vm110, %v78, 0
  %v124 = vsel %vm110, %v79, 0
  %v127 = vsel %vm110, %v80, 0
  %v130 = vsel %vm110, %v81, 0
  %v133 = vsel %vm110, %v82, 0
  %vm135 = vcmask 1043456
  %v137 = vsel %vm135, %v105, 0
  %139 = vmatprep.subr.bf16.mxu0 0
  %140 = vmatpush1.bf16.msra.mxu0 %v101
  %141 = vmatprep.subr.bf16.mxu0 0
  %142 = vmatpush1.bf16.msra.mxu0 %v102
  %143 = vmatprep.subr.bf16.mxu0 0
  %144 = vmatpush1.bf16.msra.mxu0 %v103
  %145 = vmatprep.subr.bf16.mxu0 0
  %146 = vmatpush1.bf16.msra.mxu0 %v104
  %147 = vmatprep.subr.bf16.mxu0 0
  %148 = vmatpush1.bf16.msra.mxu0 %v137
  %149 = vmatprep.subr.bf16.mxu0 0
  %150 = vmatpush1.bf16.msra.mxu0 0
  %151 = vmatprep.subr.bf16.mxu0 0
  %152 = vmatpush1.bf16.msra.mxu0 0
  %153 = vmatprep.subr.bf16.mxu0 0
  %154 = vmatpush1.bf16.msra.mxu0 0
  %155 = vmatprep.subr.bf16.mxu0 0
  %156 = vmatpush1.bf16.msra.mxu0 0
  %157 = vmatprep.subr.bf16.mxu0 0
  %158 = vmatpush1.bf16.msra.mxu0 0
  %159 = vmatprep.subr.bf16.mxu0 0
  %160 = vmatpush1.bf16.msra.mxu0 0
  %161 = vmatprep.subr.bf16.mxu0 0
  %162 = vmatpush1.bf16.msra.mxu0 0
  %163 = vmatprep.subr.bf16.mxu0 0
  %164 = vmatpush1.bf16.msra.mxu0 0
  %165 = vmatprep.subr.bf16.mxu0 0
  %166 = vmatpush1.bf16.msra.mxu0 0
  %167 = vmatprep.subr.bf16.mxu0 0
  %168 = vmatpush1.bf16.msra.mxu0 0
  %169 = vmatprep.subr.bf16.mxu0 0
  %170 = vmatpush1.bf16.msra.mxu0 0
  %171 = vmatprep.mubr.bf16.mxu0 0
  %172 = vmatmul.mubr.bf16.gmra.mrb[0].mxu0 %v112
  %v173 = vpop.f32.mrb[0].mxu0
  %v174 = vadd.f32 0.0, %v173
  %v175 = vpop.f32.mrb[0].mxu0
  %v176 = vpop.f32.mrb[0].mxu0
  %v177 = vadd.f32 0.0, %v176
  %v178 = vpop.f32.mrb[0].mxu0
  %179 = vmatprep.mubr.bf16.mxu0 0
  %180 = vmatmul.mubr.bf16.gmra.mrb[0].mxu0 %v115
  %v181 = vpop.f32.mrb[0].mxu0
  %v182 = vadd.f32 0.0, %v181
  %v183 = vpop.f32.mrb[0].mxu0
  %v184 = vpop.f32.mrb[0].mxu0
  %v185 = vadd.f32 0.0, %v184
  %v186 = vpop.f32.mrb[0].mxu0
  %187 = vmatprep.mubr.bf16.mxu0 0
  %188 = vmatmul.mubr.bf16.gmra.mrb[0].mxu0 %v118
  %v189 = vpop.f32.mrb[0].mxu0
  %v190 = vadd.f32 0.0, %v189
  %v191 = vpop.f32.mrb[0].mxu0
  %v192 = vpop.f32.mrb[0].mxu0
  %v193 = vadd.f32 0.0, %v192
  %v194 = vpop.f32.mrb[0].mxu0
  %195 = vmatprep.mubr.bf16.mxu0 0
  %196 = vmatmul.mubr.bf16.gmra.mrb[0].mxu0 %v121
  %v197 = vpop.f32.mrb[0].mxu0
  %v198 = vadd.f32 0.0, %v197
  %v199 = vpop.f32.mrb[0].mxu0
  %v200 = vpop.f32.mrb[0].mxu0
  %v201 = vadd.f32 0.0, %v200
  %v202 = vpop.f32.mrb[0].mxu0
  %203 = vmatprep.mubr.bf16.mxu0 0
  %204 = vmatmul.mubr.bf16.gmra.mrb[0].mxu0 %v124
  %v205 = vpop.f32.mrb[0].mxu0
  %v206 = vadd.f32 0.0, %v205
  %v207 = vpop.f32.mrb[0].mxu0
  %v208 = vpop.f32.mrb[0].mxu0
  %v209 = vadd.f32 0.0, %v208
  %v210 = vpop.f32.mrb[0].mxu0
  %211 = vmatprep.mubr.bf16.mxu0 0
  %212 = vmatmul.mubr.bf16.gmra.mrb[0].mxu0 %v127
  %v213 = vpop.f32.mrb[0].mxu0
  %v214 = vadd.f32 0.0, %v213
  %v215 = vpop.f32.mrb[0].mxu0
  %v216 = vpop.f32.mrb[0].mxu0
  %v217 = vadd.f32 0.0, %v216
  %v218 = vpop.f32.mrb[0].mxu0
  %219 = vmatprep.mubr.bf16.mxu0 0
  %220 = vmatmul.mubr.bf16.gmra.mrb[0].mxu0 %v130
  %v221 = vpop.f32.mrb[0].mxu0
  %v222 = vadd.f32 0.0, %v221
  %v223 = vpop.f32.mrb[0].mxu0
  %v224 = vpop.f32.mrb[0].mxu0
  %v225 = vadd.f32 0.0, %v224
  %v226 = vpop.f32.mrb[0].mxu0
  %227 = vmatprep.mubr.bf16.mxu0 0
  %228 = vmatmul.mubr.bf16.gmra.mrb[0].mxu0 %v133
  %v229 = vpop.f32.mrb[0].mxu0
  %v230 = vadd.f32 0.0, %v229
  %v231 = vpop.f32.mrb[0].mxu0
  %v232 = vpop.f32.mrb[0].mxu0
  %v233 = vadd.f32 0.0, %v232
  %v234 = vpop.f32.mrb[0].mxu0
  %235 = vdwg.mxu0
  %v236 = vld [vmem:[%s2] sm:$0x1]
  %v237 = vld [vmem:[%s3] sm:$0x1]
  %vm238 = vcmask 130048
  %v239 = vsel %vm238, %v174, 0.0
  %v240 = vsel %vm238, %v177, 0.0
  %v241 = vadd.f32 %v239, %v240
  %v242 = vsel %vm238, %v182, 0.0
  %v243 = vadd.f32 %v241, %v242
  %v244 = vsel %vm238, %v185, 0.0
  %v245 = vadd.f32 %v243, %v244
  %v246 = vsel %vm238, %v190, 0.0
  %v247 = vadd.f32 %v245, %v246
  %v248 = vsel %vm238, %v193, 0.0
  %v249 = vadd.f32 %v247, %v248
  %v250 = vsel %vm238, %v198, 0.0
  %v251 = vadd.f32 %v249, %v250
  %v252 = vsel %vm238, %v201, 0.0
  %v253 = vadd.f32 %v251, %v252
  %v254 = vsel %vm238, %v206, 0.0
  %v255 = vadd.f32 %v253, %v254
  %v256 = vsel %vm238, %v209, 0.0
  %v257 = vadd.f32 %v255, %v256
  %v258 = vsel %vm238, %v214, 0.0
  %v259 = vadd.f32 %v257, %v258
  %v260 = vsel %vm238, %v217, 0.0
  %v261 = vadd.f32 %v259, %v260
  %v262 = vsel %vm238, %v222, 0.0
  %v263 = vadd.f32 %v261, %v262
  %v264 = vsel %vm238, %v225, 0.0
  %v265 = vadd.f32 %v263, %v264
  %v266 = vsel %vm238, %v230, 0.0
  %v267 = vadd.f32 %v265, %v266
  %v268 = vsel %vm238, %v233, 0.0
  %v269 = vadd.f32 %v267, %v268
  %v270 = vrot.slane %v269, 4
  %v271 = vadd.f32 %v269, %v270
  %v272 = vrot.slane %v271, 2
  %v273 = vadd.f32 %v271, %v272
  %v274 = vrot.slane %v273, 1
  %v275 = vadd.f32 %v273, %v274
  %v276 = vmul.f32 %v275, 0.0078125
  %v277 = vsub.f32 %v174, %v276
  %v278 = vsub.f32 %v177, %v276
  %v279 = vsub.f32 %v182, %v276
  %v280 = vsub.f32 %v185, %v276
  %v281 = vsub.f32 %v190, %v276
  %v282 = vsub.f32 %v193, %v276
  %v283 = vsub.f32 %v198, %v276
  %v284 = vsub.f32 %v201, %v276
  %v285 = vsub.f32 %v206, %v276
  %v286 = vsub.f32 %v209, %v276
  %v287 = vsub.f32 %v214, %v276
  %v288 = vsub.f32 %v217, %v276
  %v289 = vsub.f32 %v222, %v276
  %v290 = vsub.f32 %v225, %v276
  %v291 = vsub.f32 %v230, %v276
  %v292 = vsub.f32 %v233, %v276
  %v293 = vmul.f32 %v277, %v277
  %v294 = vmul.f32 %v278, %v278
  %v295 = vmul.f32 %v279, %v279
  %v296 = vmul.f32 %v280, %v280
  %v297 = vmul.f32 %v281, %v281
  %v298 = vmul.f32 %v282, %v282
  %v299 = vmul.f32 %v283, %v283
  %v300 = vmul.f32 %v284, %v284
  %v301 = vmul.f32 %v285, %v285
  %v302 = vmul.f32 %v286, %v286
  %v303 = vmul.f32 %v287, %v287
  %v304 = vmul.f32 %v288, %v288
  %v305 = vmul.f32 %v289, %v289
  %v306 = vmul.f32 %v290, %v290
  %v307 = vmul.f32 %v291, %v291
  %v308 = vmul.f32 %v292, %v292
  %v309 = vsel %vm238, %v293, 0.0
  %v310 = vsel %vm238, %v294, 0.0
  %v311 = vadd.f32 %v309, %v310
  %v312 = vsel %vm238, %v295, 0.0
  %v313 = vadd.f32 %v311, %v312
  %v314 = vsel %vm238, %v296, 0.0
  %v315 = vadd.f32 %v313, %v314
  %v316 = vsel %vm238, %v297, 0.0
  %v317 = vadd.f32 %v315, %v316
  %v318 = vsel %vm238, %v298, 0.0
  %v319 = vadd.f32 %v317, %v318
  %v320 = vsel %vm238, %v299, 0.0
  %v321 = vadd.f32 %v319, %v320
  %v322 = vsel %vm238, %v300, 0.0
  %v323 = vadd.f32 %v321, %v322
  %v324 = vsel %vm238, %v301, 0.0
  %v325 = vadd.f32 %v323, %v324
  %v326 = vsel %vm238, %v302, 0.0
  %v327 = vadd.f32 %v325, %v326
  %v328 = vsel %vm238, %v303, 0.0
  %v329 = vadd.f32 %v327, %v328
  %v330 = vsel %vm238, %v304, 0.0
  %v331 = vadd.f32 %v329, %v330
  %v332 = vsel %vm238, %v305, 0.0
  %v333 = vadd.f32 %v331, %v332
  %v334 = vsel %vm238, %v306, 0.0
  %v335 = vadd.f32 %v333, %v334
  %v336 = vsel %vm238, %v307, 0.0
  %v337 = vadd.f32 %v335, %v336
  %v338 = vsel %vm238, %v308, 0.0
  %v339 = vadd.f32 %v337, %v338
  %v340 = vrot.slane %v339, 4
  %v341 = vadd.f32 %v339, %v340
  %v342 = vrot.slane %v341, 2
  %v343 = vadd.f32 %v341, %v342
  %v344 = vrot.slane %v343, 1
  %v345 = vadd.f32 %v343, %v344
  %v346 = vmul.f32 %v345, 0.0078125
  %v347 = vadd.f32 %v346, 1e-05
  %v348 = vrsqrt.pop %v347
  %v349 = vmul.f32 %v236, %v348
  %v351 = vlaneseq
  %v352 = vshrl.u32 %v351, 7
  %v353 = vsub.s32 0, %v352
  %v354 = vrot.slane %v349, %v353
  %v356 = vmul.f32 %v277, %v354
  %v357 = vmul.f32 %v278, %v354
  %v358 = vmul.f32 %v279, %v354
  %v359 = vmul.f32 %v280, %v354
  %v360 = vmul.f32 %v281, %v354
  %v361 = vmul.f32 %v282, %v354
  %v362 = vmul.f32 %v283, %v354
  %v363 = vmul.f32 %v284, %v354
  %v364 = vmul.f32 %v285, %v354
  %v365 = vmul.f32 %v286, %v354
  %v366 = vmul.f32 %v287, %v354
  %v367 = vmul.f32 %v288, %v354
  %v368 = vmul.f32 %v289, %v354
  %v369 = vmul.f32 %v290, %v354
  %v370 = vmul.f32 %v291, %v354
  %v371 = vmul.f32 %v292, %v354
  %v373 = vlaneseq
  %v374 = vshrl.u32 %v373, 7
  %v375 = vsub.s32 0, %v374
  %v376 = vrot.slane %v237, %v375
  %v378 = vadd.f32 %v356, %v376
  %v379 = vadd.f32 %v357, %v376
  %v380 = vadd.f32 %v358, %v376
  %v381 = vadd.f32 %v359, %v376
  %v382 = vadd.f32 %v360, %v376
  %v383 = vadd.f32 %v361, %v376
  %v384 = vadd.f32 %v362, %v376
  %v385 = vadd.f32 %v363, %v376
  %v386 = vadd.f32 %v364, %v376
  %v387 = vadd.f32 %v365, %v376
  %v388 = vadd.f32 %v366, %v376
  %v389 = vadd.f32 %v367, %v376
  %v390 = vadd.f32 %v368, %v376
  %v391 = vadd.f32 %v369, %v376
  %v392 = vadd.f32 %v370, %v376
  %v393 = vadd.f32 %v371, %v376
  %394 = vst.msk [vmem:[%s4] sm:$0xff] %vm238, %v378
  %395 = vst.msk [vmem:[%s4 + $0x8] sm:$0xff] %vm238, %v379
  %396 = vst.msk [vmem:[%s4 + $0x10] sm:$0xff] %vm238, %v380
  %397 = vst.msk [vmem:[%s4 + $0x18] sm:$0xff] %vm238, %v381
  %398 = vst.msk [vmem:[%s4 + $0x20] sm:$0xff] %vm238, %v382
  %399 = vst.msk [vmem:[%s4 + $0x28] sm:$0xff] %vm238, %v383
  %400 = vst.msk [vmem:[%s4 + $0x30] sm:$0xff] %vm238, %v384
  %401 = vst.msk [vmem:[%s4 + $0x38] sm:$0xff] %vm238, %v385
  %402 = vst.msk [vmem:[%s4 + $0x40] sm:$0xff] %vm238, %v386
  %403 = vst.msk [vmem:[%s4 + $0x48] sm:$0xff] %vm238, %v387
  %404 = vst.msk [vmem:[%s4 + $0x50] sm:$0xff] %vm238, %v388
  %405 = vst.msk [vmem:[%s4 + $0x58] sm:$0xff] %vm238, %v389
  %406 = vst.msk [vmem:[%s4 + $0x60] sm:$0xff] %vm238, %v390
  %407 = vst.msk [vmem:[%s4 + $0x68] sm:$0xff] %vm238, %v391
  %408 = vst.msk [vmem:[%s4 + $0x70] sm:$0xff] %vm238, %v392
  %409 = vst.msk [vmem:[%s4 + $0x78] sm:$0xff] %vm238, %v393
  // Predicated region
  $region18: #{encoder_forward.14} parent=0 // pred_check
    _
  $region19: #{encoder_forward.14} parent=0 // pred_check_branch
    %411 = sbr.rel (0) target = $region21
  $region20: #{encoder_forward.14} parent=0 // pred_region
    _
  $region21: #{encoder_forward.14} parent=0 // pred_fallthru
    _
  // Predicated region
  $region22: #{encoder_forward.14} parent=0 // pred_check
    _
  $region23: #{encoder_forward.14} parent=0 // pred_check_branch
    %413 = sbr.rel (0) target = $region25
  $region24: #{encoder_forward.14} parent=0 // pred_region
    _
  $region25: #{encoder_forward.14} parent=0 // pred_fallthru
    _

// kernel: encoder_forward.13
$region0: #{encoder_forward.13}
  #allocation0 [shape = 'u32[]', space=smem, size = 0x4, offset = 0x4, fixed_abs, tag = 'smem constant byte address 0x4 - core index']
  #allocation1 [shape = 'u32[144,128]{1,0:T(1,128)}', space=vmem, size = 0x12000, scoped, tag = 'internal scratch']
  %s0 = inlined_call_operand.vmem [shape: bf16[512,9], index: 0, kind: input, shape index: {}]
  %s1 = inlined_call_operand.vmem [shape: bf16[9,8], index: 1, kind: input, shape index: {}]
  %s2 = inlined_call_operand.vmem [shape: f32[1,8], index: 2, kind: input, shape index: {}]
  %s3 = inlined_call_operand.vmem [shape: f32[1,8], index: 3, kind: input, shape index: {}]
  %s4 = inlined_call_operand.vmem [shape: f32[512,8], index: 4, kind: output, shape index: {}]
  %s5 = sld [smem:[#allocation0]]
  $region26: #{encoder_forward.13} parent=0
    _
  %s7 = ssub.s32 1, %s5
  %s8 = scalar_select 0, %s7, %s5
  // Predicated region
  $region2: #{encoder_forward.13} parent=0 // pred_check
    _
  $region3: #{encoder_forward.13} parent=0 // pred_check_branch
    %10 = sbr.rel (0) target = $region5
  $region4: #{encoder_forward.13} parent=0 // pred_region
    _
  $region5: #{encoder_forward.13} parent=0 // pred_fallthru
    _
  // Predicated region
  $region6: #{encoder_forward.13} parent=0 // pred_check
    _
  $region7: #{encoder_forward.13} parent=0 // pred_check_branch
    %12 = sbr.rel (0) target = $region9
  $region8: #{encoder_forward.13} parent=0 // pred_region
    _
  $region9: #{encoder_forward.13} parent=0 // pred_fallthru
    _
  // Predicated region
  $region10: #{encoder_forward.13} parent=0 // pred_check
    _
  $region11: #{encoder_forward.13} parent=0 // pred_check_branch
    %14 = sbr.rel (0) target = $region13
  $region12: #{encoder_forward.13} parent=0 // pred_region
    _
  $region13: #{encoder_forward.13} parent=0 // pred_fallthru
    _
  // Predicated region
  $region14: #{encoder_forward.13} parent=0 // pred_check
    _
  $region15: #{encoder_forward.13} parent=0 // pred_check_branch
    %16 = sbr.rel (0) target = $region17
  $region16: #{encoder_forward.13} parent=0 // pred_region
    _
  $region17: #{encoder_forward.13} parent=0 // pred_fallthru
    _
  %v18 = vld [vmem:[%s0] sm:$0xf]
  %v19 = vld [vmem:[%s0 + $0x4] sm:$0xf]
  %v20 = vld [vmem:[%s0 + $0x8] sm:$0xf]
  %v21 = vld [vmem:[%s0 + $0xc] sm:$0xf]
  %v22 = vld [vmem:[%s0 + $0x10] sm:$0xf]
  %v23 = vld [vmem:[%s0 + $0x14] sm:$0xf]
  %v24 = vld [vmem:[%s0 + $0x18] sm:$0xf]
  %v25 = vld [vmem:[%s0 + $0x1c] sm:$0xf]
  %v26 = vld [vmem:[%s0 + $0x20] sm:$0xf]
  %v27 = vld [vmem:[%s0 + $0x24] sm:$0xf]
  %v28 = vld [vmem:[%s0 + $0x28] sm:$0xf]
  %v29 = vld [vmem:[%s0 + $0x2c] sm:$0xf]
  %v30 = vld [vmem:[%s0 + $0x30] sm:$0xf]
  %v31 = vld [vmem:[%s0 + $0x34] sm:$0xf]
  %v32 = vld [vmem:[%s0 + $0x38] sm:$0xf]
  %v33 = vld [vmem:[%s0 + $0x3c] sm:$0xf]
  %v34 = vld [vmem:[%s0 + $0x40] sm:$0xf]
  %v35 = vld [vmem:[%s0 + $0x44] sm:$0xf]
  %v36 = vld [vmem:[%s0 + $0x48] sm:$0xf]
  %v37 = vld [vmem:[%s0 + $0x4c] sm:$0xf]
  %v38 = vld [vmem:[%s0 + $0x50] sm:$0xf]
  %v39 = vld [vmem:[%s0 + $0x54] sm:$0xf]
  %v40 = vld [vmem:[%s0 + $0x58] sm:$0xf]
  %v41 = vld [vmem:[%s0 + $0x5c] sm:$0xf]
  %v42 = vld [vmem:[%s0 + $0x60] sm:$0xf]
  %v43 = vld [vmem:[%s0 + $0x64] sm:$0xf]
  %v44 = vld [vmem:[%s0 + $0x68] sm:$0xf]
  %v45 = vld [vmem:[%s0 + $0x6c] sm:$0xf]
  %v46 = vld [vmem:[%s0 + $0x70] sm:$0xf]
  %v47 = vld [vmem:[%s0 + $0x74] sm:$0xf]
  %v48 = vld [vmem:[%s0 + $0x78] sm:$0xf]
  %v49 = vld [vmem:[%s0 + $0x7c] sm:$0xf]
  %v50 = vld [vmem:[%s0 + $0x80] sm:$0xf]
  %v51 = vld [vmem:[%s0 + $0x84] sm:$0xf]
  %v52 = vld [vmem:[%s0 + $0x88] sm:$0xf]
  %v53 = vld [vmem:[%s0 + $0x8c] sm:$0xf]
  %v54 = vld [vmem:[%s0 + $0x90] sm:$0xf]
  %v55 = vld [vmem:[%s0 + $0x94] sm:$0xf]
  %v56 = vld [vmem:[%s0 + $0x98] sm:$0xf]
  %v57 = vld [vmem:[%s0 + $0x9c] sm:$0xf]
  %v58 = vld [vmem:[%s0 + $0xa0] sm:$0xf]
  %v59 = vld [vmem:[%s0 + $0xa4] sm:$0xf]
  %v60 = vld [vmem:[%s0 + $0xa8] sm:$0xf]
  %v61 = vld [vmem:[%s0 + $0xac] sm:$0xf]
  %v62 = vld [vmem:[%s0 + $0xb0] sm:$0xf]
  %v63 = vld [vmem:[%s0 + $0xb4] sm:$0xf]
  %v64 = vld [vmem:[%s0 + $0xb8] sm:$0xf]
  %v65 = vld [vmem:[%s0 + $0xbc] sm:$0xf]
  %v66 = vld [vmem:[%s0 + $0xc0] sm:$0xf]
  %v67 = vld [vmem:[%s0 + $0xc4] sm:$0xf]
  %v68 = vld [vmem:[%s0 + $0xc8] sm:$0xf]
  %v69 = vld [vmem:[%s0 + $0xcc] sm:$0xf]
  %v70 = vld [vmem:[%s0 + $0xd0] sm:$0xf]
  %v71 = vld [vmem:[%s0 + $0xd4] sm:$0xf]
  %v72 = vld [vmem:[%s0 + $0xd8] sm:$0xf]
  %v73 = vld [vmem:[%s0 + $0xdc] sm:$0xf]
  %v74 = vld [vmem:[%s0 + $0xe0] sm:$0xf]
  %v75 = vld [vmem:[%s0 + $0xe4] sm:$0xf]
  %v76 = vld [vmem:[%s0 + $0xe8] sm:$0xf]
  %v77 = vld [vmem:[%s0 + $0xec] sm:$0xf]
  %v78 = vld [vmem:[%s0 + $0xf0] sm:$0xf]
  %v79 = vld [vmem:[%s0 + $0xf4] sm:$0xf]
  %v80 = vld [vmem:[%s0 + $0xf8] sm:$0xf]
  %v81 = vld [vmem:[%s0 + $0xfc] sm:$0xf]
  %v82 = vld [vmem:[%s1] sm:$0xf]
  %v83 = vld [vmem:[%s1 + $0x4] sm:$0x1]
  %v148 = vunpack.c.l.b16 %v18
  %v149 = vunpack.c.l.b16 %v19
  %v150 = vunpack.c.l.b16 %v20
  %v151 = vunpack.c.l.b16 %v21
  %v152 = vunpack.c.l.b16 %v22
  %v153 = vunpack.c.l.b16 %v23
  %v154 = vunpack.c.l.b16 %v24
  %v155 = vunpack.c.l.b16 %v25
  %v156 = vunpack.c.l.b16 %v26
  %v157 = vunpack.c.l.b16 %v27
  %v158 = vunpack.c.l.b16 %v28
  %v159 = vunpack.c.l.b16 %v29
  %v160 = vunpack.c.l.b16 %v30
  %v161 = vunpack.c.l.b16 %v31
  %v162 = vunpack.c.l.b16 %v32
  %v163 = vunpack.c.l.b16 %v33
  %v164 = vunpack.c.l.b16 %v34
  %v165 = vunpack.c.l.b16 %v35
  %v166 = vunpack.c.l.b16 %v36
  %v167 = vunpack.c.l.b16 %v37
  %v168 = vunpack.c.l.b16 %v38
  %v169 = vunpack.c.l.b16 %v39
  %v170 = vunpack.c.l.b16 %v40
  %v171 = vunpack.c.l.b16 %v41
  %v172 = vunpack.c.l.b16 %v42
  %v173 = vunpack.c.l.b16 %v43
  %v174 = vunpack.c.l.b16 %v44
  %v175 = vunpack.c.l.b16 %v45
  %v176 = vunpack.c.l.b16 %v46
  %v177 = vunpack.c.l.b16 %v47
  %v178 = vunpack.c.l.b16 %v48
  %v179 = vunpack.c.l.b16 %v49
  %v180 = vunpack.c.l.b16 %v50
  %v181 = vunpack.c.l.b16 %v51
  %v182 = vunpack.c.l.b16 %v52
  %v183 = vunpack.c.l.b16 %v53
  %v184 = vunpack.c.l.b16 %v54
  %v185 = vunpack.c.l.b16 %v55
  %v186 = vunpack.c.l.b16 %v56
  %v187 = vunpack.c.l.b16 %v57
  %v188 = vunpack.c.l.b16 %v58
  %v189 = vunpack.c.l.b16 %v59
  %v190 = vunpack.c.l.b16 %v60
  %v191 = vunpack.c.l.b16 %v61
  %v192 = vunpack.c.l.b16 %v62
  %v193 = vunpack.c.l.b16 %v63
  %v194 = vunpack.c.l.b16 %v64
  %v195 = vunpack.c.l.b16 %v65
  %v196 = vunpack.c.l.b16 %v66
  %v197 = vunpack.c.l.b16 %v67
  %v198 = vunpack.c.l.b16 %v68
  %v199 = vunpack.c.l.b16 %v69
  %v200 = vunpack.c.l.b16 %v70
  %v201 = vunpack.c.l.b16 %v71
  %v202 = vunpack.c.l.b16 %v72
  %v203 = vunpack.c.l.b16 %v73
  %v204 = vunpack.c.l.b16 %v74
  %v205 = vunpack.c.l.b16 %v75
  %v206 = vunpack.c.l.b16 %v76
  %v207 = vunpack.c.l.b16 %v77
  %v208 = vunpack.c.l.b16 %v78
  %v209 = vunpack.c.l.b16 %v79
  %v210 = vunpack.c.l.b16 %v80
  %v211 = vunpack.c.l.b16 %v81
  %v212 = vpack.c.b16 %v149, %v148
  %v213 = vpack.c.b16 %v151, %v150
  %v214 = vpack.c.b16 %v153, %v152
  %v215 = vpack.c.b16 %v155, %v154
  %v216 = vpack.c.b16 %v157, %v156
  %v217 = vpack.c.b16 %v159, %v158
  %v218 = vpack.c.b16 %v161, %v160
  %v219 = vpack.c.b16 %v163, %v162
  %v220 = vpack.c.b16 %v165, %v164
  %v221 = vpack.c.b16 %v167, %v166
  %v222 = vpack.c.b16 %v169, %v168
  %v223 = vpack.c.b16 %v171, %v170
  %v224 = vpack.c.b16 %v173, %v172
  %v225 = vpack.c.b16 %v175, %v174
  %v226 = vpack.c.b16 %v177, %v176
  %v227 = vpack.c.b16 %v179, %v178
  %v228 = vpack.c.b16 %v181, %v180
  %v229 = vpack.c.b16 %v183, %v182
  %v230 = vpack.c.b16 %v185, %v184
  %v231 = vpack.c.b16 %v187, %v186
  %v232 = vpack.c.b16 %v189, %v188
  %v233 = vpack.c.b16 %v191, %v190
  %v234 = vpack.c.b16 %v193, %v192
  %v235 = vpack.c.b16 %v195, %v194
  %v236 = vpack.c.b16 %v197, %v196
  %v237 = vpack.c.b16 %v199, %v198
  %v238 = vpack.c.b16 %v201, %v200
  %v239 = vpack.c.b16 %v203, %v202
  %v240 = vpack.c.b16 %v205, %v204
  %v241 = vpack.c.b16 %v207, %v206
  %v242 = vpack.c.b16 %v209, %v208
  %v243 = vpack.c.b16 %v211, %v210
  %v246 = vunpack.c.l.b16 %v82
  %v247 = vunpack.c.l.b16 %v83
  %v248 = vpack.c.b16 %v247, %v246
  %vm249 = vcmask 72704
  %v251 = vsel %vm249, %v212, 0
  %v254 = vsel %vm249, %v213, 0
  %v257 = vsel %vm249, %v214, 0
  %v260 = vsel %vm249, %v215, 0
  %v263 = vsel %vm249, %v216, 0
  %v266 = vsel %vm249, %v217, 0
  %v269 = vsel %vm249, %v218, 0
  %v272 = vsel %vm249, %v219, 0
  %v275 = vsel %vm249, %v220, 0
  %v278 = vsel %vm249, %v221, 0
  %v281 = vsel %vm249, %v222, 0
  %v284 = vsel %vm249, %v223, 0
  %v287 = vsel %vm249, %v224, 0
  %v290 = vsel %vm249, %v225, 0
  %v293 = vsel %vm249, %v226, 0
  %v296 = vsel %vm249, %v227, 0
  %v299 = vsel %vm249, %v228, 0
  %v302 = vsel %vm249, %v229, 0
  %v305 = vsel %vm249, %v230, 0
  %v308 = vsel %vm249, %v231, 0
  %v311 = vsel %vm249, %v232, 0
  %v314 = vsel %vm249, %v233, 0
  %v317 = vsel %vm249, %v234, 0
  %v320 = vsel %vm249, %v235, 0
  %v323 = vsel %vm249, %v236, 0
  %v326 = vsel %vm249, %v237, 0
  %v329 = vsel %vm249, %v238, 0
  %v332 = vsel %vm249, %v239, 0
  %v335 = vsel %vm249, %v240, 0
  %v338 = vsel %vm249, %v241, 0
  %v341 = vsel %vm249, %v242, 0
  %v344 = vsel %vm249, %v243, 0
  %vm346 = vcmask 1043456
  %vm347 = vcmask 1044480
  %v348 = vsel %vm346, 4294967295, 65535
  %v349 = vsel %vm347, %v348, 0
  %v351 = vand.u32 %v248, %v349
  %353 = vmatprep.subr.bf16.mxu0 0
  %354 = vmatpush1.bf16.msra.mxu0 %v351
  %355 = vmatprep.subr.bf16.mxu0 0
  %356 = vmatpush1.bf16.msra.mxu0 0
  %357 = vmatprep.subr.bf16.mxu0 0
  %358 = vmatpush1.bf16.msra.mxu0 0
  %359 = vmatprep.subr.bf16.mxu0 0
  %360 = vmatpush1.bf16.msra.mxu0 0
  %361 = vmatprep.subr.bf16.mxu0 0
  %362 = vmatpush1.bf16.msra.mxu0 0
  %363 = vmatprep.subr.bf16.mxu0 0
  %364 = vmatpush1.bf16.msra.mxu0 0
  %365 = vmatprep.subr.bf16.mxu0 0
  %366 = vmatpush1.bf16.msra.mxu0 0
  %367 = vmatprep.subr.bf16.mxu0 0
  %368 = vmatpush1.bf16.msra.mxu0 0
  %369 = vmatprep.subr.bf16.mxu0 0
  %370 = vmatpush1.bf16.msra.mxu0 0
  %371 = vmatprep.subr.bf16.mxu0 0
  %372 = vmatpush1.bf16.msra.mxu0 0
  %373 = vmatprep.subr.bf16.mxu0 0
  %374 = vmatpush1.bf16.msra.mxu0 0
  %375 = vmatprep.subr.bf16.mxu0 0
  %376 = vmatpush1.bf16.msra.mxu0 0
  %377 = vmatprep.subr.bf16.mxu0 0
  %378 = vmatpush1.bf16.msra.mxu0 0
  %379 = vmatprep.subr.bf16.mxu0 0
  %380 = vmatpush1.bf16.msra.mxu0 0
  %381 = vmatprep.subr.bf16.mxu0 0
  %382 = vmatpush1.bf16.msra.mxu0 0
  %383 = vmatprep.subr.bf16.mxu0 0
  %384 = vmatpush1.bf16.msra.mxu0 0
  %385 = vmatprep.mubr.bf16.mxu0 0
  %386 = vmatmul.mubr.bf16.gmra.mrb[0].mxu0 %v251
  %v387 = vpop.f32.mrb[0].mxu0
  %v388 = vadd.f32 0.0, %v387
  %v389 = vpop.f32.mrb[0].mxu0
  %v390 = vpop.f32.mrb[0].mxu0
  %v391 = vadd.f32 0.0, %v390
  %v392 = vpop.f32.mrb[0].mxu0
  %393 = vmatprep.mubr.bf16.mxu0 0
  %394 = vmatmul.mubr.bf16.gmra.mrb[0].mxu0 %v254
  %v395 = vpop.f32.mrb[0].mxu0
  %v396 = vadd.f32 0.0, %v395
  %v397 = vpop.f32.mrb[0].mxu0
  %v398 = vpop.f32.mrb[0].mxu0
  %v399 = vadd.f32 0.0, %v398
  %v400 = vpop.f32.mrb[0].mxu0
  %401 = vmatprep.mubr.bf16.mxu0 0
  %402 = vmatmul.mubr.bf16.gmra.mrb[0].mxu0 %v257
  %v403 = vpop.f32.mrb[0].mxu0
  %v404 = vadd.f32 0.0, %v403
  %v405 = vpop.f32.mrb[0].mxu0
  %v406 = vpop.f32.mrb[0].mxu0
  %v407 = vadd.f32 0.0, %v406
  %v408 = vpop.f32.mrb[0].mxu0
  %409 = vmatprep.mubr.bf16.mxu0 0
  %410 = vmatmul.mubr.bf16.gmra.mrb[0].mxu0 %v260
  %v411 = vpop.f32.mrb[0].mxu0
  %v412 = vadd.f32 0.0, %v411
  %v413 = vpop.f32.mrb[0].mxu0
  %v414 = vpop.f32.mrb[0].mxu0
  %v415 = vadd.f32 0.0, %v414
  %v416 = vpop.f32.mrb[0].mxu0
  %417 = vmatprep.mubr.bf16.mxu0 0
  %418 = vmatmul.mubr.bf16.gmra.mrb[0].mxu0 %v263
  %v419 = vpop.f32.mrb[0].mxu0
  %v420 = vadd.f32 0.0, %v419
  %v421 = vpop.f32.mrb[0].mxu0
  %v422 = vpop.f32.mrb[0].mxu0
  %v423 = vadd.f32 0.0, %v422
  %v424 = vpop.f32.mrb[0].mxu0
  %425 = vmatprep.mubr.bf16.mxu0 0
  %426 = vmatmul.mubr.bf16.gmra.mrb[0].mxu0 %v266
  %v427 = vpop.f32.mrb[0].mxu0
  %v428 = vadd.f32 0.0, %v427
  %v429 = vpop.f32.mrb[0].mxu0
  %v430 = vpop.f32.mrb[0].mxu0
  %v431 = vadd.f32 0.0, %v430
  %v432 = vpop.f32.mrb[0].mxu0
  %433 = vmatprep.mubr.bf16.mxu0 0
  %434 = vmatmul.mubr.bf16.gmra.mrb[0].mxu0 %v269
  %v435 = vpop.f32.mrb[0].mxu0
  %v436 = vadd.f32 0.0, %v435
  %v437 = vpop.f32.mrb[0].mxu0
  %v438 = vpop.f32.mrb[0].mxu0
  %v439 = vadd.f32 0.0, %v438
  %v440 = vpop.f32.mrb[0].mxu0
  %441 = vmatprep.mubr.bf16.mxu0 0
  %442 = vmatmul.mubr.bf16.gmra.mrb[0].mxu0 %v272
  %v443 = vpop.f32.mrb[0].mxu0
  %v444 = vadd.f32 0.0, %v443
  %v445 = vpop.f32.mrb[0].mxu0
  %v446 = vpop.f32.mrb[0].mxu0
  %v447 = vadd.f32 0.0, %v446
  %v448 = vpop.f32.mrb[0].mxu0
  %449 = vmatprep.mubr.bf16.mxu0 0
  %450 = vmatmul.mubr.bf16.gmra.mrb[0].mxu0 %v275
  %v451 = vpop.f32.mrb[0].mxu0
  %v452 = vadd.f32 0.0, %v451
  %v453 = vpop.f32.mrb[0].mxu0
  %v454 = vpop.f32.mrb[0].mxu0
  %v455 = vadd.f32 0.0, %v454
  %v456 = vpop.f32.mrb[0].mxu0
  %457 = vmatprep.mubr.bf16.mxu0 0
  %458 = vmatmul.mubr.bf16.gmra.mrb[0].mxu0 %v278
  %v459 = vpop.f32.mrb[0].mxu0
  %v460 = vadd.f32 0.0, %v459
  %v461 = vpop.f32.mrb[0].mxu0
  %v462 = vpop.f32.mrb[0].mxu0
  %v463 = vadd.f32 0.0, %v462
  %v464 = vpop.f32.mrb[0].mxu0
  %465 = vmatprep.mubr.bf16.mxu0 0
  %466 = vmatmul.mubr.bf16.gmra.mrb[0].mxu0 %v281
  %v467 = vpop.f32.mrb[0].mxu0
  %v468 = vadd.f32 0.0, %v467
  %v469 = vpop.f32.mrb[0].mxu0
  %v470 = vpop.f32.mrb[0].mxu0
  %v471 = vadd.f32 0.0, %v470
  %v472 = vpop.f32.mrb[0].mxu0
  %473 = vmatprep.mubr.bf16.mxu0 0
  %474 = vmatmul.mubr.bf16.gmra.mrb[0].mxu0 %v284
  %v475 = vpop.f32.mrb[0].mxu0
  %v476 = vadd.f32 0.0, %v475
  %v477 = vpop.f32.mrb[0].mxu0
  %v478 = vpop.f32.mrb[0].mxu0
  %v479 = vadd.f32 0.0, %v478
  %v480 = vpop.f32.mrb[0].mxu0
  %481 = vmatprep.mubr.bf16.mxu0 0
  %482 = vmatmul.mubr.bf16.gmra.mrb[0].mxu0 %v287
  %v483 = vpop.f32.mrb[0].mxu0
  %v484 = vadd.f32 0.0, %v483
  %v485 = vpop.f32.mrb[0].mxu0
  %v486 = vpop.f32.mrb[0].mxu0
  %v487 = vadd.f32 0.0, %v486
  %v488 = vpop.f32.mrb[0].mxu0
  %489 = vmatprep.mubr.bf16.mxu0 0
  %490 = vmatmul.mubr.bf16.gmra.mrb[0].mxu0 %v290
  %v491 = vpop.f32.mrb[0].mxu0
  %v492 = vadd.f32 0.0, %v491
  %v493 = vpop.f32.mrb[0].mxu0
  %v494 = vpop.f32.mrb[0].mxu0
  %v495 = vadd.f32 0.0, %v494
  %v496 = vpop.f32.mrb[0].mxu0
  %497 = vmatprep.mubr.bf16.mxu0 0
  %498 = vmatmul.mubr.bf16.gmra.mrb[0].mxu0 %v293
  %v499 = vpop.f32.mrb[0].mxu0
  %v500 = vadd.f32 0.0, %v499
  %v501 = vpop.f32.mrb[0].mxu0
  %v502 = vpop.f32.mrb[0].mxu0
  %v503 = vadd.f32 0.0, %v502
  %v504 = vpop.f32.mrb[0].mxu0
  %505 = vmatprep.mubr.bf16.mxu0 0
  %506 = vmatmul.mubr.bf16.gmra.mrb[0].mxu0 %v296
  %v507 = vpop.f32.mrb[0].mxu0
  %v508 = vadd.f32 0.0, %v507
  %v509 = vpop.f32.mrb[0].mxu0
  %v510 = vpop.f32.mrb[0].mxu0
  %v511 = vadd.f32 0.0, %v510
  %v512 = vpop.f32.mrb[0].mxu0
  %513 = vmatprep.mubr.bf16.mxu0 0
  %514 = vmatmul.mubr.bf16.gmra.mrb[0].mxu0 %v299
  %v515 = vpop.f32.mrb[0].mxu0
  %v516 = vadd.f32 0.0, %v515
  %v517 = vpop.f32.mrb[0].mxu0
  %v518 = vpop.f32.mrb[0].mxu0
  %v519 = vadd.f32 0.0, %v518
  %v520 = vpop.f32.mrb[0].mxu0
  %521 = vmatprep.mubr.bf16.mxu0 0
  %522 = vmatmul.mubr.bf16.gmra.mrb[0].mxu0 %v302
  %v523 = vpop.f32.mrb[0].mxu0
  %v524 = vadd.f32 0.0, %v523
  %v525 = vpop.f32.mrb[0].mxu0
  %v526 = vpop.f32.mrb[0].mxu0
  %v527 = vadd.f32 0.0, %v526
  %v528 = vpop.f32.mrb[0].mxu0
  %529 = vmatprep.mubr.bf16.mxu0 0
  %530 = vmatmul.mubr.bf16.gmra.mrb[0].mxu0 %v305
  %v531 = vpop.f32.mrb[0].mxu0
  %v532 = vadd.f32 0.0, %v531
  %v533 = vpop.f32.mrb[0].mxu0
  %v534 = vpop.f32.mrb[0].mxu0
  %v535 = vadd.f32 0.0, %v534
  %v536 = vpop.f32.mrb[0].mxu0
  %537 = vmatprep.mubr.bf16.mxu0 0
  %538 = vmatmul.mubr.bf16.gmra.mrb[0].mxu0 %v308
  %v539 = vpop.f32.mrb[0].mxu0
  %v540 = vadd.f32 0.0, %v539
  %v541 = vpop.f32.mrb[0].mxu0
  %v542 = vpop.f32.mrb[0].mxu0
  %v543 = vadd.f32 0.0, %v542
  %v544 = vpop.f32.mrb[0].mxu0
  %545 = vmatprep.mubr.bf16.mxu0 0
  %546 = vmatmul.mubr.bf16.gmra.mrb[0].mxu0 %v311
  %v547 = vpop.f32.mrb[0].mxu0
  %v548 = vadd.f32 0.0, %v547
  %v549 = vpop.f32.mrb[0].mxu0
  %v550 = vpop.f32.mrb[0].mxu0
  %v551 = vadd.f32 0.0, %v550
  %v552 = vpop.f32.mrb[0].mxu0
  %553 = vmatprep.mubr.bf16.mxu0 0
  %554 = vmatmul.mubr.bf16.gmra.mrb[0].mxu0 %v314
  %v555 = vpop.f32.mrb[0].mxu0
  %v556 = vadd.f32 0.0, %v555
  %v557 = vpop.f32.mrb[0].mxu0
  %v558 = vpop.f32.mrb[0].mxu0
  %v559 = vadd.f32 0.0, %v558
  %v560 = vpop.f32.mrb[0].mxu0
  %561 = vmatprep.mubr.bf16.mxu0 0
  %562 = vmatmul.mubr.bf16.gmra.mrb[0].mxu0 %v317
  %v563 = vpop.f32.mrb[0].mxu0
  %v564 = vadd.f32 0.0, %v563
  %v565 = vpop.f32.mrb[0].mxu0
  %v566 = vpop.f32.mrb[0].mxu0
  %v567 = vadd.f32 0.0, %v566
  %v568 = vpop.f32.mrb[0].mxu0
  %569 = vmatprep.mubr.bf16.mxu0 0
  %570 = vmatmul.mubr.bf16.gmra.mrb[0].mxu0 %v320
  %v571 = vpop.f32.mrb[0].mxu0
  %v572 = vadd.f32 0.0, %v571
  %v573 = vpop.f32.mrb[0].mxu0
  %v574 = vpop.f32.mrb[0].mxu0
  %v575 = vadd.f32 0.0, %v574
  %v576 = vpop.f32.mrb[0].mxu0
  %577 = vmatprep.mubr.bf16.mxu0 0
  %578 = vmatmul.mubr.bf16.gmra.mrb[0].mxu0 %v323
  %v579 = vpop.f32.mrb[0].mxu0
  %v580 = vadd.f32 0.0, %v579
  %v581 = vpop.f32.mrb[0].mxu0
  %v582 = vpop.f32.mrb[0].mxu0
  %v583 = vadd.f32 0.0, %v582
  %v584 = vpop.f32.mrb[0].mxu0
  %585 = vmatprep.mubr.bf16.mxu0 0
  %586 = vmatmul.mubr.bf16.gmra.mrb[0].mxu0 %v326
  %v587 = vpop.f32.mrb[0].mxu0
  %v588 = vadd.f32 0.0, %v587
  %v589 = vpop.f32.mrb[0].mxu0
  %v590 = vpop.f32.mrb[0].mxu0
  %v591 = vadd.f32 0.0, %v590
  %v592 = vpop.f32.mrb[0].mxu0
  %593 = vmatprep.mubr.bf16.mxu0 0
  %594 = vmatmul.mubr.bf16.gmra.mrb[0].mxu0 %v329
  %v595 = vpop.f32.mrb[0].mxu0
  %v596 = vadd.f32 0.0, %v595
  %v597 = vpop.f32.mrb[0].mxu0
  %v598 = vpop.f32.mrb[0].mxu0
  %v599 = vadd.f32 0.0, %v598
  %v600 = vpop.f32.mrb[0].mxu0
  %601 = vmatprep.mubr.bf16.mxu0 0
  %602 = vmatmul.mubr.bf16.gmra.mrb[0].mxu0 %v332
  %v603 = vpop.f32.mrb[0].mxu0
  %v604 = vadd.f32 0.0, %v603
  %v605 = vpop.f32.mrb[0].mxu0
  %v606 = vpop.f32.mrb[0].mxu0
  %v607 = vadd.f32 0.0, %v606
  %v608 = vpop.f32.mrb[0].mxu0
  %609 = vmatprep.mubr.bf16.mxu0 0
  %610 = vmatmul.mubr.bf16.gmra.mrb[0].mxu0 %v335
  %v611 = vpop.f32.mrb[0].mxu0
  %v612 = vadd.f32 0.0, %v611
  %v613 = vpop.f32.mrb[0].mxu0
  %v614 = vpop.f32.mrb[0].mxu0
  %v615 = vadd.f32 0.0, %v614
  %v616 = vpop.f32.mrb[0].mxu0
  %617 = vmatprep.mubr.bf16.mxu0 0
  %618 = vmatmul.mubr.bf16.gmra.mrb[0].mxu0 %v338
  %v619 = vpop.f32.mrb[0].mxu0
  %v620 = vadd.f32 0.0, %v619
  %v621 = vpop.f32.mrb[0].mxu0
  %v622 = vpop.f32.mrb[0].mxu0
  %v623 = vadd.f32 0.0, %v622
  %v624 = vpop.f32.mrb[0].mxu0
  %625 = vmatprep.mubr.bf16.mxu0 0
  %626 = vmatmul.mubr.bf16.gmra.mrb[0].mxu0 %v341
  %v627 = vpop.f32.mrb[0].mxu0
  %v628 = vadd.f32 0.0, %v627
  %v629 = vpop.f32.mrb[0].mxu0
  %v630 = vpop.f32.mrb[0].mxu0
  %v631 = vadd.f32 0.0, %v630
  %v632 = vpop.f32.mrb[0].mxu0
  %633 = vmatprep.mubr.bf16.mxu0 0
  %634 = vmatmul.mubr.bf16.gmra.mrb[0].mxu0 %v344
  %v635 = vpop.f32.mrb[0].mxu0
  %v636 = vadd.f32 0.0, %v635
  %v637 = vpop.f32.mrb[0].mxu0
  %v638 = vpop.f32.mrb[0].mxu0
  %v639 = vadd.f32 0.0, %v638
  %v640 = vpop.f32.mrb[0].mxu0
  %641 = vdwg.mxu0
  %v642 = vld [vmem:[%s2] sm:$0x1]
  %v643 = vld [vmem:[%s3] sm:$0x1]
  %vm644 = vcmask 64512
  %v645 = vsel %vm644, %v388, 0.0
  %v646 = vsel %vm644, %v391, 0.0
  %v647 = vadd.f32 %v645, %v646
  %v648 = vsel %vm644, %v396, 0.0
  %v649 = vadd.f32 %v647, %v648
  %v650 = vsel %vm644, %v399, 0.0
  %v651 = vadd.f32 %v649, %v650
  %v652 = vsel %vm644, %v404, 0.0
  %v653 = vadd.f32 %v651, %v652
  %v654 = vsel %vm644, %v407, 0.0
  %v655 = vadd.f32 %v653, %v654
  %v656 = vsel %vm644, %v412, 0.0
  %v657 = vadd.f32 %v655, %v656
  %v658 = vsel %vm644, %v415, 0.0
  %v659 = vadd.f32 %v657, %v658
  %v660 = vsel %vm644, %v420, 0.0
  %v661 = vadd.f32 %v659, %v660
  %v662 = vsel %vm644, %v423, 0.0
  %v663 = vadd.f32 %v661, %v662
  %v664 = vsel %vm644, %v428, 0.0
  %v665 = vadd.f32 %v663, %v664
  %v666 = vsel %vm644, %v431, 0.0
  %v667 = vadd.f32 %v665, %v666
  %v668 = vsel %vm644, %v436, 0.0
  %v669 = vadd.f32 %v667, %v668
  %v670 = vsel %vm644, %v439, 0.0
  %v671 = vadd.f32 %v669, %v670
  %v672 = vsel %vm644, %v444, 0.0
  %v673 = vadd.f32 %v671, %v672
  %v674 = vsel %vm644, %v447, 0.0
  %v675 = vadd.f32 %v673, %v674
  %v676 = vsel %vm644, %v452, 0.0
  %v677 = vadd.f32 %v675, %v676
  %v678 = vsel %vm644, %v455, 0.0
  %v679 = vadd.f32 %v677, %v678
  %v680 = vsel %vm644, %v460, 0.0
  %v681 = vadd.f32 %v679, %v680
  %v682 = vsel %vm644, %v463, 0.0
  %v683 = vadd.f32 %v681, %v682
  %v684 = vsel %vm644, %v468, 0.0
  %v685 = vadd.f32 %v683, %v684
  %v686 = vsel %vm644, %v471, 0.0
  %v687 = vadd.f32 %v685, %v686
  %v688 = vsel %vm644, %v476, 0.0
  %v689 = vadd.f32 %v687, %v688
  %v690 = vsel %vm644, %v479, 0.0
  %v691 = vadd.f32 %v689, %v690
  %v692 = vsel %vm644, %v484, 0.0
  %v693 = vadd.f32 %v691, %v692
  %v694 = vsel %vm644, %v487, 0.0
  %v695 = vadd.f32 %v693, %v694
  %v696 = vsel %vm644, %v492, 0.0
  %v697 = vadd.f32 %v695, %v696
  %v698 = vsel %vm644, %v495, 0.0
  %v699 = vadd.f32 %v697, %v698
  %v700 = vsel %vm644, %v500, 0.0
  %v701 = vadd.f32 %v699, %v700
  %v702 = vsel %vm644, %v503, 0.0
  %v703 = vadd.f32 %v701, %v702
  %v704 = vsel %vm644, %v508, 0.0
  %v705 = vadd.f32 %v703, %v704
  %v706 = vsel %vm644, %v511, 0.0
  %v707 = vadd.f32 %v705, %v706
  %v708 = vsel %vm644, %v516, 0.0
  %v709 = vadd.f32 %v707, %v708
  %v710 = vsel %vm644, %v519, 0.0
  %v711 = vadd.f32 %v709, %v710
  %v712 = vsel %vm644, %v524, 0.0
  %v713 = vadd.f32 %v711, %v712
  %v714 = vsel %vm644, %v527, 0.0
  %v715 = vadd.f32 %v713, %v714
  %v716 = vsel %vm644, %v532, 0.0
  %v717 = vadd.f32 %v715, %v716
  %v718 = vsel %vm644, %v535, 0.0
  %v719 = vadd.f32 %v717, %v718
  %v720 = vsel %vm644, %v540, 0.0
  %v721 = vadd.f32 %v719, %v720
  %v722 = vsel %vm644, %v543, 0.0
  %v723 = vadd.f32 %v721, %v722
  %v724 = vsel %vm644, %v548, 0.0
  %v725 = vadd.f32 %v723, %v724
  %v726 = vsel %vm644, %v551, 0.0
  %v727 = vadd.f32 %v725, %v726
  %v728 = vsel %vm644, %v556, 0.0
  %v729 = vadd.f32 %v727, %v728
  %v730 = vsel %vm644, %v559, 0.0
  %v731 = vadd.f32 %v729, %v730
  %v732 = vsel %vm644, %v564, 0.0
  %v733 = vadd.f32 %v731, %v732
  %v734 = vsel %vm644, %v567, 0.0
  %v735 = vadd.f32 %v733, %v734
  %v736 = vsel %vm644, %v572, 0.0
  %v737 = vadd.f32 %v735, %v736
  %v738 = vsel %vm644, %v575, 0.0
  %v739 = vadd.f32 %v737, %v738
  %v740 = vsel %vm644, %v580, 0.0
  %v741 = vadd.f32 %v739, %v740
  %v742 = vsel %vm644, %v583, 0.0
  %v743 = vadd.f32 %v741, %v742
  %v744 = vsel %vm644, %v588, 0.0
  %v745 = vadd.f32 %v743, %v744
  %v746 = vsel %vm644, %v591, 0.0
  %v747 = vadd.f32 %v745, %v746
  %v748 = vsel %vm644, %v596, 0.0
  %v749 = vadd.f32 %v747, %v748
  %v750 = vsel %vm644, %v599, 0.0
  %v751 = vadd.f32 %v749, %v750
  %v752 = vsel %vm644, %v604, 0.0
  %v753 = vadd.f32 %v751, %v752
  %v754 = vsel %vm644, %v607, 0.0
  %v755 = vadd.f32 %v753, %v754
  %v756 = vsel %vm644, %v612, 0.0
  %v757 = vadd.f32 %v755, %v756
  %v758 = vsel %vm644, %v615, 0.0
  %v759 = vadd.f32 %v757, %v758
  %v760 = vsel %vm644, %v620, 0.0
  %v761 = vadd.f32 %v759, %v760
  %v762 = vsel %vm644, %v623, 0.0
  %v763 = vadd.f32 %v761, %v762
  %v764 = vsel %vm644, %v628, 0.0
  %v765 = vadd.f32 %v763, %v764
  %v766 = vsel %vm644, %v631, 0.0
  %v767 = vadd.f32 %v765, %v766
  %v768 = vsel %vm644, %v636, 0.0
  %v769 = vadd.f32 %v767, %v768
  %v770 = vsel %vm644, %v639, 0.0
  %v771 = vadd.f32 %v769, %v770
  %v772 = vrot.slane %v771, 4
  %v773 = vadd.f32 %v771, %v772
  %v774 = vrot.slane %v773, 2
  %v775 = vadd.f32 %v773, %v774
  %v776 = vrot.slane %v775, 1
  %v777 = vadd.f32 %v775, %v776
  %v778 = vmul.f32 %v777, 0.001953125
  %v779 = vsub.f32 %v388, %v778
  %v780 = vsub.f32 %v391, %v778
  %v781 = vsub.f32 %v396, %v778
  %v782 = vsub.f32 %v399, %v778
  %v783 = vsub.f32 %v404, %v778
  %v784 = vsub.f32 %v407, %v778
  %v785 = vsub.f32 %v412, %v778
  %v786 = vsub.f32 %v415, %v778
  %v787 = vsub.f32 %v420, %v778
  %v788 = vsub.f32 %v423, %v778
  %v789 = vsub.f32 %v428, %v778
  %v790 = vsub.f32 %v431, %v778
  %v791 = vsub.f32 %v436, %v778
  %v792 = vsub.f32 %v439, %v778
  %v793 = vsub.f32 %v444, %v778
  %v794 = vsub.f32 %v447, %v778
  %v795 = vsub.f32 %v452, %v778
  %v796 = vsub.f32 %v455, %v778
  %v797 = vsub.f32 %v460, %v778
  %v798 = vsub.f32 %v463, %v778
  %v799 = vsub.f32 %v468, %v778
  %v800 = vsub.f32 %v471, %v778
  %v801 = vsub.f32 %v476, %v778
  %v802 = vsub.f32 %v479, %v778
  %v803 = vsub.f32 %v484, %v778
  %v804 = vsub.f32 %v487, %v778
  %v805 = vsub.f32 %v492, %v778
  %v806 = vsub.f32 %v495, %v778
  %v807 = vsub.f32 %v500, %v778
  %v808 = vsub.f32 %v503, %v778
  %v809 = vsub.f32 %v508, %v778
  %v810 = vsub.f32 %v511, %v778
  %v811 = vsub.f32 %v516, %v778
  %v812 = vsub.f32 %v519, %v778
  %v813 = vsub.f32 %v524, %v778
  %v814 = vsub.f32 %v527, %v778
  %v815 = vsub.f32 %v532, %v778
  %v816 = vsub.f32 %v535, %v778
  %v817 = vsub.f32 %v540, %v778
  %v818 = vsub.f32 %v543, %v778
  %v819 = vsub.f32 %v548, %v778
  %v820 = vsub.f32 %v551, %v778
  %v821 = vsub.f32 %v556, %v778
  %v822 = vsub.f32 %v559, %v778
  %v823 = vsub.f32 %v564, %v778
  %v824 = vsub.f32 %v567, %v778
  %v825 = vsub.f32 %v572, %v778
  %v826 = vsub.f32 %v575, %v778
  %v827 = vsub.f32 %v580, %v778
  %v828 = vsub.f32 %v583, %v778
  %v829 = vsub.f32 %v588, %v778
  %v830 = vsub.f32 %v591, %v778
  %v831 = vsub.f32 %v596, %v778
  %v832 = vsub.f32 %v599, %v778
  %v833 = vsub.f32 %v604, %v778
  %v834 = vsub.f32 %v607, %v778
  %v835 = vsub.f32 %v612, %v778
  %v836 = vsub.f32 %v615, %v778
  %v837 = vsub.f32 %v620, %v778
  %v838 = vsub.f32 %v623, %v778
  %v839 = vsub.f32 %v628, %v778
  %v840 = vsub.f32 %v631, %v778
  %v841 = vsub.f32 %v636, %v778
  %v842 = vsub.f32 %v639, %v778
  %v843 = vmul.f32 %v779, %v779
  %v844 = vmul.f32 %v780, %v780
  %v845 = vmul.f32 %v781, %v781
  %v846 = vmul.f32 %v782, %v782
  %v847 = vmul.f32 %v783, %v783
  %v848 = vmul.f32 %v784, %v784
  %v849 = vmul.f32 %v785, %v785
  %v850 = vmul.f32 %v786, %v786
  %v851 = vmul.f32 %v787, %v787
  %v852 = vmul.f32 %v788, %v788
  %v853 = vmul.f32 %v789, %v789
  %v854 = vmul.f32 %v790, %v790
  %v855 = vmul.f32 %v791, %v791
  %v856 = vmul.f32 %v792, %v792
  %v857 = vmul.f32 %v793, %v793
  %v858 = vmul.f32 %v794, %v794
  %v859 = vmul.f32 %v795, %v795
  %v860 = vmul.f32 %v796, %v796
  %v861 = vmul.f32 %v797, %v797
  %v862 = vmul.f32 %v798, %v798
  %v863 = vmul.f32 %v799, %v799
  %v864 = vmul.f32 %v800, %v800
  %v865 = vmul.f32 %v801, %v801
  %v866 = vmul.f32 %v802, %v802
  %v867 = vmul.f32 %v803, %v803
  %v868 = vmul.f32 %v804, %v804
  %v869 = vmul.f32 %v805, %v805
  %v870 = vmul.f32 %v806, %v806
  %v871 = vmul.f32 %v807, %v807
  %v872 = vmul.f32 %v808, %v808
  %v873 = vmul.f32 %v809, %v809
  %v874 = vmul.f32 %v810, %v810
  %v875 = vmul.f32 %v811, %v811
  %v876 = vmul.f32 %v812, %v812
  %v877 = vmul.f32 %v813, %v813
  %v878 = vmul.f32 %v814, %v814
  %v879 = vmul.f32 %v815, %v815
  %v880 = vmul.f32 %v816, %v816
  %v881 = vmul.f32 %v817, %v817
  %v882 = vmul.f32 %v818, %v818
  %v883 = vmul.f32 %v819, %v819
  %v884 = vmul.f32 %v820, %v820
  %v885 = vmul.f32 %v821, %v821
  %v886 = vmul.f32 %v822, %v822
  %v887 = vmul.f32 %v823, %v823
  %v888 = vmul.f32 %v824, %v824
  %v889 = vmul.f32 %v825, %v825
  %v890 = vmul.f32 %v826, %v826
  %v891 = vmul.f32 %v827, %v827
  %v892 = vmul.f32 %v828, %v828
  %v893 = vmul.f32 %v829, %v829
  %v894 = vmul.f32 %v830, %v830
  %v895 = vmul.f32 %v831, %v831
  %v896 = vmul.f32 %v832, %v832
  %v897 = vmul.f32 %v833, %v833
  %v898 = vmul.f32 %v834, %v834
  %v899 = vmul.f32 %v835, %v835
  %v900 = vmul.f32 %v836, %v836
  %v901 = vmul.f32 %v837, %v837
  %v902 = vmul.f32 %v838, %v838
  %v903 = vmul.f32 %v839, %v839
  %v904 = vmul.f32 %v840, %v840
  %v905 = vmul.f32 %v841, %v841
  %v906 = vmul.f32 %v842, %v842
  %v907 = vsel %vm644, %v843, 0.0
  %v908 = vsel %vm644, %v844, 0.0
  %v909 = vadd.f32 %v907, %v908
  %v910 = vsel %vm644, %v845, 0.0
  %v911 = vadd.f32 %v909, %v910
  %v912 = vsel %vm644, %v846, 0.0
  %v913 = vadd.f32 %v911, %v912
  %v914 = vsel %vm644, %v847, 0.0
  %v915 = vadd.f32 %v913, %v914
  %v916 = vsel %vm644, %v848, 0.0
  %v917 = vadd.f32 %v915, %v916
  %v918 = vsel %vm644, %v849, 0.0
  %v919 = vadd.f32 %v917, %v918
  %v920 = vsel %vm644, %v850, 0.0
  %v921 = vadd.f32 %v919, %v920
  %v922 = vsel %vm644, %v851, 0.0
  %v923 = vadd.f32 %v921, %v922
  %v924 = vsel %vm644, %v852, 0.0
  %v925 = vadd.f32 %v923, %v924
  %v926 = vsel %vm644, %v853, 0.0
  %v927 = vadd.f32 %v925, %v926
  %v928 = vsel %vm644, %v854, 0.0
  %v929 = vadd.f32 %v927, %v928
  %v930 = vsel %vm644, %v855, 0.0
  %v931 = vadd.f32 %v929, %v930
  %v932 = vsel %vm644, %v856, 0.0
  %v933 = vadd.f32 %v931, %v932
  %v934 = vsel %vm644, %v857, 0.0
  %v935 = vadd.f32 %v933, %v934
  %v936 = vsel %vm644, %v858, 0.0
  %v937 = vadd.f32 %v935, %v936
  %v938 = vsel %vm644, %v859, 0.0
  %v939 = vadd.f32 %v937, %v938
  %v940 = vsel %vm644, %v860, 0.0
  %v941 = vadd.f32 %v939, %v940
  %v942 = vsel %vm644, %v861, 0.0
  %v943 = vadd.f32 %v941, %v942
  %v944 = vsel %vm644, %v862, 0.0
  %v945 = vadd.f32 %v943, %v944
  %v946 = vsel %vm644, %v863, 0.0
  %v947 = vadd.f32 %v945, %v946
  %v948 = vsel %vm644, %v864, 0.0
  %v949 = vadd.f32 %v947, %v948
  %v950 = vsel %vm644, %v865, 0.0
  %v951 = vadd.f32 %v949, %v950
  %v952 = vsel %vm644, %v866, 0.0
  %v953 = vadd.f32 %v951, %v952
  %v954 = vsel %vm644, %v867, 0.0
  %v955 = vadd.f32 %v953, %v954
  %v956 = vsel %vm644, %v868, 0.0
  %v957 = vadd.f32 %v955, %v956
  %v958 = vsel %vm644, %v869, 0.0
  %v959 = vadd.f32 %v957, %v958
  %v960 = vsel %vm644, %v870, 0.0
  %v961 = vadd.f32 %v959, %v960
  %v962 = vsel %vm644, %v871, 0.0
  %v963 = vadd.f32 %v961, %v962
  %v964 = vsel %vm644, %v872, 0.0
  %v965 = vadd.f32 %v963, %v964
  %v966 = vsel %vm644, %v873, 0.0
  %v967 = vadd.f32 %v965, %v966
  %v968 = vsel %vm644, %v874, 0.0
  %v969 = vadd.f32 %v967, %v968
  %v970 = vsel %vm644, %v875, 0.0
  %v971 = vadd.f32 %v969, %v970
  %v972 = vsel %vm644, %v876, 0.0
  %v973 = vadd.f32 %v971, %v972
  %v974 = vsel %vm644, %v877, 0.0
  %v975 = vadd.f32 %v973, %v974
  %v976 = vsel %vm644, %v878, 0.0
  %v977 = vadd.f32 %v975, %v976
  %v978 = vsel %vm644, %v879, 0.0
  %v979 = vadd.f32 %v977, %v978
  %v980 = vsel %vm644, %v880, 0.0
  %v981 = vadd.f32 %v979, %v980
  %v982 = vsel %vm644, %v881, 0.0
  %v983 = vadd.f32 %v981, %v982
  %v984 = vsel %vm644, %v882, 0.0
  %v985 = vadd.f32 %v983, %v984
  %v986 = vsel %vm644, %v883, 0.0
  %v987 = vadd.f32 %v985, %v986
  %v988 = vsel %vm644, %v884, 0.0
  %v989 = vadd.f32 %v987, %v988
  %v990 = vsel %vm644, %v885, 0.0
  %v991 = vadd.f32 %v989, %v990
  %v992 = vsel %vm644, %v886, 0.0
  %v993 = vadd.f32 %v991, %v992
  %v994 = vsel %vm644, %v887, 0.0
  %v995 = vadd.f32 %v993, %v994
  %v996 = vsel %vm644, %v888, 0.0
  %v997 = vadd.f32 %v995, %v996
  %v998 = vsel %vm644, %v889, 0.0
  %v999 = vadd.f32 %v997, %v998
  %v1000 = vsel %vm644, %v890, 0.0
  %v1001 = vadd.f32 %v999, %v1000
  %v1002 = vsel %vm644, %v891, 0.0
  %v1003 = vadd.f32 %v1001, %v1002
  %v1004 = vsel %vm644, %v892, 0.0
  %v1005 = vadd.f32 %v1003, %v1004
  %v1006 = vsel %vm644, %v893, 0.0
  %v1007 = vadd.f32 %v1005, %v1006
  %v1008 = vsel %vm644, %v894, 0.0
  %v1009 = vadd.f32 %v1007, %v1008
  %v1010 = vsel %vm644, %v895, 0.0
  %v1011 = vadd.f32 %v1009, %v1010
  %v1012 = vsel %vm644, %v896, 0.0
  %v1013 = vadd.f32 %v1011, %v1012
  %v1014 = vsel %vm644, %v897, 0.0
  %v1015 = vadd.f32 %v1013, %v1014
  %v1016 = vsel %vm644, %v898, 0.0
  %v1017 = vadd.f32 %v1015, %v1016
  %v1018 = vsel %vm644, %v899, 0.0
  %v1019 = vadd.f32 %v1017, %v1018
  %v1020 = vsel %vm644, %v900, 0.0
  %v1021 = vadd.f32 %v1019, %v1020
  %v1022 = vsel %vm644, %v901, 0.0
  %v1023 = vadd.f32 %v1021, %v1022
  %v1024 = vsel %vm644, %v902, 0.0
  %v1025 = vadd.f32 %v1023, %v1024
  %v1026 = vsel %vm644, %v903, 0.0
  %v1027 = vadd.f32 %v1025, %v1026
  %v1028 = vsel %vm644, %v904, 0.0
  %v1029 = vadd.f32 %v1027, %v1028
  %v1030 = vsel %vm644, %v905, 0.0
  %v1031 = vadd.f32 %v1029, %v1030
  %v1032 = vsel %vm644, %v906, 0.0
  %v1033 = vadd.f32 %v1031, %v1032
  %v1034 = vrot.slane %v1033, 4
  %v1035 = vadd.f32 %v1033, %v1034
  %v1036 = vrot.slane %v1035, 2
  %v1037 = vadd.f32 %v1035, %v1036
  %v1038 = vrot.slane %v1037, 1
  %v1039 = vadd.f32 %v1037, %v1038
  %v1040 = vmul.f32 %v1039, 0.001953125
  %v1041 = vadd.f32 %v1040, 1e-05
  %v1042 = vrsqrt.pop %v1041
  %v1043 = vmul.f32 %v642, %v1042
  %v1045 = vlaneseq
  %v1046 = vshrl.u32 %v1045, 7
  %v1047 = vsub.s32 0, %v1046
  %v1048 = vrot.slane %v1043, %v1047
  %v1050 = vmul.f32 %v779, %v1048
  %v1051 = vmul.f32 %v780, %v1048
  %v1052 = vmul.f32 %v781, %v1048
  %v1053 = vmul.f32 %v782, %v1048
  %v1054 = vmul.f32 %v783, %v1048
  %v1055 = vmul.f32 %v784, %v1048
  %v1056 = vmul.f32 %v785, %v1048
  %v1057 = vmul.f32 %v786, %v1048
  %v1058 = vmul.f32 %v787, %v1048
  %v1059 = vmul.f32 %v788, %v1048
  %v1060 = vmul.f32 %v789, %v1048
  %v1061 = vmul.f32 %v790, %v1048
  %v1062 = vmul.f32 %v791, %v1048
  %v1063 = vmul.f32 %v792, %v1048
  %v1064 = vmul.f32 %v793, %v1048
  %v1065 = vmul.f32 %v794, %v1048
  %v1066 = vmul.f32 %v795, %v1048
  %v1067 = vmul.f32 %v796, %v1048
  %v1068 = vmul.f32 %v797, %v1048
  %v1069 = vmul.f32 %v798, %v1048
  %v1070 = vmul.f32 %v799, %v1048
  %v1071 = vmul.f32 %v800, %v1048
  %v1072 = vmul.f32 %v801, %v1048
  %v1073 = vmul.f32 %v802, %v1048
  %v1074 = vmul.f32 %v803, %v1048
  %v1075 = vmul.f32 %v804, %v1048
  %v1076 = vmul.f32 %v805, %v1048
  %v1077 = vmul.f32 %v806, %v1048
  %v1078 = vmul.f32 %v807, %v1048
  %v1079 = vmul.f32 %v808, %v1048
  %v1080 = vmul.f32 %v809, %v1048
  %v1081 = vmul.f32 %v810, %v1048
  %v1082 = vmul.f32 %v811, %v1048
  %v1083 = vmul.f32 %v812, %v1048
  %v1084 = vmul.f32 %v813, %v1048
  %v1085 = vmul.f32 %v814, %v1048
  %v1086 = vmul.f32 %v815, %v1048
  %v1087 = vmul.f32 %v816, %v1048
  %v1088 = vmul.f32 %v817, %v1048
  %v1089 = vmul.f32 %v818, %v1048
  %v1090 = vmul.f32 %v819, %v1048
  %v1091 = vmul.f32 %v820, %v1048
  %v1092 = vmul.f32 %v821, %v1048
  %v1093 = vmul.f32 %v822, %v1048
  %v1094 = vmul.f32 %v823, %v1048
  %v1095 = vmul.f32 %v824, %v1048
  %v1096 = vmul.f32 %v825, %v1048
  %v1097 = vmul.f32 %v826, %v1048
  %v1098 = vmul.f32 %v827, %v1048
  %v1099 = vmul.f32 %v828, %v1048
  %v1100 = vmul.f32 %v829, %v1048
  %v1101 = vmul.f32 %v830, %v1048
  %v1102 = vmul.f32 %v831, %v1048
  %v1103 = vmul.f32 %v832, %v1048
  %v1104 = vmul.f32 %v833, %v1048
  %v1105 = vmul.f32 %v834, %v1048
  %v1106 = vmul.f32 %v835, %v1048
  %v1107 = vmul.f32 %v836, %v1048
  %v1108 = vmul.f32 %v837, %v1048
  %v1109 = vmul.f32 %v838, %v1048
  %v1110 = vmul.f32 %v839, %v1048
  %v1111 = vmul.f32 %v840, %v1048
  %v1112 = vmul.f32 %v841, %v1048
  %v1113 = vmul.f32 %v842, %v1048
  %v1115 = vlaneseq
  %v1116 = vshrl.u32 %v1115, 7
  %v1117 = vsub.s32 0, %v1116
  %v1118 = vrot.slane %v643, %v1117
  %v1120 = vadd.f32 %v1050, %v1118
  %v1121 = vadd.f32 %v1051, %v1118
  %v1122 = vadd.f32 %v1052, %v1118
  %v1123 = vadd.f32 %v1053, %v1118
  %v1124 = vadd.f32 %v1054, %v1118
  %v1125 = vadd.f32 %v1055, %v1118
  %v1126 = vadd.f32 %v1056, %v1118
  %v1127 = vadd.f32 %v1057, %v1118
  %v1128 = vadd.f32 %v1058, %v1118
  %v1129 = vadd.f32 %v1059, %v1118
  %v1130 = vadd.f32 %v1060, %v1118
  %v1131 = vadd.f32 %v1061, %v1118
  %v1132 = vadd.f32 %v1062, %v1118
  %v1133 = vadd.f32 %v1063, %v1118
  %v1134 = vadd.f32 %v1064, %v1118
  %v1135 = vadd.f32 %v1065, %v1118
  %v1136 = vadd.f32 %v1066, %v1118
  %v1137 = vadd.f32 %v1067, %v1118
  %v1138 = vadd.f32 %v1068, %v1118
  %v1139 = vadd.f32 %v1069, %v1118
  %v1140 = vadd.f32 %v1070, %v1118
  %v1141 = vadd.f32 %v1071, %v1118
  %v1142 = vadd.f32 %v1072, %v1118
  %v1143 = vadd.f32 %v1073, %v1118
  %v1144 = vadd.f32 %v1074, %v1118
  %v1145 = vadd.f32 %v1075, %v1118
  %v1146 = vadd.f32 %v1076, %v1118
  %v1147 = vadd.f32 %v1077, %v1118
  %v1148 = vadd.f32 %v1078, %v1118
  %v1149 = vadd.f32 %v1079, %v1118
  %v1150 = vadd.f32 %v1080, %v1118
  %v1151 = vadd.f32 %v1081, %v1118
  %v1152 = vadd.f32 %v1082, %v1118
  %v1153 = vadd.f32 %v1083, %v1118
  %v1154 = vadd.f32 %v1084, %v1118
  %v1155 = vadd.f32 %v1085, %v1118
  %v1156 = vadd.f32 %v1086, %v1118
  %v1157 = vadd.f32 %v1087, %v1118
  %v1158 = vadd.f32 %v1088, %v1118
  %v1159 = vadd.f32 %v1089, %v1118
  %v1160 = vadd.f32 %v1090, %v1118
  %v1161 = vadd.f32 %v1091, %v1118
  %v1162 = vadd.f32 %v1092, %v1118
  %v1163 = vadd.f32 %v1093, %v1118
  %v1164 = vadd.f32 %v1094, %v1118
  %v1165 = vadd.f32 %v1095, %v1118
  %v1166 = vadd.f32 %v1096, %v1118
  %v1167 = vadd.f32 %v1097, %v1118
  %v1168 = vadd.f32 %v1098, %v1118
  %v1169 = vadd.f32 %v1099, %v1118
  %v1170 = vadd.f32 %v1100, %v1118
  %v1171 = vadd.f32 %v1101, %v1118
  %v1172 = vadd.f32 %v1102, %v1118
  %v1173 = vadd.f32 %v1103, %v1118
  %v1174 = vadd.f32 %v1104, %v1118
  %v1175 = vadd.f32 %v1105, %v1118
  %v1176 = vadd.f32 %v1106, %v1118
  %v1177 = vadd.f32 %v1107, %v1118
  %v1178 = vadd.f32 %v1108, %v1118
  %v1179 = vadd.f32 %v1109, %v1118
  %v1180 = vadd.f32 %v1110, %v1118
  %v1181 = vadd.f32 %v1111, %v1118
  %v1182 = vadd.f32 %v1112, %v1118
  %v1183 = vadd.f32 %v1113, %v1118
  %vm1184 = vcmp.gt.f32.partialorder %v1120, 0.0
  %vm1185 = vcmp.gt.f32.partialorder %v1121, 0.0
  %vm1186 = vcmp.gt.f32.partialorder %v1122, 0.0
  %vm1187 = vcmp.gt.f32.partialorder %v1123, 0.0
  %vm1188 = vcmp.gt.f32.partialorder %v1124, 0.0
  %vm1189 = vcmp.gt.f32.partialorder %v1125, 0.0
  %vm1190 = vcmp.gt.f32.partialorder %v1126, 0.0
  %vm1191 = vcmp.gt.f32.partialorder %v1127, 0.0
  %vm1192 = vcmp.gt.f32.partialorder %v1128, 0.0
  %vm1193 = vcmp.gt.f32.partialorder %v1129, 0.0
  %vm1194 = vcmp.gt.f32.partialorder %v1130, 0.0
  %vm1195 = vcmp.gt.f32.partialorder %v1131, 0.0
  %vm1196 = vcmp.gt.f32.partialorder %v1132, 0.0
  %vm1197 = vcmp.gt.f32.partialorder %v1133, 0.0
  %vm1198 = vcmp.gt.f32.partialorder %v1134, 0.0
  %vm1199 = vcmp.gt.f32.partialorder %v1135, 0.0
  %vm1200 = vcmp.gt.f32.partialorder %v1136, 0.0
  %vm1201 = vcmp.gt.f32.partialorder %v1137, 0.0
  %vm1202 = vcmp.gt.f32.partialorder %v1138, 0.0
  %vm1203 = vcmp.gt.f32.partialorder %v1139, 0.0
  %vm1204 = vcmp.gt.f32.partialorder %v1140, 0.0
  %vm1205 = vcmp.gt.f32.partialorder %v1141, 0.0
  %vm1206 = vcmp.gt.f32.partialorder %v1142, 0.0
  %vm1207 = vcmp.gt.f32.partialorder %v1143, 0.0
  %vm1208 = vcmp.gt.f32.partialorder %v1144, 0.0
  %vm1209 = vcmp.gt.f32.partialorder %v1145, 0.0
  %vm1210 = vcmp.gt.f32.partialorder %v1146, 0.0
  %vm1211 = vcmp.gt.f32.partialorder %v1147, 0.0
  %vm1212 = vcmp.gt.f32.partialorder %v1148, 0.0
  %vm1213 = vcmp.gt.f32.partialorder %v1149, 0.0
  %vm1214 = vcmp.gt.f32.partialorder %v1150, 0.0
  %vm1215 = vcmp.gt.f32.partialorder %v1151, 0.0
  %vm1216 = vcmp.gt.f32.partialorder %v1152, 0.0
  %vm1217 = vcmp.gt.f32.partialorder %v1153, 0.0
  %vm1218 = vcmp.gt.f32.partialorder %v1154, 0.0
  %vm1219 = vcmp.gt.f32.partialorder %v1155, 0.0
  %vm1220 = vcmp.gt.f32.partialorder %v1156, 0.0
  %vm1221 = vcmp.gt.f32.partialorder %v1157, 0.0
  %vm1222 = vcmp.gt.f32.partialorder %v1158, 0.0
  %vm1223 = vcmp.gt.f32.partialorder %v1159, 0.0
  %vm1224 = vcmp.gt.f32.partialorder %v1160, 0.0
  %vm1225 = vcmp.gt.f32.partialorder %v1161, 0.0
  %vm1226 = vcmp.gt.f32.partialorder %v1162, 0.0
  %vm1227 = vcmp.gt.f32.partialorder %v1163, 0.0
  %vm1228 = vcmp.gt.f32.partialorder %v1164, 0.0
  %vm1229 = vcmp.gt.f32.partialorder %v1165, 0.0
  %vm1230 = vcmp.gt.f32.partialorder %v1166, 0.0
  %vm1231 = vcmp.gt.f32.partialorder %v1167, 0.0
  %vm1232 = vcmp.gt.f32.partialorder %v1168, 0.0
  %vm1233 = vcmp.gt.f32.partialorder %v1169, 0.0
  %vm1234 = vcmp.gt.f32.partialorder %v1170, 0.0
  %vm1235 = vcmp.gt.f32.partialorder %v1171, 0.0
  %vm1236 = vcmp.gt.f32.partialorder %v1172, 0.0
  %vm1237 = vcmp.gt.f32.partialorder %v1173, 0.0
  %vm1238 = vcmp.gt.f32.partialorder %v1174, 0.0
  %vm1239 = vcmp.gt.f32.partialorder %v1175, 0.0
  %vm1240 = vcmp.gt.f32.partialorder %v1176, 0.0
  %vm1241 = vcmp.gt.f32.partialorder %v1177, 0.0
  %vm1242 = vcmp.gt.f32.partialorder %v1178, 0.0
  %vm1243 = vcmp.gt.f32.partialorder %v1179, 0.0
  %vm1244 = vcmp.gt.f32.partialorder %v1180, 0.0
  %vm1245 = vcmp.gt.f32.partialorder %v1181, 0.0
  %vm1246 = vcmp.gt.f32.partialorder %v1182, 0.0
  %vm1247 = vcmp.gt.f32.partialorder %v1183, 0.0
  %v1248 = vmul.f32 %v1120, 0.01
  %v1249 = vmul.f32 %v1121, 0.01
  %v1250 = vmul.f32 %v1122, 0.01
  %v1251 = vmul.f32 %v1123, 0.01
  %v1252 = vmul.f32 %v1124, 0.01
  %v1253 = vmul.f32 %v1125, 0.01
  %v1254 = vmul.f32 %v1126, 0.01
  %v1255 = vmul.f32 %v1127, 0.01
  %v1256 = vmul.f32 %v1128, 0.01
  %v1257 = vmul.f32 %v1129, 0.01
  %v1258 = vmul.f32 %v1130, 0.01
  %v1259 = vmul.f32 %v1131, 0.01
  %v1260 = vmul.f32 %v1132, 0.01
  %v1261 = vmul.f32 %v1133, 0.01
  %v1262 = vmul.f32 %v1134, 0.01
  %v1263 = vmul.f32 %v1135, 0.01
  %v1264 = vmul.f32 %v1136, 0.01
  %v1265 = vmul.f32 %v1137, 0.01
  %v1266 = vmul.f32 %v1138, 0.01
  %v1267 = vmul.f32 %v1139, 0.01
  %v1268 = vmul.f32 %v1140, 0.01
  %v1269 = vmul.f32 %v1141, 0.01
  %v1270 = vmul.f32 %v1142, 0.01
  %v1271 = vmul.f32 %v1143, 0.01
  %v1272 = vmul.f32 %v1144, 0.01
  %v1273 = vmul.f32 %v1145, 0.01
  %v1274 = vmul.f32 %v1146, 0.01
  %v1275 = vmul.f32 %v1147, 0.01
  %v1276 = vmul.f32 %v1148, 0.01
  %v1277 = vmul.f32 %v1149, 0.01
  %v1278 = vmul.f32 %v1150, 0.01
  %v1279 = vmul.f32 %v1151, 0.01
  %v1280 = vmul.f32 %v1152, 0.01
  %v1281 = vmul.f32 %v1153, 0.01
  %v1282 = vmul.f32 %v1154, 0.01
  %v1283 = vmul.f32 %v1155, 0.01
  %v1284 = vmul.f32 %v1156, 0.01
  %v1285 = vmul.f32 %v1157, 0.01
  %v1286 = vmul.f32 %v1158, 0.01
  %v1287 = vmul.f32 %v1159, 0.01
  %v1288 = vmul.f32 %v1160, 0.01
  %v1289 = vmul.f32 %v1161, 0.01
  %v1290 = vmul.f32 %v1162, 0.01
  %v1291 = vmul.f32 %v1163, 0.01
  %v1292 = vmul.f32 %v1164, 0.01
  %v1293 = vmul.f32 %v1165, 0.01
  %v1294 = vmul.f32 %v1166, 0.01
  %v1295 = vmul.f32 %v1167, 0.01
  %v1296 = vmul.f32 %v1168, 0.01
  %v1297 = vmul.f32 %v1169, 0.01
  %v1298 = vmul.f32 %v1170, 0.01
  %v1299 = vmul.f32 %v1171, 0.01
  %v1300 = vmul.f32 %v1172, 0.01
  %v1301 = vmul.f32 %v1173, 0.01
  %v1302 = vmul.f32 %v1174, 0.01
  %v1303 = vmul.f32 %v1175, 0.01
  %v1304 = vmul.f32 %v1176, 0.01
  %v1305 = vmul.f32 %v1177, 0.01
  %v1306 = vmul.f32 %v1178, 0.01
  %v1307 = vmul.f32 %v1179, 0.01
  %v1308 = vmul.f32 %v1180, 0.01
  %v1309 = vmul.f32 %v1181, 0.01
  %v1310 = vmul.f32 %v1182, 0.01
  %v1311 = vmul.f32 %v1183, 0.01
  %v1312 = vsel %vm1184, %v1120, %v1248
  %v1313 = vsel %vm1185, %v1121, %v1249
  %v1314 = vsel %vm1186, %v1122, %v1250
  %v1315 = vsel %vm1187, %v1123, %v1251
  %v1316 = vsel %vm1188, %v1124, %v1252
  %v1317 = vsel %vm1189, %v1125, %v1253
  %v1318 = vsel %vm1190, %v1126, %v1254
  %v1319 = vsel %vm1191, %v1127, %v1255
  %v1320 = vsel %vm1192, %v1128, %v1256
  %v1321 = vsel %vm1193, %v1129, %v1257
  %v1322 = vsel %vm1194, %v1130, %v1258
  %v1323 = vsel %vm1195, %v1131, %v1259
  %v1324 = vsel %vm1196, %v1132, %v1260
  %v1325 = vsel %vm1197, %v1133, %v1261
  %v1326 = vsel %vm1198, %v1134, %v1262
  %v1327 = vsel %vm1199, %v1135, %v1263
  %v1328 = vsel %vm1200, %v1136, %v1264
  %v1329 = vsel %vm1201, %v1137, %v1265
  %v1330 = vsel %vm1202, %v1138, %v1266
  %v1331 = vsel %vm1203, %v1139, %v1267
  %v1332 = vsel %vm1204, %v1140, %v1268
  %v1333 = vsel %vm1205, %v1141, %v1269
  %v1334 = vsel %vm1206, %v1142, %v1270
  %v1335 = vsel %vm1207, %v1143, %v1271
  %v1336 = vsel %vm1208, %v1144, %v1272
  %v1337 = vsel %vm1209, %v1145, %v1273
  %v1338 = vsel %vm1210, %v1146, %v1274
  %v1339 = vsel %vm1211, %v1147, %v1275
  %v1340 = vsel %vm1212, %v1148, %v1276
  %v1341 = vsel %vm1213, %v1149, %v1277
  %v1342 = vsel %vm1214, %v1150, %v1278
  %v1343 = vsel %vm1215, %v1151, %v1279
  %v1344 = vsel %vm1216, %v1152, %v1280
  %v1345 = vsel %vm1217, %v1153, %v1281
  %v1346 = vsel %vm1218, %v1154, %v1282
  %v1347 = vsel %vm1219, %v1155, %v1283
  %v1348 = vsel %vm1220, %v1156, %v1284
  %v1349 = vsel %vm1221, %v1157, %v1285
  %v1350 = vsel %vm1222, %v1158, %v1286
  %v1351 = vsel %vm1223, %v1159, %v1287
  %v1352 = vsel %vm1224, %v1160, %v1288
  %v1353 = vsel %vm1225, %v1161, %v1289
  %v1354 = vsel %vm1226, %v1162, %v1290
  %v1355 = vsel %vm1227, %v1163, %v1291
  %v1356 = vsel %vm1228, %v1164, %v1292
  %v1357 = vsel %vm1229, %v1165, %v1293
  %v1358 = vsel %vm1230, %v1166, %v1294
  %v1359 = vsel %vm1231, %v1167, %v1295
  %v1360 = vsel %vm1232, %v1168, %v1296
  %v1361 = vsel %vm1233, %v1169, %v1297
  %v1362 = vsel %vm1234, %v1170, %v1298
  %v1363 = vsel %vm1235, %v1171, %v1299
  %v1364 = vsel %vm1236, %v1172, %v1300
  %v1365 = vsel %vm1237, %v1173, %v1301
  %v1366 = vsel %vm1238, %v1174, %v1302
  %v1367 = vsel %vm1239, %v1175, %v1303
  %v1368 = vsel %vm1240, %v1176, %v1304
  %v1369 = vsel %vm1241, %v1177, %v1305
  %v1370 = vsel %vm1242, %v1178, %v1306
  %v1371 = vsel %vm1243, %v1179, %v1307
  %v1372 = vsel %vm1244, %v1180, %v1308
  %v1373 = vsel %vm1245, %v1181, %v1309
  %v1374 = vsel %vm1246, %v1182, %v1310
  %v1375 = vsel %vm1247, %v1183, %v1311
  %1376 = vst.msk [vmem:[%s4] sm:$0xff] %vm644, %v1312
  %1377 = vst.msk [vmem:[%s4 + $0x8] sm:$0xff] %vm644, %v1313
  %1378 = vst.msk [vmem:[%s4 + $0x10] sm:$0xff] %vm644, %v1314
  %1379 = vst.msk [vmem:[%s4 + $0x18] sm:$0xff] %vm644, %v1315
  %1380 = vst.msk [vmem:[%s4 + $0x20] sm:$0xff] %vm644, %v1316
  %1381 = vst.msk [vmem:[%s4 + $0x28] sm:$0xff] %vm644, %v1317
  %1382 = vst.msk [vmem:[%s4 + $0x30] sm:$0xff] %vm644, %v1318
  %1383 = vst.msk [vmem:[%s4 + $0x38] sm:$0xff] %vm644, %v1319
  %1384 = vst.msk [vmem:[%s4 + $0x40] sm:$0xff] %vm644, %v1320
  %1385 = vst.msk [vmem:[%s4 + $0x48] sm:$0xff] %vm644, %v1321
  %1386 = vst.msk [vmem:[%s4 + $0x50] sm:$0xff] %vm644, %v1322
  %1387 = vst.msk [vmem:[%s4 + $0x58] sm:$0xff] %vm644, %v1323
  %1388 = vst.msk [vmem:[%s4 + $0x60] sm:$0xff] %vm644, %v1324
  %1389 = vst.msk [vmem:[%s4 + $0x68] sm:$0xff] %vm644, %v1325
  %1390 = vst.msk [vmem:[%s4 + $0x70] sm:$0xff] %vm644, %v1326
  %1391 = vst.msk [vmem:[%s4 + $0x78] sm:$0xff] %vm644, %v1327
  %1392 = vst.msk [vmem:[%s4 + $0x80] sm:$0xff] %vm644, %v1328
  %1393 = vst.msk [vmem:[%s4 + $0x88] sm:$0xff] %vm644, %v1329
  %1394 = vst.msk [vmem:[%s4 + $0x90] sm:$0xff] %vm644, %v1330
  %1395 = vst.msk [vmem:[%s4 + $0x98] sm:$0xff] %vm644, %v1331
  %1396 = vst.msk [vmem:[%s4 + $0xa0] sm:$0xff] %vm644, %v1332
  %1397 = vst.msk [vmem:[%s4 + $0xa8] sm:$0xff] %vm644, %v1333
  %1398 = vst.msk [vmem:[%s4 + $0xb0] sm:$0xff] %vm644, %v1334
  %1399 = vst.msk [vmem:[%s4 + $0xb8] sm:$0xff] %vm644, %v1335
  %1400 = vst.msk [vmem:[%s4 + $0xc0] sm:$0xff] %vm644, %v1336
  %1401 = vst.msk [vmem:[%s4 + $0xc8] sm:$0xff] %vm644, %v1337
  %1402 = vst.msk [vmem:[%s4 + $0xd0] sm:$0xff] %vm644, %v1338
  %1403 = vst.msk [vmem:[%s4 + $0xd8] sm:$0xff] %vm644, %v1339
  %1404 = vst.msk [vmem:[%s4 + $0xe0] sm:$0xff] %vm644, %v1340
  %1405 = vst.msk [vmem:[%s4 + $0xe8] sm:$0xff] %vm644, %v1341
  %1406 = vst.msk [vmem:[%s4 + $0xf0] sm:$0xff] %vm644, %v1342
  %1407 = vst.msk [vmem:[%s4 + $0xf8] sm:$0xff] %vm644, %v1343
  %1408 = vst.msk [vmem:[%s4 + $0x100] sm:$0xff] %vm644, %v1344
  %1409 = vst.msk [vmem:[%s4 + $0x108] sm:$0xff] %vm644, %v1345
  %1410 = vst.msk [vmem:[%s4 + $0x110] sm:$0xff] %vm644, %v1346
  %1411 = vst.msk [vmem:[%s4 + $0x118] sm:$0xff] %vm644, %v1347
  %1412 = vst.msk [vmem:[%s4 + $0x120] sm:$0xff] %vm644, %v1348
  %1413 = vst.msk [vmem:[%s4 + $0x128] sm:$0xff] %vm644, %v1349
  %1414 = vst.msk [vmem:[%s4 + $0x130] sm:$0xff] %vm644, %v1350
  %1415 = vst.msk [vmem:[%s4 + $0x138] sm:$0xff] %vm644, %v1351
  %1416 = vst.msk [vmem:[%s4 + $0x140] sm:$0xff] %vm644, %v1352
  %1417 = vst.msk [vmem:[%s4 + $0x148] sm:$0xff] %vm644, %v1353
  %1418 = vst.msk [vmem:[%s4 + $0x150] sm:$0xff] %vm644, %v1354
  %1419 = vst.msk [vmem:[%s4 + $0x158] sm:$0xff] %vm644, %v1355
  %1420 = vst.msk [vmem:[%s4 + $0x160] sm:$0xff] %vm644, %v1356
  %1421 = vst.msk [vmem:[%s4 + $0x168] sm:$0xff] %vm644, %v1357
  %1422 = vst.msk [vmem:[%s4 + $0x170] sm:$0xff] %vm644, %v1358
  %1423 = vst.msk [vmem:[%s4 + $0x178] sm:$0xff] %vm644, %v1359
  %1424 = vst.msk [vmem:[%s4 + $0x180] sm:$0xff] %vm644, %v1360
  %1425 = vst.msk [vmem:[%s4 + $0x188] sm:$0xff] %vm644, %v1361
  %1426 = vst.msk [vmem:[%s4 + $0x190] sm:$0xff] %vm644, %v1362
  %1427 = vst.msk [vmem:[%s4 + $0x198] sm:$0xff] %vm644, %v1363
  %1428 = vst.msk [vmem:[%s4 + $0x1a0] sm:$0xff] %vm644, %v1364
  %1429 = vst.msk [vmem:[%s4 + $0x1a8] sm:$0xff] %vm644, %v1365
  %1430 = vst.msk [vmem:[%s4 + $0x1b0] sm:$0xff] %vm644, %v1366
  %1431 = vst.msk [vmem:[%s4 + $0x1b8] sm:$0xff] %vm644, %v1367
  %1432 = vst.msk [vmem:[%s4 + $0x1c0] sm:$0xff] %vm644, %v1368
  %1433 = vst.msk [vmem:[%s4 + $0x1c8] sm:$0xff] %vm644, %v1369
  %1434 = vst.msk [vmem:[%s4 + $0x1d0] sm:$0xff] %vm644, %v1370
  %1435 = vst.msk [vmem:[%s4 + $0x1d8] sm:$0xff] %vm644, %v1371
  %1436 = vst.msk [vmem:[%s4 + $0x1e0] sm:$0xff] %vm644, %v1372
  %1437 = vst.msk [vmem:[%s4 + $0x1e8] sm:$0xff] %vm644, %v1373
  %1438 = vst.msk [vmem:[%s4 + $0x1f0] sm:$0xff] %vm644, %v1374
  %1439 = vst.msk [vmem:[%s4 + $0x1f8] sm:$0xff] %vm644, %v1375
  // Predicated region
  $region18: #{encoder_forward.13} parent=0 // pred_check
    _
  $region19: #{encoder_forward.13} parent=0 // pred_check_branch
    %1441 = sbr.rel (0) target = $region21
  $region20: #{encoder_forward.13} parent=0 // pred_region
    _
  $region21: #{encoder_forward.13} parent=0 // pred_fallthru
    _
  // Predicated region
  $region22: #{encoder_forward.13} parent=0 // pred_check
    _
  $region23: #{encoder_forward.13} parent=0 // pred_check_branch
    %1443 = sbr.rel (0) target = $region25
  $region24: #{encoder_forward.13} parent=0 // pred_region
    _
  $region25: #{encoder_forward.13} parent=0 // pred_fallthru
    _

// kernel: encoder_forward.18
$region0: #{encoder_forward.18}
  #allocation0 [shape = 'u32[]', space=smem, size = 0x4, offset = 0x4, fixed_abs, tag = 'smem constant byte address 0x4 - core index']
  #allocation1 [shape = 'u32[144,128]{1,0:T(1,128)}', space=vmem, size = 0x12000, scoped, tag = 'internal scratch']
  %s0 = inlined_call_operand.vmem [shape: f32[128,16], index: 0, kind: input, shape index: {}]
  %s1 = inlined_call_operand.vmem [shape: bf16[128,144], index: 1, kind: input, shape index: {}]
  %s2 = inlined_call_operand.vmem [shape: bf16[144,16], index: 2, kind: input, shape index: {}]
  %s3 = inlined_call_operand.vmem [shape: f32[1,16], index: 3, kind: input, shape index: {}]
  %s4 = inlined_call_operand.vmem [shape: f32[1,16], index: 4, kind: input, shape index: {}]
  %s5 = inlined_call_operand.vmem [shape: bf16[16,16], index: 5, kind: input, shape index: {}]
  %s6 = inlined_call_operand.vmem [shape: f32[1,16], index: 6, kind: input, shape index: {}]
  %s7 = inlined_call_operand.vmem [shape: f32[1,16], index: 7, kind: input, shape index: {}]
  %s8 = inlined_call_operand.vmem [shape: f32[128,16], index: 8, kind: output, shape index: {}]
  %s9 = sld [smem:[#allocation0]]
  $region42: #{encoder_forward.18} parent=0
    _
  %s11 = ssub.s32 1, %s9
  %s12 = scalar_select 0, %s11, %s9
  // Predicated region
  $region2: #{encoder_forward.18} parent=0 // pred_check
    _
  $region3: #{encoder_forward.18} parent=0 // pred_check_branch
    %14 = sbr.rel (0) target = $region5
  $region4: #{encoder_forward.18} parent=0 // pred_region
    _
  $region5: #{encoder_forward.18} parent=0 // pred_fallthru
    _
  // Predicated region
  $region6: #{encoder_forward.18} parent=0 // pred_check
    _
  $region7: #{encoder_forward.18} parent=0 // pred_check_branch
    %16 = sbr.rel (0) target = $region9
  $region8: #{encoder_forward.18} parent=0 // pred_region
    _
  $region9: #{encoder_forward.18} parent=0 // pred_fallthru
    _
  // Predicated region
  $region10: #{encoder_forward.18} parent=0 // pred_check
    _
  $region11: #{encoder_forward.18} parent=0 // pred_check_branch
    %18 = sbr.rel (0) target = $region13
  $region12: #{encoder_forward.18} parent=0 // pred_region
    _
  $region13: #{encoder_forward.18} parent=0 // pred_fallthru
    _
  // Predicated region
  $region14: #{encoder_forward.18} parent=0 // pred_check
    _
  $region15: #{encoder_forward.18} parent=0 // pred_check_branch
    %20 = sbr.rel (0) target = $region17
  $region16: #{encoder_forward.18} parent=0 // pred_region
    _
  $region17: #{encoder_forward.18} parent=0 // pred_fallthru
    _
  // Predicated region
  $region18: #{encoder_forward.18} parent=0 // pred_check
    _
  $region19: #{encoder_forward.18} parent=0 // pred_check_branch
    %22 = sbr.rel (0) target = $region21
  $region20: #{encoder_forward.18} parent=0 // pred_region
    _
  $region21: #{encoder_forward.18} parent=0 // pred_fallthru
    _
  // Predicated region
  $region22: #{encoder_forward.18} parent=0 // pred_check
    _
  $region23: #{encoder_forward.18} parent=0 // pred_check_branch
    %24 = sbr.rel (0) target = $region25
  $region24: #{encoder_forward.18} parent=0 // pred_region
    _
  $region25: #{encoder_forward.18} parent=0 // pred_fallthru
    _
  // Predicated region
  $region26: #{encoder_forward.18} parent=0 // pred_check
    _
  $region27: #{encoder_forward.18} parent=0 // pred_check_branch
    %26 = sbr.rel (0) target = $region29
  $region28: #{encoder_forward.18} parent=0 // pred_region
    _
  $region29: #{encoder_forward.18} parent=0 // pred_fallthru
    _
  // Predicated region
  $region30: #{encoder_forward.18} parent=0 // pred_check
    _
  $region31: #{encoder_forward.18} parent=0 // pred_check_branch
    %28 = sbr.rel (0) target = $region33
  $region32: #{encoder_forward.18} parent=0 // pred_region
    _
  $region33: #{encoder_forward.18} parent=0 // pred_fallthru
    _
  %v30 = vld [vmem:[%s1] sm:$0xff]
  %v31 = vld [vmem:[%s1 + $0x8] sm:$0xff]
  %v32 = vld [vmem:[%s1 + $0x10] sm:$0xff]
  %v33 = vld [vmem:[%s1 + $0x18] sm:$0xff]
  %v34 = vld [vmem:[%s1 + $0x20] sm:$0xff]
  %v35 = vld [vmem:[%s1 + $0x28] sm:$0xff]
  %v36 = vld [vmem:[%s1 + $0x30] sm:$0xff]
  %v37 = vld [vmem:[%s1 + $0x38] sm:$0xff]
  %v38 = vld [vmem:[%s1 + $0x40] sm:$0xff]
  %v39 = vld [vmem:[%s1 + $0x48] sm:$0xff]
  %v40 = vld [vmem:[%s1 + $0x50] sm:$0xff]
  %v41 = vld [vmem:[%s1 + $0x58] sm:$0xff]
  %v42 = vld [vmem:[%s1 + $0x60] sm:$0xff]
  %v43 = vld [vmem:[%s1 + $0x68] sm:$0xff]
  %v44 = vld [vmem:[%s1 + $0x70] sm:$0xff]
  %v45 = vld [vmem:[%s1 + $0x78] sm:$0xff]
  %v46 = vld [vmem:[%s2] sm:$0xf]
  %v47 = vld [vmem:[%s2 + $0x4] sm:$0xf]
  %v48 = vld [vmem:[%s2 + $0x8] sm:$0xf]
  %v49 = vld [vmem:[%s2 + $0xc] sm:$0xf]
  %v50 = vld [vmem:[%s2 + $0x10] sm:$0xf]
  %v51 = vld [vmem:[%s2 + $0x14] sm:$0xf]
  %v52 = vld [vmem:[%s2 + $0x18] sm:$0xf]
  %v53 = vld [vmem:[%s2 + $0x1c] sm:$0xf]
  %v54 = vld [vmem:[%s2 + $0x20] sm:$0xf]
  %v55 = vld [vmem:[%s2 + $0x24] sm:$0xf]
  %v56 = vld [vmem:[%s2 + $0x28] sm:$0xf]
  %v57 = vld [vmem:[%s2 + $0x2c] sm:$0xf]
  %v58 = vld [vmem:[%s2 + $0x30] sm:$0xf]
  %v59 = vld [vmem:[%s2 + $0x34] sm:$0xf]
  %v60 = vld [vmem:[%s2 + $0x38] sm:$0xf]
  %v61 = vld [vmem:[%s2 + $0x3c] sm:$0xf]
  %v62 = vld [vmem:[%s2 + $0x40] sm:$0xf]
  %v63 = vld [vmem:[%s2 + $0x44] sm:$0xf]
  %v80 = vunpack.c.l.b16 %v30
  %v81 = vunpack.c.h.b16 %v30
  %v82 = vunpack.c.l.b16 %v31
  %v83 = vunpack.c.h.b16 %v31
  %v84 = vunpack.c.l.b16 %v32
  %v85 = vunpack.c.h.b16 %v32
  %v86 = vunpack.c.l.b16 %v33
  %v87 = vunpack.c.h.b16 %v33
  %v88 = vunpack.c.l.b16 %v34
  %v89 = vunpack.c.h.b16 %v34
  %v90 = vunpack.c.l.b16 %v35
  %v91 = vunpack.c.h.b16 %v35
  %v92 = vunpack.c.l.b16 %v36
  %v93 = vunpack.c.h.b16 %v36
  %v94 = vunpack.c.l.b16 %v37
  %v95 = vunpack.c.h.b16 %v37
  %v96 = vunpack.c.l.b16 %v38
  %v97 = vunpack.c.h.b16 %v38
  %v98 = vunpack.c.l.b16 %v39
  %v99 = vunpack.c.h.b16 %v39
  %v100 = vunpack.c.l.b16 %v40
  %v101 = vunpack.c.h.b16 %v40
  %v102 = vunpack.c.l.b16 %v41
  %v103 = vunpack.c.h.b16 %v41
  %v104 = vunpack.c.l.b16 %v42
  %v105 = vunpack.c.h.b16 %v42
  %v106 = vunpack.c.l.b16 %v43
  %v107 = vunpack.c.h.b16 %v43
  %v108 = vunpack.c.l.b16 %v44
  %v109 = vunpack.c.h.b16 %v44
  %v110 = vunpack.c.l.b16 %v45
  %v111 = vunpack.c.h.b16 %v45
  %v112 = vpack.c.b16 %v82, %v80
  %v113 = vpack.c.b16 %v83, %v81
  %v114 = vpack.c.b16 %v86, %v84
  %v115 = vpack.c.b16 %v87, %v85
  %v116 = vpack.c.b16 %v90, %v88
  %v117 = vpack.c.b16 %v91, %v89
  %v118 = vpack.c.b16 %v94, %v92
  %v119 = vpack.c.b16 %v95, %v93
  %v120 = vpack.c.b16 %v98, %v96
  %v121 = vpack.c.b16 %v99, %v97
  %v122 = vpack.c.b16 %v102, %v100
  %v123 = vpack.c.b16 %v103, %v101
  %v124 = vpack.c.b16 %v106, %v104
  %v125 = vpack.c.b16 %v107, %v105
  %v126 = vpack.c.b16 %v110, %v108
  %v127 = vpack.c.b16 %v111, %v109
  %v154 = vunpack.c.l.b16 %v46
  %v155 = vunpack.c.l.b16 %v47
  %v156 = vunpack.c.l.b16 %v48
  %v157 = vunpack.c.l.b16 %v49
  %v158 = vunpack.c.l.b16 %v50
  %v159 = vunpack.c.l.b16 %v51
  %v160 = vunpack.c.l.b16 %v52
  %v161 = vunpack.c.l.b16 %v53
  %v162 = vunpack.c.l.b16 %v54
  %v163 = vunpack.c.l.b16 %v55
  %v164 = vunpack.c.l.b16 %v56
  %v165 = vunpack.c.l.b16 %v57
  %v166 = vunpack.c.l.b16 %v58
  %v167 = vunpack.c.l.b16 %v59
  %v168 = vunpack.c.l.b16 %v60
  %v169 = vunpack.c.l.b16 %v61
  %v170 = vunpack.c.l.b16 %v62
  %v171 = vunpack.c.l.b16 %v63
  %v172 = vpack.c.b16 %v155, %v154
  %v173 = vpack.c.b16 %v157, %v156
  %v174 = vpack.c.b16 %v159, %v158
  %v175 = vpack.c.b16 %v161, %v160
  %v176 = vpack.c.b16 %v163, %v162
  %v177 = vpack.c.b16 %v165, %v164
  %v178 = vpack.c.b16 %v167, %v166
  %v179 = vpack.c.b16 %v169, %v168
  %v180 = vpack.c.b16 %v171, %v170
  %vm190 = vcmask 130048
  %v192 = vsel %vm190, %v113, 0
  %v195 = vsel %vm190, %v115, 0
  %v198 = vsel %vm190, %v117, 0
  %v201 = vsel %vm190, %v119, 0
  %v204 = vsel %vm190, %v121, 0
  %v207 = vsel %vm190, %v123, 0
  %v210 = vsel %vm190, %v125, 0
  %v213 = vsel %vm190, %v127, 0
  %215 = vmatprep.subr.bf16.mxu0 0
  %216 = vmatpush1.bf16.msra.mxu0 %v172
  %217 = vmatprep.subr.bf16.mxu0 0
  %218 = vmatpush1.bf16.msra.mxu0 %v173
  %219 = vmatprep.subr.bf16.mxu0 0
  %220 = vmatpush1.bf16.msra.mxu0 %v174
  %221 = vmatprep.subr.bf16.mxu0 0
  %222 = vmatpush1.bf16.msra.mxu0 %v175
  %223 = vmatprep.subr.bf16.mxu0 0
  %224 = vmatpush1.bf16.msra.mxu0 %v176
  %225 = vmatprep.subr.bf16.mxu0 0
  %226 = vmatpush1.bf16.msra.mxu0 %v177
  %227 = vmatprep.subr.bf16.mxu0 0
  %228 = vmatpush1.bf16.msra.mxu0 %v178
  %229 = vmatprep.subr.bf16.mxu0 0
  %230 = vmatpush1.bf16.msra.mxu0 %v179
  %231 = vmatprep.subr.bf16.mxu0 0
  %232 = vmatpush1.bf16.msra.mxu0 %v180
  %233 = vmatprep.subr.bf16.mxu0 0
  %234 = vmatpush1.bf16.msra.mxu0 0
  %235 = vmatprep.subr.bf16.mxu0 0
  %236 = vmatpush1.bf16.msra.mxu0 0
  %237 = vmatprep.subr.bf16.mxu0 0
  %238 = vmatpush1.bf16.msra.mxu0 0
  %239 = vmatprep.subr.bf16.mxu0 0
  %240 = vmatpush1.bf16.msra.mxu0 0
  %241 = vmatprep.subr.bf16.mxu0 0
  %242 = vmatpush1.bf16.msra.mxu0 0
  %243 = vmatprep.subr.bf16.mxu0 0
  %244 = vmatpush1.bf16.msra.mxu0 0
  %245 = vmatprep.subr.bf16.mxu0 0
  %246 = vmatpush1.bf16.msra.mxu0 0
  %247 = vmatprep.mubr.bf16.mxu0 %v192
  %248 = vmatmul.mubr.bf16.gmra.mrb[0].mxu0 %v112
  %v249 = vpop.f32.mrb[0].mxu0
  %v250 = vadd.f32 0.0, %v249
  %v251 = vpop.f32.mrb[0].mxu0
  %v252 = vpop.f32.mrb[0].mxu0
  %v253 = vadd.f32 0.0, %v252
  %v254 = vpop.f32.mrb[0].mxu0
  %255 = vmatprep.mubr.bf16.mxu0 %v195
  %256 = vmatmul.mubr.bf16.gmra.mrb[0].mxu0 %v114
  %v257 = vpop.f32.mrb[0].mxu0
  %v258 = vadd.f32 0.0, %v257
  %v259 = vpop.f32.mrb[0].mxu0
  %v260 = vpop.f32.mrb[0].mxu0
  %v261 = vadd.f32 0.0, %v260
  %v262 = vpop.f32.mrb[0].mxu0
  %263 = vmatprep.mubr.bf16.mxu0 %v198
  %264 = vmatmul.mubr.bf16.gmra.mrb[0].mxu0 %v116
  %v265 = vpop.f32.mrb[0].mxu0
  %v266 = vadd.f32 0.0, %v265
  %v267 = vpop.f32.mrb[0].mxu0
  %v268 = vpop.f32.mrb[0].mxu0
  %v269 = vadd.f32 0.0, %v268
  %v270 = vpop.f32.mrb[0].mxu0
  %271 = vmatprep.mubr.bf16.mxu0 %v201
  %272 = vmatmul.mubr.bf16.gmra.mrb[0].mxu0 %v118
  %v273 = vpop.f32.mrb[0].mxu0
  %v274 = vadd.f32 0.0, %v273
  %v275 = vpop.f32.mrb[0].mxu0
  %v276 = vpop.f32.mrb[0].mxu0
  %v277 = vadd.f32 0.0, %v276
  %v278 = vpop.f32.mrb[0].mxu0
  %279 = vmatprep.mubr.bf16.mxu0 %v204
  %280 = vmatmul.mubr.bf16.gmra.mrb[0].mxu0 %v120
  %v281 = vpop.f32.mrb[0].mxu0
  %v282 = vadd.f32 0.0, %v281
  %v283 = vpop.f32.mrb[0].mxu0
  %v284 = vpop.f32.mrb[0].mxu0
  %v285 = vadd.f32 0.0, %v284
  %v286 = vpop.f32.mrb[0].mxu0
  %287 = vmatprep.mubr.bf16.mxu0 %v207
  %288 = vmatmul.mubr.bf16.gmra.mrb[0].mxu0 %v122
  %v289 = vpop.f32.mrb[0].mxu0
  %v290 = vadd.f32 0.0, %v289
  %v291 = vpop.f32.mrb[0].mxu0
  %v292 = vpop.f32.mrb[0].mxu0
  %v293 = vadd.f32 0.0, %v292
  %v294 = vpop.f32.mrb[0].mxu0
  %295 = vmatprep.mubr.bf16.mxu0 %v210
  %296 = vmatmul.mubr.bf16.gmra.mrb[0].mxu0 %v124
  %v297 = vpop.f32.mrb[0].mxu0
  %v298 = vadd.f32 0.0, %v297
  %v299 = vpop.f32.mrb[0].mxu0
  %v300 = vpop.f32.mrb[0].mxu0
  %v301 = vadd.f32 0.0, %v300
  %v302 = vpop.f32.mrb[0].mxu0
  %303 = vmatprep.mubr.bf16.mxu0 %v213
  %304 = vmatmul.mubr.bf16.gmra.mrb[0].mxu0 %v126
  %v305 = vpop.f32.mrb[0].mxu0
  %v306 = vadd.f32 0.0, %v305
  %v307 = vpop.f32.mrb[0].mxu0
  %v308 = vpop.f32.mrb[0].mxu0
  %v309 = vadd.f32 0.0, %v308
  %v310 = vpop.f32.mrb[0].mxu0
  %311 = vdwg.mxu0
  %v312 = vld [vmem:[%s3] sm:$0x1]
  %v313 = vld [vmem:[%s4] sm:$0x1]
  %v314 = vsel %vm190, %v250, 0.0
  %v315 = vsel %vm190, %v253, 0.0
  %v316 = vadd.f32 %v314, %v315
  %v317 = vsel %vm190, %v258, 0.0
  %v318 = vadd.f32 %v316, %v317
  %v319 = vsel %vm190, %v261, 0.0
  %v320 = vadd.f32 %v318, %v319
  %v321 = vsel %vm190, %v266, 0.0
  %v322 = vadd.f32 %v320, %v321
  %v323 = vsel %vm190, %v269, 0.0
  %v324 = vadd.f32 %v322, %v323
  %v325 = vsel %vm190, %v274, 0.0
  %v326 = vadd.f32 %v324, %v325
  %v327 = vsel %vm190, %v277, 0.0
  %v328 = vadd.f32 %v326, %v327
  %v329 = vsel %vm190, %v282, 0.0
  %v330 = vadd.f32 %v328, %v329
  %v331 = vsel %vm190, %v285, 0.0
  %v332 = vadd.f32 %v330, %v331
  %v333 = vsel %vm190, %v290, 0.0
  %v334 = vadd.f32 %v332, %v333
  %v335 = vsel %vm190, %v293, 0.0
  %v336 = vadd.f32 %v334, %v335
  %v337 = vsel %vm190, %v298, 0.0
  %v338 = vadd.f32 %v336, %v337
  %v339 = vsel %vm190, %v301, 0.0
  %v340 = vadd.f32 %v338, %v339
  %v341 = vsel %vm190, %v306, 0.0
  %v342 = vadd.f32 %v340, %v341
  %v343 = vsel %vm190, %v309, 0.0
  %v344 = vadd.f32 %v342, %v343
  %v345 = vrot.slane %v344, 4
  %v346 = vadd.f32 %v344, %v345
  %v347 = vrot.slane %v346, 2
  %v348 = vadd.f32 %v346, %v347
  %v349 = vrot.slane %v348, 1
  %v350 = vadd.f32 %v348, %v349
  %v351 = vmul.f32 %v350, 0.0078125
  %v352 = vsub.f32 %v250, %v351
  %v353 = vsub.f32 %v253, %v351
  %v354 = vsub.f32 %v258, %v351
  %v355 = vsub.f32 %v261, %v351
  %v356 = vsub.f32 %v266, %v351
  %v357 = vsub.f32 %v269, %v351
  %v358 = vsub.f32 %v274, %v351
  %v359 = vsub.f32 %v277, %v351
  %v360 = vsub.f32 %v282, %v351
  %v361 = vsub.f32 %v285, %v351
  %v362 = vsub.f32 %v290, %v351
  %v363 = vsub.f32 %v293, %v351
  %v364 = vsub.f32 %v298, %v351
  %v365 = vsub.f32 %v301, %v351
  %v366 = vsub.f32 %v306, %v351
  %v367 = vsub.f32 %v309, %v351
  %v368 = vmul.f32 %v352, %v352
  %v369 = vmul.f32 %v353, %v353
  %v370 = vmul.f32 %v354, %v354
  %v371 = vmul.f32 %v355, %v355
  %v372 = vmul.f32 %v356, %v356
  %v373 = vmul.f32 %v357, %v357
  %v374 = vmul.f32 %v358, %v358
  %v375 = vmul.f32 %v359, %v359
  %v376 = vmul.f32 %v360, %v360
  %v377 = vmul.f32 %v361, %v361
  %v378 = vmul.f32 %v362, %v362
  %v379 = vmul.f32 %v363, %v363
  %v380 = vmul.f32 %v364, %v364
  %v381 = vmul.f32 %v365, %v365
  %v382 = vmul.f32 %v366, %v366
  %v383 = vmul.f32 %v367, %v367
  %v384 = vsel %vm190, %v368, 0.0
  %v385 = vsel %vm190, %v369, 0.0
  %v386 = vadd.f32 %v384, %v385
  %v387 = vsel %vm190, %v370, 0.0
  %v388 = vadd.f32 %v386, %v387
  %v389 = vsel %vm190, %v371, 0.0
  %v390 = vadd.f32 %v388, %v389
  %v391 = vsel %vm190, %v372, 0.0
  %v392 = vadd.f32 %v390, %v391
  %v393 = vsel %vm190, %v373, 0.0
  %v394 = vadd.f32 %v392, %v393
  %v395 = vsel %vm190, %v374, 0.0
  %v396 = vadd.f32 %v394, %v395
  %v397 = vsel %vm190, %v375, 0.0
  %v398 = vadd.f32 %v396, %v397
  %v399 = vsel %vm190, %v376, 0.0
  %v400 = vadd.f32 %v398, %v399
  %v401 = vsel %vm190, %v377, 0.0
  %v402 = vadd.f32 %v400, %v401
  %v403 = vsel %vm190, %v378, 0.0
  %v404 = vadd.f32 %v402, %v403
  %v405 = vsel %vm190, %v379, 0.0
  %v406 = vadd.f32 %v404, %v405
  %v407 = vsel %vm190, %v380, 0.0
  %v408 = vadd.f32 %v406, %v407
  %v409 = vsel %vm190, %v381, 0.0
  %v410 = vadd.f32 %v408, %v409
  %v411 = vsel %vm190, %v382, 0.0
  %v412 = vadd.f32 %v410, %v411
  %v413 = vsel %vm190, %v383, 0.0
  %v414 = vadd.f32 %v412, %v413
  %v415 = vrot.slane %v414, 4
  %v416 = vadd.f32 %v414, %v415
  %v417 = vrot.slane %v416, 2
  %v418 = vadd.f32 %v416, %v417
  %v419 = vrot.slane %v418, 1
  %v420 = vadd.f32 %v418, %v419
  %v421 = vmul.f32 %v420, 0.0078125
  %v422 = vadd.f32 %v421, 1e-05
  %v423 = vrsqrt.pop %v422
  %v424 = vmul.f32 %v312, %v423
  %v426 = vlaneseq
  %v427 = vshrl.u32 %v426, 7
  %v428 = vsub.s32 0, %v427
  %v429 = vrot.slane %v424, %v428
  %v431 = vmul.f32 %v352, %v429
  %v432 = vmul.f32 %v353, %v429
  %v433 = vmul.f32 %v354, %v429
  %v434 = vmul.f32 %v355, %v429
  %v435 = vmul.f32 %v356, %v429
  %v436 = vmul.f32 %v357, %v429
  %v437 = vmul.f32 %v358, %v429
  %v438 = vmul.f32 %v359, %v429
  %v439 = vmul.f32 %v360, %v429
  %v440 = vmul.f32 %v361, %v429
  %v441 = vmul.f32 %v362, %v429
  %v442 = vmul.f32 %v363, %v429
  %v443 = vmul.f32 %v364, %v429
  %v444 = vmul.f32 %v365, %v429
  %v445 = vmul.f32 %v366, %v429
  %v446 = vmul.f32 %v367, %v429
  %v448 = vlaneseq
  %v449 = vshrl.u32 %v448, 7
  %v450 = vsub.s32 0, %v449
  %v451 = vrot.slane %v313, %v450
  %v453 = vadd.f32 %v431, %v451
  %v454 = vadd.f32 %v432, %v451
  %v455 = vadd.f32 %v433, %v451
  %v456 = vadd.f32 %v434, %v451
  %v457 = vadd.f32 %v435, %v451
  %v458 = vadd.f32 %v436, %v451
  %v459 = vadd.f32 %v437, %v451
  %v460 = vadd.f32 %v438, %v451
  %v461 = vadd.f32 %v439, %v451
  %v462 = vadd.f32 %v440, %v451
  %v463 = vadd.f32 %v441, %v451
  %v464 = vadd.f32 %v442, %v451
  %v465 = vadd.f32 %v443, %v451
  %v466 = vadd.f32 %v444, %v451
  %v467 = vadd.f32 %v445, %v451
  %v468 = vadd.f32 %v446, %v451
  %vm469 = vcmp.gt.f32.partialorder %v453, 0.0
  %vm470 = vcmp.gt.f32.partialorder %v454, 0.0
  %vm471 = vcmp.gt.f32.partialorder %v455, 0.0
  %vm472 = vcmp.gt.f32.partialorder %v456, 0.0
  %vm473 = vcmp.gt.f32.partialorder %v457, 0.0
  %vm474 = vcmp.gt.f32.partialorder %v458, 0.0
  %vm475 = vcmp.gt.f32.partialorder %v459, 0.0
  %vm476 = vcmp.gt.f32.partialorder %v460, 0.0
  %vm477 = vcmp.gt.f32.partialorder %v461, 0.0
  %vm478 = vcmp.gt.f32.partialorder %v462, 0.0
  %vm479 = vcmp.gt.f32.partialorder %v463, 0.0
  %vm480 = vcmp.gt.f32.partialorder %v464, 0.0
  %vm481 = vcmp.gt.f32.partialorder %v465, 0.0
  %vm482 = vcmp.gt.f32.partialorder %v466, 0.0
  %vm483 = vcmp.gt.f32.partialorder %v467, 0.0
  %vm484 = vcmp.gt.f32.partialorder %v468, 0.0
  %v485 = vmul.f32 %v453, 0.01
  %v486 = vmul.f32 %v454, 0.01
  %v487 = vmul.f32 %v455, 0.01
  %v488 = vmul.f32 %v456, 0.01
  %v489 = vmul.f32 %v457, 0.01
  %v490 = vmul.f32 %v458, 0.01
  %v491 = vmul.f32 %v459, 0.01
  %v492 = vmul.f32 %v460, 0.01
  %v493 = vmul.f32 %v461, 0.01
  %v494 = vmul.f32 %v462, 0.01
  %v495 = vmul.f32 %v463, 0.01
  %v496 = vmul.f32 %v464, 0.01
  %v497 = vmul.f32 %v465, 0.01
  %v498 = vmul.f32 %v466, 0.01
  %v499 = vmul.f32 %v467, 0.01
  %v500 = vmul.f32 %v468, 0.01
  %v501 = vsel %vm469, %v453, %v485
  %v502 = vsel %vm470, %v454, %v486
  %v503 = vsel %vm471, %v455, %v487
  %v504 = vsel %vm472, %v456, %v488
  %v505 = vsel %vm473, %v457, %v489
  %v506 = vsel %vm474, %v458, %v490
  %v507 = vsel %vm475, %v459, %v491
  %v508 = vsel %vm476, %v460, %v492
  %v509 = vsel %vm477, %v461, %v493
  %v510 = vsel %vm478, %v462, %v494
  %v511 = vsel %vm479, %v463, %v495
  %v512 = vsel %vm480, %v464, %v496
  %v513 = vsel %vm481, %v465, %v497
  %v514 = vsel %vm482, %v466, %v498
  %v515 = vsel %vm483, %v467, %v499
  %v516 = vsel %vm484, %v468, %v500
  %v517 = vpack.c.bf16 %v502, %v501
  %v518 = vpack.c.bf16 %v504, %v503
  %v519 = vpack.c.bf16 %v506, %v505
  %v520 = vpack.c.bf16 %v508, %v507
  %v521 = vpack.c.bf16 %v510, %v509
  %v522 = vpack.c.bf16 %v512, %v511
  %v523 = vpack.c.bf16 %v514, %v513
  %v524 = vpack.c.bf16 %v516, %v515
  %v525 = vld [vmem:[%s5] sm:$0xf]
  %v526 = vld [vmem:[%s5 + $0x4] sm:$0xf]
  %v529 = vunpack.c.l.b16 %v525
  %v530 = vunpack.c.l.b16 %v526
  %v531 = vpack.c.b16 %v530, %v529
  %v534 = vsel %vm190, %v517, 0
  %v537 = vsel %vm190, %v518, 0
  %v540 = vsel %vm190, %v519, 0
  %v543 = vsel %vm190, %v520, 0
  %v546 = vsel %vm190, %v521, 0
  %v549 = vsel %vm190, %v522, 0
  %v552 = vsel %vm190, %v523, 0
  %v555 = vsel %vm190, %v524, 0
  %557 = vmatprep.subr.bf16.mxu0 0
  %558 = vmatpush1.bf16.msra.mxu0 %v531
  %559 = vmatprep.subr.bf16.mxu0 0
  %560 = vmatpush1.bf16.msra.mxu0 0
  %561 = vmatprep.subr.bf16.mxu0 0
  %562 = vmatpush1.bf16.msra.mxu0 0
  %563 = vmatprep.subr.bf16.mxu0 0
  %564 = vmatpush1.bf16.msra.mxu0 0
  %565 = vmatprep.subr.bf16.mxu0 0
  %566 = vmatpush1.bf16.msra.mxu0 0
  %567 = vmatprep.subr.bf16.mxu0 0
  %568 = vmatpush1.bf16.msra.mxu0 0
  %569 = vmatprep.subr.bf16.mxu0 0
  %570 = vmatpush1.bf16.msra.mxu0 0
  %571 = vmatprep.subr.bf16.mxu0 0
  %572 = vmatpush1.bf16.msra.mxu0 0
  %573 = vmatprep.subr.bf16.mxu0 0
  %574 = vmatpush1.bf16.msra.mxu0 0
  %575 = vmatprep.subr.bf16.mxu0 0
  %576 = vmatpush1.bf16.msra.mxu0 0
  %577 = vmatprep.subr.bf16.mxu0 0
  %578 = vmatpush1.bf16.msra.mxu0 0
  %579 = vmatprep.subr.bf16.mxu0 0
  %580 = vmatpush1.bf16.msra.mxu0 0
  %581 = vmatprep.subr.bf16.mxu0 0
  %582 = vmatpush1.bf16.msra.mxu0 0
  %583 = vmatprep.subr.bf16.mxu0 0
  %584 = vmatpush1.bf16.msra.mxu0 0
  %585 = vmatprep.subr.bf16.mxu0 0
  %586 = vmatpush1.bf16.msra.mxu0 0
  %587 = vmatprep.subr.bf16.mxu0 0
  %588 = vmatpush1.bf16.msra.mxu0 0
  %589 = vmatprep.mubr.bf16.mxu0 0
  %590 = vmatmul.mubr.bf16.gmra.mrb[0].mxu0 %v534
  %v591 = vpop.f32.mrb[0].mxu0
  %v592 = vadd.f32 0.0, %v591
  %v593 = vpop.f32.mrb[0].mxu0
  %v594 = vpop.f32.mrb[0].mxu0
  %v595 = vadd.f32 0.0, %v594
  %v596 = vpop.f32.mrb[0].mxu0
  %597 = vmatprep.mubr.bf16.mxu0 0
  %598 = vmatmul.mubr.bf16.gmra.mrb[0].mxu0 %v537
  %v599 = vpop.f32.mrb[0].mxu0
  %v600 = vadd.f32 0.0, %v599
  %v601 = vpop.f32.mrb[0].mxu0
  %v602 = vpop.f32.mrb[0].mxu0
  %v603 = vadd.f32 0.0, %v602
  %v604 = vpop.f32.mrb[0].mxu0
  %605 = vmatprep.mubr.bf16.mxu0 0
  %606 = vmatmul.mubr.bf16.gmra.mrb[0].mxu0 %v540
  %v607 = vpop.f32.mrb[0].mxu0
  %v608 = vadd.f32 0.0, %v607
  %v609 = vpop.f32.mrb[0].mxu0
  %v610 = vpop.f32.mrb[0].mxu0
  %v611 = vadd.f32 0.0, %v610
  %v612 = vpop.f32.mrb[0].mxu0
  %613 = vmatprep.mubr.bf16.mxu0 0
  %614 = vmatmul.mubr.bf16.gmra.mrb[0].mxu0 %v543
  %v615 = vpop.f32.mrb[0].mxu0
  %v616 = vadd.f32 0.0, %v615
  %v617 = vpop.f32.mrb[0].mxu0
  %v618 = vpop.f32.mrb[0].mxu0
  %v619 = vadd.f32 0.0, %v618
  %v620 = vpop.f32.mrb[0].mxu0
  %621 = vmatprep.mubr.bf16.mxu0 0
  %622 = vmatmul.mubr.bf16.gmra.mrb[0].mxu0 %v546
  %v623 = vpop.f32.mrb[0].mxu0
  %v624 = vadd.f32 0.0, %v623
  %v625 = vpop.f32.mrb[0].mxu0
  %v626 = vpop.f32.mrb[0].mxu0
  %v627 = vadd.f32 0.0, %v626
  %v628 = vpop.f32.mrb[0].mxu0
  %629 = vmatprep.mubr.bf16.mxu0 0
  %630 = vmatmul.mubr.bf16.gmra.mrb[0].mxu0 %v549
  %v631 = vpop.f32.mrb[0].mxu0
  %v632 = vadd.f32 0.0, %v631
  %v633 = vpop.f32.mrb[0].mxu0
  %v634 = vpop.f32.mrb[0].mxu0
  %v635 = vadd.f32 0.0, %v634
  %v636 = vpop.f32.mrb[0].mxu0
  %637 = vmatprep.mubr.bf16.mxu0 0
  %638 = vmatmul.mubr.bf16.gmra.mrb[0].mxu0 %v552
  %v639 = vpop.f32.mrb[0].mxu0
  %v640 = vadd.f32 0.0, %v639
  %v641 = vpop.f32.mrb[0].mxu0
  %v642 = vpop.f32.mrb[0].mxu0
  %v643 = vadd.f32 0.0, %v642
  %v644 = vpop.f32.mrb[0].mxu0
  %645 = vmatprep.mubr.bf16.mxu0 0
  %646 = vmatmul.mubr.bf16.gmra.mrb[0].mxu0 %v555
  %v647 = vpop.f32.mrb[0].mxu0
  %v648 = vadd.f32 0.0, %v647
  %v649 = vpop.f32.mrb[0].mxu0
  %v650 = vpop.f32.mrb[0].mxu0
  %v651 = vadd.f32 0.0, %v650
  %v652 = vpop.f32.mrb[0].mxu0
  %653 = vdwg.mxu0
  %v654 = vld [vmem:[%s6] sm:$0x1]
  %v655 = vld [vmem:[%s7] sm:$0x1]
  %v656 = vsel %vm190, %v592, 0.0
  %v657 = vsel %vm190, %v595, 0.0
  %v658 = vadd.f32 %v656, %v657
  %v659 = vsel %vm190, %v600, 0.0
  %v660 = vadd.f32 %v658, %v659
  %v661 = vsel %vm190, %v603, 0.0
  %v662 = vadd.f32 %v660, %v661
  %v663 = vsel %vm190, %v608, 0.0
  %v664 = vadd.f32 %v662, %v663
  %v665 = vsel %vm190, %v611, 0.0
  %v666 = vadd.f32 %v664, %v665
  %v667 = vsel %vm190, %v616, 0.0
  %v668 = vadd.f32 %v666, %v667
  %v669 = vsel %vm190, %v619, 0.0
  %v670 = vadd.f32 %v668, %v669
  %v671 = vsel %vm190, %v624, 0.0
  %v672 = vadd.f32 %v670, %v671
  %v673 = vsel %vm190, %v627, 0.0
  %v674 = vadd.f32 %v672, %v673
  %v675 = vsel %vm190, %v632, 0.0
  %v676 = vadd.f32 %v674, %v675
  %v677 = vsel %vm190, %v635, 0.0
  %v678 = vadd.f32 %v676, %v677
  %v679 = vsel %vm190, %v640, 0.0
  %v680 = vadd.f32 %v678, %v679
  %v681 = vsel %vm190, %v643, 0.0
  %v682 = vadd.f32 %v680, %v681
  %v683 = vsel %vm190, %v648, 0.0
  %v684 = vadd.f32 %v682, %v683
  %v685 = vsel %vm190, %v651, 0.0
  %v686 = vadd.f32 %v684, %v685
  %v687 = vrot.slane %v686, 4
  %v688 = vadd.f32 %v686, %v687
  %v689 = vrot.slane %v688, 2
  %v690 = vadd.f32 %v688, %v689
  %v691 = vrot.slane %v690, 1
  %v692 = vadd.f32 %v690, %v691
  %v693 = vmul.f32 %v692, 0.0078125
  %v694 = vsub.f32 %v592, %v693
  %v695 = vsub.f32 %v595, %v693
  %v696 = vsub.f32 %v600, %v693
  %v697 = vsub.f32 %v603, %v693
  %v698 = vsub.f32 %v608, %v693
  %v699 = vsub.f32 %v611, %v693
  %v700 = vsub.f32 %v616, %v693
  %v701 = vsub.f32 %v619, %v693
  %v702 = vsub.f32 %v624, %v693
  %v703 = vsub.f32 %v627, %v693
  %v704 = vsub.f32 %v632, %v693
  %v705 = vsub.f32 %v635, %v693
  %v706 = vsub.f32 %v640, %v693
  %v707 = vsub.f32 %v643, %v693
  %v708 = vsub.f32 %v648, %v693
  %v709 = vsub.f32 %v651, %v693
  %v710 = vmul.f32 %v694, %v694
  %v711 = vmul.f32 %v695, %v695
  %v712 = vmul.f32 %v696, %v696
  %v713 = vmul.f32 %v697, %v697
  %v714 = vmul.f32 %v698, %v698
  %v715 = vmul.f32 %v699, %v699
  %v716 = vmul.f32 %v700, %v700
  %v717 = vmul.f32 %v701, %v701
  %v718 = vmul.f32 %v702, %v702
  %v719 = vmul.f32 %v703, %v703
  %v720 = vmul.f32 %v704, %v704
  %v721 = vmul.f32 %v705, %v705
  %v722 = vmul.f32 %v706, %v706
  %v723 = vmul.f32 %v707, %v707
  %v724 = vmul.f32 %v708, %v708
  %v725 = vmul.f32 %v709, %v709
  %v726 = vsel %vm190, %v710, 0.0
  %v727 = vsel %vm190, %v711, 0.0
  %v728 = vadd.f32 %v726, %v727
  %v729 = vsel %vm190, %v712, 0.0
  %v730 = vadd.f32 %v728, %v729
  %v731 = vsel %vm190, %v713, 0.0
  %v732 = vadd.f32 %v730, %v731
  %v733 = vsel %vm190, %v714, 0.0
  %v734 = vadd.f32 %v732, %v733
  %v735 = vsel %vm190, %v715, 0.0
  %v736 = vadd.f32 %v734, %v735
  %v737 = vsel %vm190, %v716, 0.0
  %v738 = vadd.f32 %v736, %v737
  %v739 = vsel %vm190, %v717, 0.0
  %v740 = vadd.f32 %v738, %v739
  %v741 = vsel %vm190, %v718, 0.0
  %v742 = vadd.f32 %v740, %v741
  %v743 = vsel %vm190, %v719, 0.0
  %v744 = vadd.f32 %v742, %v743
  %v745 = vsel %vm190, %v720, 0.0
  %v746 = vadd.f32 %v744, %v745
  %v747 = vsel %vm190, %v721, 0.0
  %v748 = vadd.f32 %v746, %v747
  %v749 = vsel %vm190, %v722, 0.0
  %v750 = vadd.f32 %v748, %v749
  %v751 = vsel %vm190, %v723, 0.0
  %v752 = vadd.f32 %v750, %v751
  %v753 = vsel %vm190, %v724, 0.0
  %v754 = vadd.f32 %v752, %v753
  %v755 = vsel %vm190, %v725, 0.0
  %v756 = vadd.f32 %v754, %v755
  %v757 = vrot.slane %v756, 4
  %v758 = vadd.f32 %v756, %v757
  %v759 = vrot.slane %v758, 2
  %v760 = vadd.f32 %v758, %v759
  %v761 = vrot.slane %v760, 1
  %v762 = vadd.f32 %v760, %v761
  %v763 = vmul.f32 %v762, 0.0078125
  %v764 = vadd.f32 %v763, 1e-05
  %v765 = vrsqrt.pop %v764
  %v766 = vmul.f32 %v654, %v765
  %v768 = vlaneseq
  %v769 = vshrl.u32 %v768, 7
  %v770 = vsub.s32 0, %v769
  %v771 = vrot.slane %v766, %v770
  %v773 = vmul.f32 %v694, %v771
  %v774 = vmul.f32 %v695, %v771
  %v775 = vmul.f32 %v696, %v771
  %v776 = vmul.f32 %v697, %v771
  %v777 = vmul.f32 %v698, %v771
  %v778 = vmul.f32 %v699, %v771
  %v779 = vmul.f32 %v700, %v771
  %v780 = vmul.f32 %v701, %v771
  %v781 = vmul.f32 %v702, %v771
  %v782 = vmul.f32 %v703, %v771
  %v783 = vmul.f32 %v704, %v771
  %v784 = vmul.f32 %v705, %v771
  %v785 = vmul.f32 %v706, %v771
  %v786 = vmul.f32 %v707, %v771
  %v787 = vmul.f32 %v708, %v771
  %v788 = vmul.f32 %v709, %v771
  %v790 = vlaneseq
  %v791 = vshrl.u32 %v790, 7
  %v792 = vsub.s32 0, %v791
  %v793 = vrot.slane %v655, %v792
  %v795 = vadd.f32 %v773, %v793
  %v796 = vadd.f32 %v774, %v793
  %v797 = vadd.f32 %v775, %v793
  %v798 = vadd.f32 %v776, %v793
  %v799 = vadd.f32 %v777, %v793
  %v800 = vadd.f32 %v778, %v793
  %v801 = vadd.f32 %v779, %v793
  %v802 = vadd.f32 %v780, %v793
  %v803 = vadd.f32 %v781, %v793
  %v804 = vadd.f32 %v782, %v793
  %v805 = vadd.f32 %v783, %v793
  %v806 = vadd.f32 %v784, %v793
  %v807 = vadd.f32 %v785, %v793
  %v808 = vadd.f32 %v786, %v793
  %v809 = vadd.f32 %v787, %v793
  %v810 = vadd.f32 %v788, %v793
  %v811 = vld [vmem:[%s0] sm:$0xff]
  %v812 = vld [vmem:[%s0 + $0x8] sm:$0xff]
  %v813 = vld [vmem:[%s0 + $0x10] sm:$0xff]
  %v814 = vld [vmem:[%s0 + $0x18] sm:$0xff]
  %v815 = vld [vmem:[%s0 + $0x20] sm:$0xff]
  %v816 = vld [vmem:[%s0 + $0x28] sm:$0xff]
  %v817 = vld [vmem:[%s0 + $0x30] sm:$0xff]
  %v818 = vld [vmem:[%s0 + $0x38] sm:$0xff]
  %v819 = vld [vmem:[%s0 + $0x40] sm:$0xff]
  %v820 = vld [vmem:[%s0 + $0x48] sm:$0xff]
  %v821 = vld [vmem:[%s0 + $0x50] sm:$0xff]
  %v822 = vld [vmem:[%s0 + $0x58] sm:$0xff]
  %v823 = vld [vmem:[%s0 + $0x60] sm:$0xff]
  %v824 = vld [vmem:[%s0 + $0x68] sm:$0xff]
  %v825 = vld [vmem:[%s0 + $0x70] sm:$0xff]
  %v826 = vld [vmem:[%s0 + $0x78] sm:$0xff]
  %v827 = vadd.f32 %v811, %v795
  %v828 = vadd.f32 %v812, %v796
  %v829 = vadd.f32 %v813, %v797
  %v830 = vadd.f32 %v814, %v798
  %v831 = vadd.f32 %v815, %v799
  %v832 = vadd.f32 %v816, %v800
  %v833 = vadd.f32 %v817, %v801
  %v834 = vadd.f32 %v818, %v802
  %v835 = vadd.f32 %v819, %v803
  %v836 = vadd.f32 %v820, %v804
  %v837 = vadd.f32 %v821, %v805
  %v838 = vadd.f32 %v822, %v806
  %v839 = vadd.f32 %v823, %v807
  %v840 = vadd.f32 %v824, %v808
  %v841 = vadd.f32 %v825, %v809
  %v842 = vadd.f32 %v826, %v810
  %vm843 = vcmp.gt.f32.partialorder %v827, 0.0
  %vm844 = vcmp.gt.f32.partialorder %v828, 0.0
  %vm845 = vcmp.gt.f32.partialorder %v829, 0.0
  %vm846 = vcmp.gt.f32.partialorder %v830, 0.0
  %vm847 = vcmp.gt.f32.partialorder %v831, 0.0
  %vm848 = vcmp.gt.f32.partialorder %v832, 0.0
  %vm849 = vcmp.gt.f32.partialorder %v833, 0.0
  %vm850 = vcmp.gt.f32.partialorder %v834, 0.0
  %vm851 = vcmp.gt.f32.partialorder %v835, 0.0
  %vm852 = vcmp.gt.f32.partialorder %v836, 0.0
  %vm853 = vcmp.gt.f32.partialorder %v837, 0.0
  %vm854 = vcmp.gt.f32.partialorder %v838, 0.0
  %vm855 = vcmp.gt.f32.partialorder %v839, 0.0
  %vm856 = vcmp.gt.f32.partialorder %v840, 0.0
  %vm857 = vcmp.gt.f32.partialorder %v841, 0.0
  %vm858 = vcmp.gt.f32.partialorder %v842, 0.0
  %v859 = vmul.f32 %v827, 0.01
  %v860 = vmul.f32 %v828, 0.01
  %v861 = vmul.f32 %v829, 0.01
  %v862 = vmul.f32 %v830, 0.01
  %v863 = vmul.f32 %v831, 0.01
  %v864 = vmul.f32 %v832, 0.01
  %v865 = vmul.f32 %v833, 0.01
  %v866 = vmul.f32 %v834, 0.01
  %v867 = vmul.f32 %v835, 0.01
  %v868 = vmul.f32 %v836, 0.01
  %v869 = vmul.f32 %v837, 0.01
  %v870 = vmul.f32 %v838, 0.01
  %v871 = vmul.f32 %v839, 0.01
  %v872 = vmul.f32 %v840, 0.01
  %v873 = vmul.f32 %v841, 0.01
  %v874 = vmul.f32 %v842, 0.01
  %v875 = vsel %vm843, %v827, %v859
  %v876 = vsel %vm844, %v828, %v860
  %v877 = vsel %vm845, %v829, %v861
  %v878 = vsel %vm846, %v830, %v862
  %v879 = vsel %vm847, %v831, %v863
  %v880 = vsel %vm848, %v832, %v864
  %v881 = vsel %vm849, %v833, %v865
  %v882 = vsel %vm850, %v834, %v866
  %v883 = vsel %vm851, %v835, %v867
  %v884 = vsel %vm852, %v836, %v868
  %v885 = vsel %vm853, %v837, %v869
  %v886 = vsel %vm854, %v838, %v870
  %v887 = vsel %vm855, %v839, %v871
  %v888 = vsel %vm856, %v840, %v872
  %v889 = vsel %vm857, %v841, %v873
  %v890 = vsel %vm858, %v842, %v874
  %891 = vst.msk [vmem:[%s8] sm:$0xff] %vm190, %v875
  %892 = vst.msk [vmem:[%s8 + $0x8] sm:$0xff] %vm190, %v876
  %893 = vst.msk [vmem:[%s8 + $0x10] sm:$0xff] %vm190, %v877
  %894 = vst.msk [vmem:[%s8 + $0x18] sm:$0xff] %vm190, %v878
  %895 = vst.msk [vmem:[%s8 + $0x20] sm:$0xff] %vm190, %v879
  %896 = vst.msk [vmem:[%s8 + $0x28] sm:$0xff] %vm190, %v880
  %897 = vst.msk [vmem:[%s8 + $0x30] sm:$0xff] %vm190, %v881
  %898 = vst.msk [vmem:[%s8 + $0x38] sm:$0xff] %vm190, %v882
  %899 = vst.msk [vmem:[%s8 + $0x40] sm:$0xff] %vm190, %v883
  %900 = vst.msk [vmem:[%s8 + $0x48] sm:$0xff] %vm190, %v884
  %901 = vst.msk [vmem:[%s8 + $0x50] sm:$0xff] %vm190, %v885
  %902 = vst.msk [vmem:[%s8 + $0x58] sm:$0xff] %vm190, %v886
  %903 = vst.msk [vmem:[%s8 + $0x60] sm:$0xff] %vm190, %v887
  %904 = vst.msk [vmem:[%s8 + $0x68] sm:$0xff] %vm190, %v888
  %905 = vst.msk [vmem:[%s8 + $0x70] sm:$0xff] %vm190, %v889
  %906 = vst.msk [vmem:[%s8 + $0x78] sm:$0xff] %vm190, %v890
  // Predicated region
  $region34: #{encoder_forward.18} parent=0 // pred_check
    _
  $region35: #{encoder_forward.18} parent=0 // pred_check_branch
    %908 = sbr.rel (0) target = $region37
  $region36: #{encoder_forward.18} parent=0 // pred_region
    _
  $region37: #{encoder_forward.18} parent=0 // pred_fallthru
    _
  // Predicated region
  $region38: #{encoder_forward.18} parent=0 // pred_check
    _
  $region39: #{encoder_forward.18} parent=0 // pred_check_branch
    %910 = sbr.rel (0) target = $region41
  $region40: #{encoder_forward.18} parent=0 // pred_region
    _
  $region41: #{encoder_forward.18} parent=0 // pred_fallthru
    _

// kernel: encoder_forward.15
$region0: #{encoder_forward.15}
  #allocation0 [shape = 'u32[]', space=smem, size = 0x4, offset = 0x4, fixed_abs, tag = 'smem constant byte address 0x4 - core index']
  #allocation1 [shape = 'u32[144,128]{1,0:T(1,128)}', space=vmem, size = 0x12000, scoped, tag = 'internal scratch']
  %s0 = inlined_call_operand.vmem [shape: f32[128,16], index: 0, kind: input, shape index: {}]
  %s1 = inlined_call_operand.vmem [shape: bf16[128,144], index: 1, kind: input, shape index: {}]
  %s2 = inlined_call_operand.vmem [shape: bf16[144,16], index: 2, kind: input, shape index: {}]
  %s3 = inlined_call_operand.vmem [shape: f32[1,16], index: 3, kind: input, shape index: {}]
  %s4 = inlined_call_operand.vmem [shape: f32[1,16], index: 4, kind: input, shape index: {}]
  %s5 = inlined_call_operand.vmem [shape: bf16[16,16], index: 5, kind: input, shape index: {}]
  %s6 = inlined_call_operand.vmem [shape: f32[1,16], index: 6, kind: input, shape index: {}]
  %s7 = inlined_call_operand.vmem [shape: f32[1,16], index: 7, kind: input, shape index: {}]
  %s8 = inlined_call_operand.vmem [shape: f32[128,16], index: 8, kind: output, shape index: {}]
  %s9 = sld [smem:[#allocation0]]
  $region42: #{encoder_forward.15} parent=0
    _
  %s11 = ssub.s32 1, %s9
  %s12 = scalar_select 0, %s11, %s9
  // Predicated region
  $region2: #{encoder_forward.15} parent=0 // pred_check
    _
  $region3: #{encoder_forward.15} parent=0 // pred_check_branch
    %14 = sbr.rel (0) target = $region5
  $region4: #{encoder_forward.15} parent=0 // pred_region
    _
  $region5: #{encoder_forward.15} parent=0 // pred_fallthru
    _
  // Predicated region
  $region6: #{encoder_forward.15} parent=0 // pred_check
    _
  $region7: #{encoder_forward.15} parent=0 // pred_check_branch
    %16 = sbr.rel (0) target = $region9
  $region8: #{encoder_forward.15} parent=0 // pred_region
    _
  $region9: #{encoder_forward.15} parent=0 // pred_fallthru
    _
  // Predicated region
  $region10: #{encoder_forward.15} parent=0 // pred_check
    _
  $region11: #{encoder_forward.15} parent=0 // pred_check_branch
    %18 = sbr.rel (0) target = $region13
  $region12: #{encoder_forward.15} parent=0 // pred_region
    _
  $region13: #{encoder_forward.15} parent=0 // pred_fallthru
    _
  // Predicated region
  $region14: #{encoder_forward.15} parent=0 // pred_check
    _
  $region15: #{encoder_forward.15} parent=0 // pred_check_branch
    %20 = sbr.rel (0) target = $region17
  $region16: #{encoder_forward.15} parent=0 // pred_region
    _
  $region17: #{encoder_forward.15} parent=0 // pred_fallthru
    _
  // Predicated region
  $region18: #{encoder_forward.15} parent=0 // pred_check
    _
  $region19: #{encoder_forward.15} parent=0 // pred_check_branch
    %22 = sbr.rel (0) target = $region21
  $region20: #{encoder_forward.15} parent=0 // pred_region
    _
  $region21: #{encoder_forward.15} parent=0 // pred_fallthru
    _
  // Predicated region
  $region22: #{encoder_forward.15} parent=0 // pred_check
    _
  $region23: #{encoder_forward.15} parent=0 // pred_check_branch
    %24 = sbr.rel (0) target = $region25
  $region24: #{encoder_forward.15} parent=0 // pred_region
    _
  $region25: #{encoder_forward.15} parent=0 // pred_fallthru
    _
  // Predicated region
  $region26: #{encoder_forward.15} parent=0 // pred_check
    _
  $region27: #{encoder_forward.15} parent=0 // pred_check_branch
    %26 = sbr.rel (0) target = $region29
  $region28: #{encoder_forward.15} parent=0 // pred_region
    _
  $region29: #{encoder_forward.15} parent=0 // pred_fallthru
    _
  // Predicated region
  $region30: #{encoder_forward.15} parent=0 // pred_check
    _
  $region31: #{encoder_forward.15} parent=0 // pred_check_branch
    %28 = sbr.rel (0) target = $region33
  $region32: #{encoder_forward.15} parent=0 // pred_region
    _
  $region33: #{encoder_forward.15} parent=0 // pred_fallthru
    _
  %v30 = vld [vmem:[%s1] sm:$0xff]
  %v31 = vld [vmem:[%s1 + $0x8] sm:$0xff]
  %v32 = vld [vmem:[%s1 + $0x10] sm:$0xff]
  %v33 = vld [vmem:[%s1 + $0x18] sm:$0xff]
  %v34 = vld [vmem:[%s1 + $0x20] sm:$0xff]
  %v35 = vld [vmem:[%s1 + $0x28] sm:$0xff]
  %v36 = vld [vmem:[%s1 + $0x30] sm:$0xff]
  %v37 = vld [vmem:[%s1 + $0x38] sm:$0xff]
  %v38 = vld [vmem:[%s1 + $0x40] sm:$0xff]
  %v39 = vld [vmem:[%s1 + $0x48] sm:$0xff]
  %v40 = vld [vmem:[%s1 + $0x50] sm:$0xff]
  %v41 = vld [vmem:[%s1 + $0x58] sm:$0xff]
  %v42 = vld [vmem:[%s1 + $0x60] sm:$0xff]
  %v43 = vld [vmem:[%s1 + $0x68] sm:$0xff]
  %v44 = vld [vmem:[%s1 + $0x70] sm:$0xff]
  %v45 = vld [vmem:[%s1 + $0x78] sm:$0xff]
  %v46 = vld [vmem:[%s2] sm:$0xf]
  %v47 = vld [vmem:[%s2 + $0x4] sm:$0xf]
  %v48 = vld [vmem:[%s2 + $0x8] sm:$0xf]
  %v49 = vld [vmem:[%s2 + $0xc] sm:$0xf]
  %v50 = vld [vmem:[%s2 + $0x10] sm:$0xf]
  %v51 = vld [vmem:[%s2 + $0x14] sm:$0xf]
  %v52 = vld [vmem:[%s2 + $0x18] sm:$0xf]
  %v53 = vld [vmem:[%s2 + $0x1c] sm:$0xf]
  %v54 = vld [vmem:[%s2 + $0x20] sm:$0xf]
  %v55 = vld [vmem:[%s2 + $0x24] sm:$0xf]
  %v56 = vld [vmem:[%s2 + $0x28] sm:$0xf]
  %v57 = vld [vmem:[%s2 + $0x2c] sm:$0xf]
  %v58 = vld [vmem:[%s2 + $0x30] sm:$0xf]
  %v59 = vld [vmem:[%s2 + $0x34] sm:$0xf]
  %v60 = vld [vmem:[%s2 + $0x38] sm:$0xf]
  %v61 = vld [vmem:[%s2 + $0x3c] sm:$0xf]
  %v62 = vld [vmem:[%s2 + $0x40] sm:$0xf]
  %v63 = vld [vmem:[%s2 + $0x44] sm:$0xf]
  %v80 = vunpack.c.l.b16 %v30
  %v81 = vunpack.c.h.b16 %v30
  %v82 = vunpack.c.l.b16 %v31
  %v83 = vunpack.c.h.b16 %v31
  %v84 = vunpack.c.l.b16 %v32
  %v85 = vunpack.c.h.b16 %v32
  %v86 = vunpack.c.l.b16 %v33
  %v87 = vunpack.c.h.b16 %v33
  %v88 = vunpack.c.l.b16 %v34
  %v89 = vunpack.c.h.b16 %v34
  %v90 = vunpack.c.l.b16 %v35
  %v91 = vunpack.c.h.b16 %v35
  %v92 = vunpack.c.l.b16 %v36
  %v93 = vunpack.c.h.b16 %v36
  %v94 = vunpack.c.l.b16 %v37
  %v95 = vunpack.c.h.b16 %v37
  %v96 = vunpack.c.l.b16 %v38
  %v97 = vunpack.c.h.b16 %v38
  %v98 = vunpack.c.l.b16 %v39
  %v99 = vunpack.c.h.b16 %v39
  %v100 = vunpack.c.l.b16 %v40
  %v101 = vunpack.c.h.b16 %v40
  %v102 = vunpack.c.l.b16 %v41
  %v103 = vunpack.c.h.b16 %v41
  %v104 = vunpack.c.l.b16 %v42
  %v105 = vunpack.c.h.b16 %v42
  %v106 = vunpack.c.l.b16 %v43
  %v107 = vunpack.c.h.b16 %v43
  %v108 = vunpack.c.l.b16 %v44
  %v109 = vunpack.c.h.b16 %v44
  %v110 = vunpack.c.l.b16 %v45
  %v111 = vunpack.c.h.b16 %v45
  %v112 = vpack.c.b16 %v82, %v80
  %v113 = vpack.c.b16 %v83, %v81
  %v114 = vpack.c.b16 %v86, %v84
  %v115 = vpack.c.b16 %v87, %v85
  %v116 = vpack.c.b16 %v90, %v88
  %v117 = vpack.c.b16 %v91, %v89
  %v118 = vpack.c.b16 %v94, %v92
  %v119 = vpack.c.b16 %v95, %v93
  %v120 = vpack.c.b16 %v98, %v96
  %v121 = vpack.c.b16 %v99, %v97
  %v122 = vpack.c.b16 %v102, %v100
  %v123 = vpack.c.b16 %v103, %v101
  %v124 = vpack.c.b16 %v106, %v104
  %v125 = vpack.c.b16 %v107, %v105
  %v126 = vpack.c.b16 %v110, %v108
  %v127 = vpack.c.b16 %v111, %v109
  %v154 = vunpack.c.l.b16 %v46
  %v155 = vunpack.c.l.b16 %v47
  %v156 = vunpack.c.l.b16 %v48
  %v157 = vunpack.c.l.b16 %v49
  %v158 = vunpack.c.l.b16 %v50
  %v159 = vunpack.c.l.b16 %v51
  %v160 = vunpack.c.l.b16 %v52
  %v161 = vunpack.c.l.b16 %v53
  %v162 = vunpack.c.l.b16 %v54
  %v163 = vunpack.c.l.b16 %v55
  %v164 = vunpack.c.l.b16 %v56
  %v165 = vunpack.c.l.b16 %v57
  %v166 = vunpack.c.l.b16 %v58
  %v167 = vunpack.c.l.b16 %v59
  %v168 = vunpack.c.l.b16 %v60
  %v169 = vunpack.c.l.b16 %v61
  %v170 = vunpack.c.l.b16 %v62
  %v171 = vunpack.c.l.b16 %v63
  %v172 = vpack.c.b16 %v155, %v154
  %v173 = vpack.c.b16 %v157, %v156
  %v174 = vpack.c.b16 %v159, %v158
  %v175 = vpack.c.b16 %v161, %v160
  %v176 = vpack.c.b16 %v163, %v162
  %v177 = vpack.c.b16 %v165, %v164
  %v178 = vpack.c.b16 %v167, %v166
  %v179 = vpack.c.b16 %v169, %v168
  %v180 = vpack.c.b16 %v171, %v170
  %vm190 = vcmask 130048
  %v192 = vsel %vm190, %v113, 0
  %v195 = vsel %vm190, %v115, 0
  %v198 = vsel %vm190, %v117, 0
  %v201 = vsel %vm190, %v119, 0
  %v204 = vsel %vm190, %v121, 0
  %v207 = vsel %vm190, %v123, 0
  %v210 = vsel %vm190, %v125, 0
  %v213 = vsel %vm190, %v127, 0
  %215 = vmatprep.subr.bf16.mxu0 0
  %216 = vmatpush1.bf16.msra.mxu0 %v172
  %217 = vmatprep.subr.bf16.mxu0 0
  %218 = vmatpush1.bf16.msra.mxu0 %v173
  %219 = vmatprep.subr.bf16.mxu0 0
  %220 = vmatpush1.bf16.msra.mxu0 %v174
  %221 = vmatprep.subr.bf16.mxu0 0
  %222 = vmatpush1.bf16.msra.mxu0 %v175
  %223 = vmatprep.subr.bf16.mxu0 0
  %224 = vmatpush1.bf16.msra.mxu0 %v176
  %225 = vmatprep.subr.bf16.mxu0 0
  %226 = vmatpush1.bf16.msra.mxu0 %v177
  %227 = vmatprep.subr.bf16.mxu0 0
  %228 = vmatpush1.bf16.msra.mxu0 %v178
  %229 = vmatprep.subr.bf16.mxu0 0
  %230 = vmatpush1.bf16.msra.mxu0 %v179
  %231 = vmatprep.subr.bf16.mxu0 0
  %232 = vmatpush1.bf16.msra.mxu0 %v180
  %233 = vmatprep.subr.bf16.mxu0 0
  %234 = vmatpush1.bf16.msra.mxu0 0
  %235 = vmatprep.subr.bf16.mxu0 0
  %236 = vmatpush1.bf16.msra.mxu0 0
  %237 = vmatprep.subr.bf16.mxu0 0
  %238 = vmatpush1.bf16.msra.mxu0 0
  %239 = vmatprep.subr.bf16.mxu0 0
  %240 = vmatpush1.bf16.msra.mxu0 0
  %241 = vmatprep.subr.bf16.mxu0 0
  %242 = vmatpush1.bf16.msra.mxu0 0
  %243 = vmatprep.subr.bf16.mxu0 0
  %244 = vmatpush1.bf16.msra.mxu0 0
  %245 = vmatprep.subr.bf16.mxu0 0
  %246 = vmatpush1.bf16.msra.mxu0 0
  %247 = vmatprep.mubr.bf16.mxu0 %v192
  %248 = vmatmul.mubr.bf16.gmra.mrb[0].mxu0 %v112
  %v249 = vpop.f32.mrb[0].mxu0
  %v250 = vadd.f32 0.0, %v249
  %v251 = vpop.f32.mrb[0].mxu0
  %v252 = vpop.f32.mrb[0].mxu0
  %v253 = vadd.f32 0.0, %v252
  %v254 = vpop.f32.mrb[0].mxu0
  %255 = vmatprep.mubr.bf16.mxu0 %v195
  %256 = vmatmul.mubr.bf16.gmra.mrb[0].mxu0 %v114
  %v257 = vpop.f32.mrb[0].mxu0
  %v258 = vadd.f32 0.0, %v257
  %v259 = vpop.f32.mrb[0].mxu0
  %v260 = vpop.f32.mrb[0].mxu0
  %v261 = vadd.f32 0.0, %v260
  %v262 = vpop.f32.mrb[0].mxu0
  %263 = vmatprep.mubr.bf16.mxu0 %v198
  %264 = vmatmul.mubr.bf16.gmra.mrb[0].mxu0 %v116
  %v265 = vpop.f32.mrb[0].mxu0
  %v266 = vadd.f32 0.0, %v265
  %v267 = vpop.f32.mrb[0].mxu0
  %v268 = vpop.f32.mrb[0].mxu0
  %v269 = vadd.f32 0.0, %v268
  %v270 = vpop.f32.mrb[0].mxu0
  %271 = vmatprep.mubr.bf16.mxu0 %v201
  %272 = vmatmul.mubr.bf16.gmra.mrb[0].mxu0 %v118
  %v273 = vpop.f32.mrb[0].mxu0
  %v274 = vadd.f32 0.0, %v273
  %v275 = vpop.f32.mrb[0].mxu0
  %v276 = vpop.f32.mrb[0].mxu0
  %v277 = vadd.f32 0.0, %v276
  %v278 = vpop.f32.mrb[0].mxu0
  %279 = vmatprep.mubr.bf16.mxu0 %v204
  %280 = vmatmul.mubr.bf16.gmra.mrb[0].mxu0 %v120
  %v281 = vpop.f32.mrb[0].mxu0
  %v282 = vadd.f32 0.0, %v281
  %v283 = vpop.f32.mrb[0].mxu0
  %v284 = vpop.f32.mrb[0].mxu0
  %v285 = vadd.f32 0.0, %v284
  %v286 = vpop.f32.mrb[0].mxu0
  %287 = vmatprep.mubr.bf16.mxu0 %v207
  %288 = vmatmul.mubr.bf16.gmra.mrb[0].mxu0 %v122
  %v289 = vpop.f32.mrb[0].mxu0
  %v290 = vadd.f32 0.0, %v289
  %v291 = vpop.f32.mrb[0].mxu0
  %v292 = vpop.f32.mrb[0].mxu0
  %v293 = vadd.f32 0.0, %v292
  %v294 = vpop.f32.mrb[0].mxu0
  %295 = vmatprep.mubr.bf16.mxu0 %v210
  %296 = vmatmul.mubr.bf16.gmra.mrb[0].mxu0 %v124
  %v297 = vpop.f32.mrb[0].mxu0
  %v298 = vadd.f32 0.0, %v297
  %v299 = vpop.f32.mrb[0].mxu0
  %v300 = vpop.f32.mrb[0].mxu0
  %v301 = vadd.f32 0.0, %v300
  %v302 = vpop.f32.mrb[0].mxu0
  %303 = vmatprep.mubr.bf16.mxu0 %v213
  %304 = vmatmul.mubr.bf16.gmra.mrb[0].mxu0 %v126
  %v305 = vpop.f32.mrb[0].mxu0
  %v306 = vadd.f32 0.0, %v305
  %v307 = vpop.f32.mrb[0].mxu0
  %v308 = vpop.f32.mrb[0].mxu0
  %v309 = vadd.f32 0.0, %v308
  %v310 = vpop.f32.mrb[0].mxu0
  %311 = vdwg.mxu0
  %v312 = vld [vmem:[%s3] sm:$0x1]
  %v313 = vld [vmem:[%s4] sm:$0x1]
  %v314 = vsel %vm190, %v250, 0.0
  %v315 = vsel %vm190, %v253, 0.0
  %v316 = vadd.f32 %v314, %v315
  %v317 = vsel %vm190, %v258, 0.0
  %v318 = vadd.f32 %v316, %v317
  %v319 = vsel %vm190, %v261, 0.0
  %v320 = vadd.f32 %v318, %v319
  %v321 = vsel %vm190, %v266, 0.0
  %v322 = vadd.f32 %v320, %v321
  %v323 = vsel %vm190, %v269, 0.0
  %v324 = vadd.f32 %v322, %v323
  %v325 = vsel %vm190, %v274, 0.0
  %v326 = vadd.f32 %v324, %v325
  %v327 = vsel %vm190, %v277, 0.0
  %v328 = vadd.f32 %v326, %v327
  %v329 = vsel %vm190, %v282, 0.0
  %v330 = vadd.f32 %v328, %v329
  %v331 = vsel %vm190, %v285, 0.0
  %v332 = vadd.f32 %v330, %v331
  %v333 = vsel %vm190, %v290, 0.0
  %v334 = vadd.f32 %v332, %v333
  %v335 = vsel %vm190, %v293, 0.0
  %v336 = vadd.f32 %v334, %v335
  %v337 = vsel %vm190, %v298, 0.0
  %v338 = vadd.f32 %v336, %v337
  %v339 = vsel %vm190, %v301, 0.0
  %v340 = vadd.f32 %v338, %v339
  %v341 = vsel %vm190, %v306, 0.0
  %v342 = vadd.f32 %v340, %v341
  %v343 = vsel %vm190, %v309, 0.0
  %v344 = vadd.f32 %v342, %v343
  %v345 = vrot.slane %v344, 4
  %v346 = vadd.f32 %v344, %v345
  %v347 = vrot.slane %v346, 2
  %v348 = vadd.f32 %v346, %v347
  %v349 = vrot.slane %v348, 1
  %v350 = vadd.f32 %v348, %v349
  %v351 = vmul.f32 %v350, 0.0078125
  %v352 = vsub.f32 %v250, %v351
  %v353 = vsub.f32 %v253, %v351
  %v354 = vsub.f32 %v258, %v351
  %v355 = vsub.f32 %v261, %v351
  %v356 = vsub.f32 %v266, %v351
  %v357 = vsub.f32 %v269, %v351
  %v358 = vsub.f32 %v274, %v351
  %v359 = vsub.f32 %v277, %v351
  %v360 = vsub.f32 %v282, %v351
  %v361 = vsub.f32 %v285, %v351
  %v362 = vsub.f32 %v290, %v351
  %v363 = vsub.f32 %v293, %v351
  %v364 = vsub.f32 %v298, %v351
  %v365 = vsub.f32 %v301, %v351
  %v366 = vsub.f32 %v306, %v351
  %v367 = vsub.f32 %v309, %v351
  %v368 = vmul.f32 %v352, %v352
  %v369 = vmul.f32 %v353, %v353
  %v370 = vmul.f32 %v354, %v354
  %v371 = vmul.f32 %v355, %v355
  %v372 = vmul.f32 %v356, %v356
  %v373 = vmul.f32 %v357, %v357
  %v374 = vmul.f32 %v358, %v358
  %v375 = vmul.f32 %v359, %v359
  %v376 = vmul.f32 %v360, %v360
  %v377 = vmul.f32 %v361, %v361
  %v378 = vmul.f32 %v362, %v362
  %v379 = vmul.f32 %v363, %v363
  %v380 = vmul.f32 %v364, %v364
  %v381 = vmul.f32 %v365, %v365
  %v382 = vmul.f32 %v366, %v366
  %v383 = vmul.f32 %v367, %v367
  %v384 = vsel %vm190, %v368, 0.0
  %v385 = vsel %vm190, %v369, 0.0
  %v386 = vadd.f32 %v384, %v385
  %v387 = vsel %vm190, %v370, 0.0
  %v388 = vadd.f32 %v386, %v387
  %v389 = vsel %vm190, %v371, 0.0
  %v390 = vadd.f32 %v388, %v389
  %v391 = vsel %vm190, %v372, 0.0
  %v392 = vadd.f32 %v390, %v391
  %v393 = vsel %vm190, %v373, 0.0
  %v394 = vadd.f32 %v392, %v393
  %v395 = vsel %vm190, %v374, 0.0
  %v396 = vadd.f32 %v394, %v395
  %v397 = vsel %vm190, %v375, 0.0
  %v398 = vadd.f32 %v396, %v397
  %v399 = vsel %vm190, %v376, 0.0
  %v400 = vadd.f32 %v398, %v399
  %v401 = vsel %vm190, %v377, 0.0
  %v402 = vadd.f32 %v400, %v401
  %v403 = vsel %vm190, %v378, 0.0
  %v404 = vadd.f32 %v402, %v403
  %v405 = vsel %vm190, %v379, 0.0
  %v406 = vadd.f32 %v404, %v405
  %v407 = vsel %vm190, %v380, 0.0
  %v408 = vadd.f32 %v406, %v407
  %v409 = vsel %vm190, %v381, 0.0
  %v410 = vadd.f32 %v408, %v409
  %v411 = vsel %vm190, %v382, 0.0
  %v412 = vadd.f32 %v410, %v411
  %v413 = vsel %vm190, %v383, 0.0
  %v414 = vadd.f32 %v412, %v413
  %v415 = vrot.slane %v414, 4
  %v416 = vadd.f32 %v414, %v415
  %v417 = vrot.slane %v416, 2
  %v418 = vadd.f32 %v416, %v417
  %v419 = vrot.slane %v418, 1
  %v420 = vadd.f32 %v418, %v419
  %v421 = vmul.f32 %v420, 0.0078125
  %v422 = vadd.f32 %v421, 1e-05
  %v423 = vrsqrt.pop %v422
  %v424 = vmul.f32 %v312, %v423
  %v426 = vlaneseq
  %v427 = vshrl.u32 %v426, 7
  %v428 = vsub.s32 0, %v427
  %v429 = vrot.slane %v424, %v428
  %v431 = vmul.f32 %v352, %v429
  %v432 = vmul.f32 %v353, %v429
  %v433 = vmul.f32 %v354, %v429
  %v434 = vmul.f32 %v355, %v429
  %v435 = vmul.f32 %v356, %v429
  %v436 = vmul.f32 %v357, %v429
  %v437 = vmul.f32 %v358, %v429
  %v438 = vmul.f32 %v359, %v429
  %v439 = vmul.f32 %v360, %v429
  %v440 = vmul.f32 %v361, %v429
  %v441 = vmul.f32 %v362, %v429
  %v442 = vmul.f32 %v363, %v429
  %v443 = vmul.f32 %v364, %v429
  %v444 = vmul.f32 %v365, %v429
  %v445 = vmul.f32 %v366, %v429
  %v446 = vmul.f32 %v367, %v429
  %v448 = vlaneseq
  %v449 = vshrl.u32 %v448, 7
  %v450 = vsub.s32 0, %v449
  %v451 = vrot.slane %v313, %v450
  %v453 = vadd.f32 %v431, %v451
  %v454 = vadd.f32 %v432, %v451
  %v455 = vadd.f32 %v433, %v451
  %v456 = vadd.f32 %v434, %v451
  %v457 = vadd.f32 %v435, %v451
  %v458 = vadd.f32 %v436, %v451
  %v459 = vadd.f32 %v437, %v451
  %v460 = vadd.f32 %v438, %v451
  %v461 = vadd.f32 %v439, %v451
  %v462 = vadd.f32 %v440, %v451
  %v463 = vadd.f32 %v441, %v451
  %v464 = vadd.f32 %v442, %v451
  %v465 = vadd.f32 %v443, %v451
  %v466 = vadd.f32 %v444, %v451
  %v467 = vadd.f32 %v445, %v451
  %v468 = vadd.f32 %v446, %v451
  %vm469 = vcmp.gt.f32.partialorder %v453, 0.0
  %vm470 = vcmp.gt.f32.partialorder %v454, 0.0
  %vm471 = vcmp.gt.f32.partialorder %v455, 0.0
  %vm472 = vcmp.gt.f32.partialorder %v456, 0.0
  %vm473 = vcmp.gt.f32.partialorder %v457, 0.0
  %vm474 = vcmp.gt.f32.partialorder %v458, 0.0
  %vm475 = vcmp.gt.f32.partialorder %v459, 0.0
  %vm476 = vcmp.gt.f32.partialorder %v460, 0.0
  %vm477 = vcmp.gt.f32.partialorder %v461, 0.0
  %vm478 = vcmp.gt.f32.partialorder %v462, 0.0
  %vm479 = vcmp.gt.f32.partialorder %v463, 0.0
  %vm480 = vcmp.gt.f32.partialorder %v464, 0.0
  %vm481 = vcmp.gt.f32.partialorder %v465, 0.0
  %vm482 = vcmp.gt.f32.partialorder %v466, 0.0
  %vm483 = vcmp.gt.f32.partialorder %v467, 0.0
  %vm484 = vcmp.gt.f32.partialorder %v468, 0.0
  %v485 = vmul.f32 %v453, 0.01
  %v486 = vmul.f32 %v454, 0.01
  %v487 = vmul.f32 %v455, 0.01
  %v488 = vmul.f32 %v456, 0.01
  %v489 = vmul.f32 %v457, 0.01
  %v490 = vmul.f32 %v458, 0.01
  %v491 = vmul.f32 %v459, 0.01
  %v492 = vmul.f32 %v460, 0.01
  %v493 = vmul.f32 %v461, 0.01
  %v494 = vmul.f32 %v462, 0.01
  %v495 = vmul.f32 %v463, 0.01
  %v496 = vmul.f32 %v464, 0.01
  %v497 = vmul.f32 %v465, 0.01
  %v498 = vmul.f32 %v466, 0.01
  %v499 = vmul.f32 %v467, 0.01
  %v500 = vmul.f32 %v468, 0.01
  %v501 = vsel %vm469, %v453, %v485
  %v502 = vsel %vm470, %v454, %v486
  %v503 = vsel %vm471, %v455, %v487
  %v504 = vsel %vm472, %v456, %v488
  %v505 = vsel %vm473, %v457, %v489
  %v506 = vsel %vm474, %v458, %v490
  %v507 = vsel %vm475, %v459, %v491
  %v508 = vsel %vm476, %v460, %v492
  %v509 = vsel %vm477, %v461, %v493
  %v510 = vsel %vm478, %v462, %v494
  %v511 = vsel %vm479, %v463, %v495
  %v512 = vsel %vm480, %v464, %v496
  %v513 = vsel %vm481, %v465, %v497
  %v514 = vsel %vm482, %v466, %v498
  %v515 = vsel %vm483, %v467, %v499
  %v516 = vsel %vm484, %v468, %v500
  %v517 = vpack.c.bf16 %v502, %v501
  %v518 = vpack.c.bf16 %v504, %v503
  %v519 = vpack.c.bf16 %v506, %v505
  %v520 = vpack.c.bf16 %v508, %v507
  %v521 = vpack.c.bf16 %v510, %v509
  %v522 = vpack.c.bf16 %v512, %v511
  %v523 = vpack.c.bf16 %v514, %v513
  %v524 = vpack.c.bf16 %v516, %v515
  %v525 = vld [vmem:[%s5] sm:$0xf]
  %v526 = vld [vmem:[%s5 + $0x4] sm:$0xf]
  %v529 = vunpack.c.l.b16 %v525
  %v530 = vunpack.c.l.b16 %v526
  %v531 = vpack.c.b16 %v530, %v529
  %v534 = vsel %vm190, %v517, 0
  %v537 = vsel %vm190, %v518, 0
  %v540 = vsel %vm190, %v519, 0
  %v543 = vsel %vm190, %v520, 0
  %v546 = vsel %vm190, %v521, 0
  %v549 = vsel %vm190, %v522, 0
  %v552 = vsel %vm190, %v523, 0
  %v555 = vsel %vm190, %v524, 0
  %557 = vmatprep.subr.bf16.mxu0 0
  %558 = vmatpush1.bf16.msra.mxu0 %v531
  %559 = vmatprep.subr.bf16.mxu0 0
  %560 = vmatpush1.bf16.msra.mxu0 0
  %561 = vmatprep.subr.bf16.mxu0 0
  %562 = vmatpush1.bf16.msra.mxu0 0
  %563 = vmatprep.subr.bf16.mxu0 0
  %564 = vmatpush1.bf16.msra.mxu0 0
  %565 = vmatprep.subr.bf16.mxu0 0
  %566 = vmatpush1.bf16.msra.mxu0 0
  %567 = vmatprep.subr.bf16.mxu0 0
  %568 = vmatpush1.bf16.msra.mxu0 0
  %569 = vmatprep.subr.bf16.mxu0 0
  %570 = vmatpush1.bf16.msra.mxu0 0
  %571 = vmatprep.subr.bf16.mxu0 0
  %572 = vmatpush1.bf16.msra.mxu0 0
  %573 = vmatprep.subr.bf16.mxu0 0
  %574 = vmatpush1.bf16.msra.mxu0 0
  %575 = vmatprep.subr.bf16.mxu0 0
  %576 = vmatpush1.bf16.msra.mxu0 0
  %577 = vmatprep.subr.bf16.mxu0 0
  %578 = vmatpush1.bf16.msra.mxu0 0
  %579 = vmatprep.subr.bf16.mxu0 0
  %580 = vmatpush1.bf16.msra.mxu0 0
  %581 = vmatprep.subr.bf16.mxu0 0
  %582 = vmatpush1.bf16.msra.mxu0 0
  %583 = vmatprep.subr.bf16.mxu0 0
  %584 = vmatpush1.bf16.msra.mxu0 0
  %585 = vmatprep.subr.bf16.mxu0 0
  %586 = vmatpush1.bf16.msra.mxu0 0
  %587 = vmatprep.subr.bf16.mxu0 0
  %588 = vmatpush1.bf16.msra.mxu0 0
  %589 = vmatprep.mubr.bf16.mxu0 0
  %590 = vmatmul.mubr.bf16.gmra.mrb[0].mxu0 %v534
  %v591 = vpop.f32.mrb[0].mxu0
  %v592 = vadd.f32 0.0, %v591
  %v593 = vpop.f32.mrb[0].mxu0
  %v594 = vpop.f32.mrb[0].mxu0
  %v595 = vadd.f32 0.0, %v594
  %v596 = vpop.f32.mrb[0].mxu0
  %597 = vmatprep.mubr.bf16.mxu0 0
  %598 = vmatmul.mubr.bf16.gmra.mrb[0].mxu0 %v537
  %v599 = vpop.f32.mrb[0].mxu0
  %v600 = vadd.f32 0.0, %v599
  %v601 = vpop.f32.mrb[0].mxu0
  %v602 = vpop.f32.mrb[0].mxu0
  %v603 = vadd.f32 0.0, %v602
  %v604 = vpop.f32.mrb[0].mxu0
  %605 = vmatprep.mubr.bf16.mxu0 0
  %606 = vmatmul.mubr.bf16.gmra.mrb[0].mxu0 %v540
  %v607 = vpop.f32.mrb[0].mxu0
  %v608 = vadd.f32 0.0, %v607
  %v609 = vpop.f32.mrb[0].mxu0
  %v610 = vpop.f32.mrb[0].mxu0
  %v611 = vadd.f32 0.0, %v610
  %v612 = vpop.f32.mrb[0].mxu0
  %613 = vmatprep.mubr.bf16.mxu0 0
  %614 = vmatmul.mubr.bf16.gmra.mrb[0].mxu0 %v543
  %v615 = vpop.f32.mrb[0].mxu0
  %v616 = vadd.f32 0.0, %v615
  %v617 = vpop.f32.mrb[0].mxu0
  %v618 = vpop.f32.mrb[0].mxu0
  %v619 = vadd.f32 0.0, %v618
  %v620 = vpop.f32.mrb[0].mxu0
  %621 = vmatprep.mubr.bf16.mxu0 0
  %622 = vmatmul.mubr.bf16.gmra.mrb[0].mxu0 %v546
  %v623 = vpop.f32.mrb[0].mxu0
  %v624 = vadd.f32 0.0, %v623
  %v625 = vpop.f32.mrb[0].mxu0
  %v626 = vpop.f32.mrb[0].mxu0
  %v627 = vadd.f32 0.0, %v626
  %v628 = vpop.f32.mrb[0].mxu0
  %629 = vmatprep.mubr.bf16.mxu0 0
  %630 = vmatmul.mubr.bf16.gmra.mrb[0].mxu0 %v549
  %v631 = vpop.f32.mrb[0].mxu0
  %v632 = vadd.f32 0.0, %v631
  %v633 = vpop.f32.mrb[0].mxu0
  %v634 = vpop.f32.mrb[0].mxu0
  %v635 = vadd.f32 0.0, %v634
  %v636 = vpop.f32.mrb[0].mxu0
  %637 = vmatprep.mubr.bf16.mxu0 0
  %638 = vmatmul.mubr.bf16.gmra.mrb[0].mxu0 %v552
  %v639 = vpop.f32.mrb[0].mxu0
  %v640 = vadd.f32 0.0, %v639
  %v641 = vpop.f32.mrb[0].mxu0
  %v642 = vpop.f32.mrb[0].mxu0
  %v643 = vadd.f32 0.0, %v642
  %v644 = vpop.f32.mrb[0].mxu0
  %645 = vmatprep.mubr.bf16.mxu0 0
  %646 = vmatmul.mubr.bf16.gmra.mrb[0].mxu0 %v555
  %v647 = vpop.f32.mrb[0].mxu0
  %v648 = vadd.f32 0.0, %v647
  %v649 = vpop.f32.mrb[0].mxu0
  %v650 = vpop.f32.mrb[0].mxu0
  %v651 = vadd.f32 0.0, %v650
  %v652 = vpop.f32.mrb[0].mxu0
  %653 = vdwg.mxu0
  %v654 = vld [vmem:[%s6] sm:$0x1]
  %v655 = vld [vmem:[%s7] sm:$0x1]
  %v656 = vsel %vm190, %v592, 0.0
  %v657 = vsel %vm190, %v595, 0.0
  %v658 = vadd.f32 %v656, %v657
  %v659 = vsel %vm190, %v600, 0.0
  %v660 = vadd.f32 %v658, %v659
  %v661 = vsel %vm190, %v603, 0.0
  %v662 = vadd.f32 %v660, %v661
  %v663 = vsel %vm190, %v608, 0.0
  %v664 = vadd.f32 %v662, %v663
  %v665 = vsel %vm190, %v611, 0.0
  %v666 = vadd.f32 %v664, %v665
  %v667 = vsel %vm190, %v616, 0.0
  %v668 = vadd.f32 %v666, %v667
  %v669 = vsel %vm190, %v619, 0.0
  %v670 = vadd.f32 %v668, %v669
  %v671 = vsel %vm190, %v624, 0.0
  %v672 = vadd.f32 %v670, %v671
  %v673 = vsel %vm190, %v627, 0.0
  %v674 = vadd.f32 %v672, %v673
  %v675 = vsel %vm190, %v632, 0.0
  %v676 = vadd.f32 %v674, %v675
  %v677 = vsel %vm190, %v635, 0.0
  %v678 = vadd.f32 %v676, %v677
  %v679 = vsel %vm190, %v640, 0.0
  %v680 = vadd.f32 %v678, %v679
  %v681 = vsel %vm190, %v643, 0.0
  %v682 = vadd.f32 %v680, %v681
  %v683 = vsel %vm190, %v648, 0.0
  %v684 = vadd.f32 %v682, %v683
  %v685 = vsel %vm190, %v651, 0.0
  %v686 = vadd.f32 %v684, %v685
  %v687 = vrot.slane %v686, 4
  %v688 = vadd.f32 %v686, %v687
  %v689 = vrot.slane %v688, 2
  %v690 = vadd.f32 %v688, %v689
  %v691 = vrot.slane %v690, 1
  %v692 = vadd.f32 %v690, %v691
  %v693 = vmul.f32 %v692, 0.0078125
  %v694 = vsub.f32 %v592, %v693
  %v695 = vsub.f32 %v595, %v693
  %v696 = vsub.f32 %v600, %v693
  %v697 = vsub.f32 %v603, %v693
  %v698 = vsub.f32 %v608, %v693
  %v699 = vsub.f32 %v611, %v693
  %v700 = vsub.f32 %v616, %v693
  %v701 = vsub.f32 %v619, %v693
  %v702 = vsub.f32 %v624, %v693
  %v703 = vsub.f32 %v627, %v693
  %v704 = vsub.f32 %v632, %v693
  %v705 = vsub.f32 %v635, %v693
  %v706 = vsub.f32 %v640, %v693
  %v707 = vsub.f32 %v643, %v693
  %v708 = vsub.f32 %v648, %v693
  %v709 = vsub.f32 %v651, %v693
  %v710 = vmul.f32 %v694, %v694
  %v711 = vmul.f32 %v695, %v695
  %v712 = vmul.f32 %v696, %v696
  %v713 = vmul.f32 %v697, %v697
  %v714 = vmul.f32 %v698, %v698
  %v715 = vmul.f32 %v699, %v699
  %v716 = vmul.f32 %v700, %v700
  %v717 = vmul.f32 %v701, %v701
  %v718 = vmul.f32 %v702, %v702
  %v719 = vmul.f32 %v703, %v703
  %v720 = vmul.f32 %v704, %v704
  %v721 = vmul.f32 %v705, %v705
  %v722 = vmul.f32 %v706, %v706
  %v723 = vmul.f32 %v707, %v707
  %v724 = vmul.f32 %v708, %v708
  %v725 = vmul.f32 %v709, %v709
  %v726 = vsel %vm190, %v710, 0.0
  %v727 = vsel %vm190, %v711, 0.0
  %v728 = vadd.f32 %v726, %v727
  %v729 = vsel %vm190, %v712, 0.0
  %v730 = vadd.f32 %v728, %v729
  %v731 = vsel %vm190, %v713, 0.0
  %v732 = vadd.f32 %v730, %v731
  %v733 = vsel %vm190, %v714, 0.0
  %v734 = vadd.f32 %v732, %v733
  %v735 = vsel %vm190, %v715, 0.0
  %v736 = vadd.f32 %v734, %v735
  %v737 = vsel %vm190, %v716, 0.0
  %v738 = vadd.f32 %v736, %v737
  %v739 = vsel %vm190, %v717, 0.0
  %v740 = vadd.f32 %v738, %v739
  %v741 = vsel %vm190, %v718, 0.0
  %v742 = vadd.f32 %v740, %v741
  %v743 = vsel %vm190, %v719, 0.0
  %v744 = vadd.f32 %v742, %v743
  %v745 = vsel %vm190, %v720, 0.0
  %v746 = vadd.f32 %v744, %v745
  %v747 = vsel %vm190, %v721, 0.0
  %v748 = vadd.f32 %v746, %v747
  %v749 = vsel %vm190, %v722, 0.0
  %v750 = vadd.f32 %v748, %v749
  %v751 = vsel %vm190, %v723, 0.0
  %v752 = vadd.f32 %v750, %v751
  %v753 = vsel %vm190, %v724, 0.0
  %v754 = vadd.f32 %v752, %v753
  %v755 = vsel %vm190, %v725, 0.0
  %v756 = vadd.f32 %v754, %v755
  %v757 = vrot.slane %v756, 4
  %v758 = vadd.f32 %v756, %v757
  %v759 = vrot.slane %v758, 2
  %v760 = vadd.f32 %v758, %v759
  %v761 = vrot.slane %v760, 1
  %v762 = vadd.f32 %v760, %v761
  %v763 = vmul.f32 %v762, 0.0078125
  %v764 = vadd.f32 %v763, 1e-05
  %v765 = vrsqrt.pop %v764
  %v766 = vmul.f32 %v654, %v765
  %v768 = vlaneseq
  %v769 = vshrl.u32 %v768, 7
  %v770 = vsub.s32 0, %v769
  %v771 = vrot.slane %v766, %v770
  %v773 = vmul.f32 %v694, %v771
  %v774 = vmul.f32 %v695, %v771
  %v775 = vmul.f32 %v696, %v771
  %v776 = vmul.f32 %v697, %v771
  %v777 = vmul.f32 %v698, %v771
  %v778 = vmul.f32 %v699, %v771
  %v779 = vmul.f32 %v700, %v771
  %v780 = vmul.f32 %v701, %v771
  %v781 = vmul.f32 %v702, %v771
  %v782 = vmul.f32 %v703, %v771
  %v783 = vmul.f32 %v704, %v771
  %v784 = vmul.f32 %v705, %v771
  %v785 = vmul.f32 %v706, %v771
  %v786 = vmul.f32 %v707, %v771
  %v787 = vmul.f32 %v708, %v771
  %v788 = vmul.f32 %v709, %v771
  %v790 = vlaneseq
  %v791 = vshrl.u32 %v790, 7
  %v792 = vsub.s32 0, %v791
  %v793 = vrot.slane %v655, %v792
  %v795 = vadd.f32 %v773, %v793
  %v796 = vadd.f32 %v774, %v793
  %v797 = vadd.f32 %v775, %v793
  %v798 = vadd.f32 %v776, %v793
  %v799 = vadd.f32 %v777, %v793
  %v800 = vadd.f32 %v778, %v793
  %v801 = vadd.f32 %v779, %v793
  %v802 = vadd.f32 %v780, %v793
  %v803 = vadd.f32 %v781, %v793
  %v804 = vadd.f32 %v782, %v793
  %v805 = vadd.f32 %v783, %v793
  %v806 = vadd.f32 %v784, %v793
  %v807 = vadd.f32 %v785, %v793
  %v808 = vadd.f32 %v786, %v793
  %v809 = vadd.f32 %v787, %v793
  %v810 = vadd.f32 %v788, %v793
  %v811 = vld [vmem:[%s0] sm:$0xff]
  %v812 = vld [vmem:[%s0 + $0x8] sm:$0xff]
  %v813 = vld [vmem:[%s0 + $0x10] sm:$0xff]
  %v814 = vld [vmem:[%s0 + $0x18] sm:$0xff]
  %v815 = vld [vmem:[%s0 + $0x20] sm:$0xff]
  %v816 = vld [vmem:[%s0 + $0x28] sm:$0xff]
  %v817 = vld [vmem:[%s0 + $0x30] sm:$0xff]
  %v818 = vld [vmem:[%s0 + $0x38] sm:$0xff]
  %v819 = vld [vmem:[%s0 + $0x40] sm:$0xff]
  %v820 = vld [vmem:[%s0 + $0x48] sm:$0xff]
  %v821 = vld [vmem:[%s0 + $0x50] sm:$0xff]
  %v822 = vld [vmem:[%s0 + $0x58] sm:$0xff]
  %v823 = vld [vmem:[%s0 + $0x60] sm:$0xff]
  %v824 = vld [vmem:[%s0 + $0x68] sm:$0xff]
  %v825 = vld [vmem:[%s0 + $0x70] sm:$0xff]
  %v826 = vld [vmem:[%s0 + $0x78] sm:$0xff]
  %v827 = vadd.f32 %v811, %v795
  %v828 = vadd.f32 %v812, %v796
  %v829 = vadd.f32 %v813, %v797
  %v830 = vadd.f32 %v814, %v798
  %v831 = vadd.f32 %v815, %v799
  %v832 = vadd.f32 %v816, %v800
  %v833 = vadd.f32 %v817, %v801
  %v834 = vadd.f32 %v818, %v802
  %v835 = vadd.f32 %v819, %v803
  %v836 = vadd.f32 %v820, %v804
  %v837 = vadd.f32 %v821, %v805
  %v838 = vadd.f32 %v822, %v806
  %v839 = vadd.f32 %v823, %v807
  %v840 = vadd.f32 %v824, %v808
  %v841 = vadd.f32 %v825, %v809
  %v842 = vadd.f32 %v826, %v810
  %843 = vst.msk [vmem:[%s8] sm:$0xff] %vm190, %v827
  %844 = vst.msk [vmem:[%s8 + $0x8] sm:$0xff] %vm190, %v828
  %845 = vst.msk [vmem:[%s8 + $0x10] sm:$0xff] %vm190, %v829
  %846 = vst.msk [vmem:[%s8 + $0x18] sm:$0xff] %vm190, %v830
  %847 = vst.msk [vmem:[%s8 + $0x20] sm:$0xff] %vm190, %v831
  %848 = vst.msk [vmem:[%s8 + $0x28] sm:$0xff] %vm190, %v832
  %849 = vst.msk [vmem:[%s8 + $0x30] sm:$0xff] %vm190, %v833
  %850 = vst.msk [vmem:[%s8 + $0x38] sm:$0xff] %vm190, %v834
  %851 = vst.msk [vmem:[%s8 + $0x40] sm:$0xff] %vm190, %v835
  %852 = vst.msk [vmem:[%s8 + $0x48] sm:$0xff] %vm190, %v836
  %853 = vst.msk [vmem:[%s8 + $0x50] sm:$0xff] %vm190, %v837
  %854 = vst.msk [vmem:[%s8 + $0x58] sm:$0xff] %vm190, %v838
  %855 = vst.msk [vmem:[%s8 + $0x60] sm:$0xff] %vm190, %v839
  %856 = vst.msk [vmem:[%s8 + $0x68] sm:$0xff] %vm190, %v840
  %857 = vst.msk [vmem:[%s8 + $0x70] sm:$0xff] %vm190, %v841
  %858 = vst.msk [vmem:[%s8 + $0x78] sm:$0xff] %vm190, %v842
  // Predicated region
  $region34: #{encoder_forward.15} parent=0 // pred_check
    _
  $region35: #{encoder_forward.15} parent=0 // pred_check_branch
    %860 = sbr.rel (0) target = $region37
  $region36: #{encoder_forward.15} parent=0 // pred_region
    _
  $region37: #{encoder_forward.15} parent=0 // pred_fallthru
    _
  // Predicated region
  $region38: #{encoder_forward.15} parent=0 // pred_check
    _
  $region39: #{encoder_forward.15} parent=0 // pred_check_branch
    %862 = sbr.rel (0) target = $region41
  $region40: #{encoder_forward.15} parent=0 // pred_region
    _
  $region41: #{encoder_forward.15} parent=0 // pred_fallthru
    _

// kernel: encoder_forward.19
$region0: #{encoder_forward.19}
  #allocation0 [shape = 'u32[]', space=smem, size = 0x4, offset = 0x4, fixed_abs, tag = 'smem constant byte address 0x4 - core index']
  #allocation1 [shape = 'u32[144,128]{1,0:T(1,128)}', space=vmem, size = 0x12000, scoped, tag = 'internal scratch']
  %s0 = inlined_call_operand.vmem [shape: bf16[32,144], index: 0, kind: input, shape index: {}]
  %s1 = inlined_call_operand.vmem [shape: bf16[144,32], index: 1, kind: input, shape index: {}]
  %s2 = inlined_call_operand.vmem [shape: f32[1,32], index: 2, kind: input, shape index: {}]
  %s3 = inlined_call_operand.vmem [shape: f32[1,32], index: 3, kind: input, shape index: {}]
  %s4 = inlined_call_operand.vmem [shape: f32[32,32], index: 4, kind: output, shape index: {}]
  %s5 = sld [smem:[#allocation0]]
  $region26: #{encoder_forward.19} parent=0
    _
  %s7 = ssub.s32 1, %s5
  %s8 = scalar_select 0, %s7, %s5
  // Predicated region
  $region2: #{encoder_forward.19} parent=0 // pred_check
    _
  $region3: #{encoder_forward.19} parent=0 // pred_check_branch
    %10 = sbr.rel (0) target = $region5
  $region4: #{encoder_forward.19} parent=0 // pred_region
    _
  $region5: #{encoder_forward.19} parent=0 // pred_fallthru
    _
  // Predicated region
  $region6: #{encoder_forward.19} parent=0 // pred_check
    _
  $region7: #{encoder_forward.19} parent=0 // pred_check_branch
    %12 = sbr.rel (0) target = $region9
  $region8: #{encoder_forward.19} parent=0 // pred_region
    _
  $region9: #{encoder_forward.19} parent=0 // pred_fallthru
    _
  // Predicated region
  $region10: #{encoder_forward.19} parent=0 // pred_check
    _
  $region11: #{encoder_forward.19} parent=0 // pred_check_branch
    %14 = sbr.rel (0) target = $region13
  $region12: #{encoder_forward.19} parent=0 // pred_region
    _
  $region13: #{encoder_forward.19} parent=0 // pred_fallthru
    _
  // Predicated region
  $region14: #{encoder_forward.19} parent=0 // pred_check
    _
  $region15: #{encoder_forward.19} parent=0 // pred_check_branch
    %16 = sbr.rel (0) target = $region17
  $region16: #{encoder_forward.19} parent=0 // pred_region
    _
  $region17: #{encoder_forward.19} parent=0 // pred_fallthru
    _
  %v18 = vld [vmem:[%s0] sm:$0xff]
  %v19 = vld [vmem:[%s0 + $0x8] sm:$0xff]
  %v20 = vld [vmem:[%s0 + $0x10] sm:$0xff]
  %v21 = vld [vmem:[%s0 + $0x18] sm:$0xff]
  %v22 = vld [vmem:[%s1] sm:$0xf]
  %v23 = vld [vmem:[%s1 + $0x4] sm:$0xf]
  %v24 = vld [vmem:[%s1 + $0x8] sm:$0xf]
  %v25 = vld [vmem:[%s1 + $0xc] sm:$0xf]
  %v26 = vld [vmem:[%s1 + $0x10] sm:$0xf]
  %v27 = vld [vmem:[%s1 + $0x14] sm:$0xf]
  %v28 = vld [vmem:[%s1 + $0x18] sm:$0xf]
  %v29 = vld [vmem:[%s1 + $0x1c] sm:$0xf]
  %v30 = vld [vmem:[%s1 + $0x20] sm:$0xf]
  %v31 = vld [vmem:[%s1 + $0x24] sm:$0xf]
  %v32 = vld [vmem:[%s1 + $0x28] sm:$0xf]
  %v33 = vld [vmem:[%s1 + $0x2c] sm:$0xf]
  %v34 = vld [vmem:[%s1 + $0x30] sm:$0xf]
  %v35 = vld [vmem:[%s1 + $0x34] sm:$0xf]
  %v36 = vld [vmem:[%s1 + $0x38] sm:$0xf]
  %v37 = vld [vmem:[%s1 + $0x3c] sm:$0xf]
  %v38 = vld [vmem:[%s1 + $0x40] sm:$0xf]
  %v39 = vld [vmem:[%s1 + $0x44] sm:$0xf]
  %v44 = vunpack.c.l.b16 %v18
  %v45 = vunpack.c.h.b16 %v18
  %v46 = vunpack.c.l.b16 %v19
  %v47 = vunpack.c.h.b16 %v19
  %v48 = vunpack.c.l.b16 %v20
  %v49 = vunpack.c.h.b16 %v20
  %v50 = vunpack.c.l.b16 %v21
  %v51 = vunpack.c.h.b16 %v21
  %v52 = vpack.c.b16 %v46, %v44
  %v53 = vpack.c.b16 %v47, %v45
  %v54 = vpack.c.b16 %v50, %v48
  %v55 = vpack.c.b16 %v51, %v49
  %v76 = vunpack.c.l.b16 %v22
  %v77 = vunpack.c.l.b16 %v23
  %v78 = vunpack.c.l.b16 %v24
  %v79 = vunpack.c.l.b16 %v25
  %v80 = vunpack.c.l.b16 %v26
  %v81 = vunpack.c.l.b16 %v27
  %v82 = vunpack.c.l.b16 %v28
  %v83 = vunpack.c.l.b16 %v29
  %v84 = vunpack.c.l.b16 %v30
  %v85 = vunpack.c.l.b16 %v31
  %v86 = vunpack.c.l.b16 %v32
  %v87 = vunpack.c.l.b16 %v33
  %v88 = vunpack.c.l.b16 %v34
  %v89 = vunpack.c.l.b16 %v35
  %v90 = vunpack.c.l.b16 %v36
  %v91 = vunpack.c.l.b16 %v37
  %v92 = vunpack.c.l.b16 %v38
  %v93 = vunpack.c.l.b16 %v39
  %v94 = vpack.c.b16 %v77, %v76
  %v95 = vpack.c.b16 %v79, %v78
  %v96 = vpack.c.b16 %v81, %v80
  %v97 = vpack.c.b16 %v83, %v82
  %v98 = vpack.c.b16 %v85, %v84
  %v99 = vpack.c.b16 %v87, %v86
  %v100 = vpack.c.b16 %v89, %v88
  %v101 = vpack.c.b16 %v91, %v90
  %v102 = vpack.c.b16 %v93, %v92
  %vm112 = vcmask 130048
  %v114 = vsel %vm112, %v53, 0
  %v117 = vsel %vm112, %v55, 0
  %119 = vmatprep.subr.bf16.mxu0 0
  %120 = vmatpush1.bf16.msra.mxu0 %v94
  %121 = vmatprep.subr.bf16.mxu0 0
  %122 = vmatpush1.bf16.msra.mxu0 %v95
  %123 = vmatprep.subr.bf16.mxu0 0
  %124 = vmatpush1.bf16.msra.mxu0 %v96
  %125 = vmatprep.subr.bf16.mxu0 0
  %126 = vmatpush1.bf16.msra.mxu0 %v97
  %127 = vmatprep.subr.bf16.mxu0 0
  %128 = vmatpush1.bf16.msra.mxu0 %v98
  %129 = vmatprep.subr.bf16.mxu0 0
  %130 = vmatpush1.bf16.msra.mxu0 %v99
  %131 = vmatprep.subr.bf16.mxu0 0
  %132 = vmatpush1.bf16.msra.mxu0 %v100
  %133 = vmatprep.subr.bf16.mxu0 0
  %134 = vmatpush1.bf16.msra.mxu0 %v101
  %135 = vmatprep.subr.bf16.mxu0 0
  %136 = vmatpush1.bf16.msra.mxu0 %v102
  %137 = vmatprep.subr.bf16.mxu0 0
  %138 = vmatpush1.bf16.msra.mxu0 0
  %139 = vmatprep.subr.bf16.mxu0 0
  %140 = vmatpush1.bf16.msra.mxu0 0
  %141 = vmatprep.subr.bf16.mxu0 0
  %142 = vmatpush1.bf16.msra.mxu0 0
  %143 = vmatprep.subr.bf16.mxu0 0
  %144 = vmatpush1.bf16.msra.mxu0 0
  %145 = vmatprep.subr.bf16.mxu0 0
  %146 = vmatpush1.bf16.msra.mxu0 0
  %147 = vmatprep.subr.bf16.mxu0 0
  %148 = vmatpush1.bf16.msra.mxu0 0
  %149 = vmatprep.subr.bf16.mxu0 0
  %150 = vmatpush1.bf16.msra.mxu0 0
  %151 = vmatprep.mubr.bf16.mxu0 %v114
  %152 = vmatmul.mubr.bf16.gmra.mrb[0].mxu0 %v52
  %v153 = vpop.f32.mrb[0].mxu0
  %v154 = vadd.f32 0.0, %v153
  %v155 = vpop.f32.mrb[0].mxu0
  %v156 = vpop.f32.mrb[0].mxu0
  %v157 = vadd.f32 0.0, %v156
  %v158 = vpop.f32.mrb[0].mxu0
  %159 = vmatprep.mubr.bf16.mxu0 %v117
  %160 = vmatmul.mubr.bf16.gmra.mrb[0].mxu0 %v54
  %v161 = vpop.f32.mrb[0].mxu0
  %v162 = vadd.f32 0.0, %v161
  %v163 = vpop.f32.mrb[0].mxu0
  %v164 = vpop.f32.mrb[0].mxu0
  %v165 = vadd.f32 0.0, %v164
  %v166 = vpop.f32.mrb[0].mxu0
  %167 = vdwg.mxu0
  %v168 = vld [vmem:[%s2] sm:$0x1]
  %v169 = vld [vmem:[%s3] sm:$0x1]
  %vm170 = vcmask 261120
  %v171 = vsel %vm170, %v154, 0.0
  %v172 = vsel %vm170, %v157, 0.0
  %v173 = vadd.f32 %v171, %v172
  %v174 = vsel %vm170, %v162, 0.0
  %v175 = vadd.f32 %v173, %v174
  %v176 = vsel %vm170, %v165, 0.0
  %v177 = vadd.f32 %v175, %v176
  %v178 = vrot.slane %v177, 4
  %v179 = vadd.f32 %v177, %v178
  %v180 = vrot.slane %v179, 2
  %v181 = vadd.f32 %v179, %v180
  %v182 = vrot.slane %v181, 1
  %v183 = vadd.f32 %v181, %v182
  %v184 = vmul.f32 %v183, 0.03125
  %v185 = vsub.f32 %v154, %v184
  %v186 = vsub.f32 %v157, %v184
  %v187 = vsub.f32 %v162, %v184
  %v188 = vsub.f32 %v165, %v184
  %v189 = vmul.f32 %v185, %v185
  %v190 = vmul.f32 %v186, %v186
  %v191 = vmul.f32 %v187, %v187
  %v192 = vmul.f32 %v188, %v188
  %v193 = vsel %vm170, %v189, 0.0
  %v194 = vsel %vm170, %v190, 0.0
  %v195 = vadd.f32 %v193, %v194
  %v196 = vsel %vm170, %v191, 0.0
  %v197 = vadd.f32 %v195, %v196
  %v198 = vsel %vm170, %v192, 0.0
  %v199 = vadd.f32 %v197, %v198
  %v200 = vrot.slane %v199, 4
  %v201 = vadd.f32 %v199, %v200
  %v202 = vrot.slane %v201, 2
  %v203 = vadd.f32 %v201, %v202
  %v204 = vrot.slane %v203, 1
  %v205 = vadd.f32 %v203, %v204
  %v206 = vmul.f32 %v205, 0.03125
  %v207 = vadd.f32 %v206, 1e-05
  %v208 = vrsqrt.pop %v207
  %v209 = vmul.f32 %v168, %v208
  %v211 = vlaneseq
  %v212 = vshrl.u32 %v211, 7
  %v213 = vsub.s32 0, %v212
  %v214 = vrot.slane %v209, %v213
  %v216 = vmul.f32 %v185, %v214
  %v217 = vmul.f32 %v186, %v214
  %v218 = vmul.f32 %v187, %v214
  %v219 = vmul.f32 %v188, %v214
  %v221 = vlaneseq
  %v222 = vshrl.u32 %v221, 7
  %v223 = vsub.s32 0, %v222
  %v224 = vrot.slane %v169, %v223
  %v226 = vadd.f32 %v216, %v224
  %v227 = vadd.f32 %v217, %v224
  %v228 = vadd.f32 %v218, %v224
  %v229 = vadd.f32 %v219, %v224
  %vm230 = vcmp.gt.f32.partialorder %v226, 0.0
  %vm231 = vcmp.gt.f32.partialorder %v227, 0.0
  %vm232 = vcmp.gt.f32.partialorder %v228, 0.0
  %vm233 = vcmp.gt.f32.partialorder %v229, 0.0
  %v234 = vmul.f32 %v226, 0.01
  %v235 = vmul.f32 %v227, 0.01
  %v236 = vmul.f32 %v228, 0.01
  %v237 = vmul.f32 %v229, 0.01
  %v238 = vsel %vm230, %v226, %v234
  %v239 = vsel %vm231, %v227, %v235
  %v240 = vsel %vm232, %v228, %v236
  %v241 = vsel %vm233, %v229, %v237
  %242 = vst.msk [vmem:[%s4] sm:$0xff] %vm170, %v238
  %243 = vst.msk [vmem:[%s4 + $0x8] sm:$0xff] %vm170, %v239
  %244 = vst.msk [vmem:[%s4 + $0x10] sm:$0xff] %vm170, %v240
  %245 = vst.msk [vmem:[%s4 + $0x18] sm:$0xff] %vm170, %v241
  // Predicated region
  $region18: #{encoder_forward.19} parent=0 // pred_check
    _
  $region19: #{encoder_forward.19} parent=0 // pred_check_branch
    %247 = sbr.rel (0) target = $region21
  $region20: #{encoder_forward.19} parent=0 // pred_region
    _
  $region21: #{encoder_forward.19} parent=0 // pred_fallthru
    _
  // Predicated region
  $region22: #{encoder_forward.19} parent=0 // pred_check
    _
  $region23: #{encoder_forward.19} parent=0 // pred_check_branch
    %249 = sbr.rel (0) target = $region25
  $region24: #{encoder_forward.19} parent=0 // pred_region
    _
  $region25: #{encoder_forward.19} parent=0 // pred_fallthru
    _

// kernel: encoder_forward.20
$region0: #{encoder_forward.20}
  #allocation0 [shape = 'u32[]', space=smem, size = 0x4, offset = 0x4, fixed_abs, tag = 'smem constant byte address 0x4 - core index']
  #allocation1 [shape = 'u32[144,128]{1,0:T(1,128)}', space=vmem, size = 0x12000, scoped, tag = 'internal scratch']
  %s0 = inlined_call_operand.vmem [shape: bf16[8,288], index: 0, kind: input, shape index: {}]
  %s1 = inlined_call_operand.vmem [shape: bf16[288,64], index: 1, kind: input, shape index: {}]
  %s2 = inlined_call_operand.vmem [shape: f32[1,64], index: 2, kind: input, shape index: {}]
  %s3 = inlined_call_operand.vmem [shape: f32[1,64], index: 3, kind: input, shape index: {}]
  %s4 = inlined_call_operand.vmem [shape: f32[8,64], index: 4, kind: output, shape index: {}]
  %s5 = sld [smem:[#allocation0]]
  $region26: #{encoder_forward.20} parent=0
    _
  %s7 = ssub.s32 1, %s5
  %s8 = scalar_select 0, %s7, %s5
  // Predicated region
  $region2: #{encoder_forward.20} parent=0 // pred_check
    _
  $region3: #{encoder_forward.20} parent=0 // pred_check_branch
    %10 = sbr.rel (0) target = $region5
  $region4: #{encoder_forward.20} parent=0 // pred_region
    _
  $region5: #{encoder_forward.20} parent=0 // pred_fallthru
    _
  // Predicated region
  $region6: #{encoder_forward.20} parent=0 // pred_check
    _
  $region7: #{encoder_forward.20} parent=0 // pred_check_branch
    %12 = sbr.rel (0) target = $region9
  $region8: #{encoder_forward.20} parent=0 // pred_region
    _
  $region9: #{encoder_forward.20} parent=0 // pred_fallthru
    _
  // Predicated region
  $region10: #{encoder_forward.20} parent=0 // pred_check
    _
  $region11: #{encoder_forward.20} parent=0 // pred_check_branch
    %14 = sbr.rel (0) target = $region13
  $region12: #{encoder_forward.20} parent=0 // pred_region
    _
  $region13: #{encoder_forward.20} parent=0 // pred_fallthru
    _
  // Predicated region
  $region14: #{encoder_forward.20} parent=0 // pred_check
    _
  $region15: #{encoder_forward.20} parent=0 // pred_check_branch
    %16 = sbr.rel (0) target = $region17
  $region16: #{encoder_forward.20} parent=0 // pred_region
    _
  $region17: #{encoder_forward.20} parent=0 // pred_fallthru
    _
  %v18 = vld [vmem:[%s0] sm:$0xff]
  %v19 = vld [vmem:[%s0 + $0x8] sm:$0xf]
  %v20 = vld [vmem:[%s1] sm:$0xf]
  %v21 = vld [vmem:[%s1 + $0x4] sm:$0xf]
  %v22 = vld [vmem:[%s1 + $0x8] sm:$0xf]
  %v23 = vld [vmem:[%s1 + $0xc] sm:$0xf]
  %v24 = vld [vmem:[%s1 + $0x10] sm:$0xf]
  %v25 = vld [vmem:[%s1 + $0x14] sm:$0xf]
  %v26 = vld [vmem:[%s1 + $0x18] sm:$0xf]
  %v27 = vld [vmem:[%s1 + $0x1c] sm:$0xf]
  %v28 = vld [vmem:[%s1 + $0x20] sm:$0xf]
  %v29 = vld [vmem:[%s1 + $0x24] sm:$0xf]
  %v30 = vld [vmem:[%s1 + $0x28] sm:$0xf]
  %v31 = vld [vmem:[%s1 + $0x2c] sm:$0xf]
  %v32 = vld [vmem:[%s1 + $0x30] sm:$0xf]
  %v33 = vld [vmem:[%s1 + $0x34] sm:$0xf]
  %v34 = vld [vmem:[%s1 + $0x38] sm:$0xf]
  %v35 = vld [vmem:[%s1 + $0x3c] sm:$0xf]
  %v36 = vld [vmem:[%s1 + $0x40] sm:$0xf]
  %v37 = vld [vmem:[%s1 + $0x44] sm:$0xf]
  %v38 = vld [vmem:[%s1 + $0x48] sm:$0xf]
  %v39 = vld [vmem:[%s1 + $0x4c] sm:$0xf]
  %v40 = vld [vmem:[%s1 + $0x50] sm:$0xf]
  %v41 = vld [vmem:[%s1 + $0x54] sm:$0xf]
  %v42 = vld [vmem:[%s1 + $0x58] sm:$0xf]
  %v43 = vld [vmem:[%s1 + $0x5c] sm:$0xf]
  %v44 = vld [vmem:[%s1 + $0x60] sm:$0xf]
  %v45 = vld [vmem:[%s1 + $0x64] sm:$0xf]
  %v46 = vld [vmem:[%s1 + $0x68] sm:$0xf]
  %v47 = vld [vmem:[%s1 + $0x6c] sm:$0xf]
  %v48 = vld [vmem:[%s1 + $0x70] sm:$0xf]
  %v49 = vld [vmem:[%s1 + $0x74] sm:$0xf]
  %v50 = vld [vmem:[%s1 + $0x78] sm:$0xf]
  %v51 = vld [vmem:[%s1 + $0x7c] sm:$0xf]
  %v52 = vld [vmem:[%s1 + $0x80] sm:$0xf]
  %v53 = vld [vmem:[%s1 + $0x84] sm:$0xf]
  %v54 = vld [vmem:[%s1 + $0x88] sm:$0xf]
  %v55 = vld [vmem:[%s1 + $0x8c] sm:$0xf]
  %v58 = vunpack.c.l.b16 %v18
  %v59 = vunpack.c.h.b16 %v18
  %v60 = vunpack.c.l.b16 %v19
  %v61 = vpack.c.b16 %v58, %v58
  %v62 = vpack.c.b16 %v59, %v59
  %v63 = vpack.c.b16 %v60, %v60
  %v102 = vunpack.c.l.b16 %v20
  %v103 = vunpack.c.l.b16 %v21
  %v104 = vunpack.c.l.b16 %v22
  %v105 = vunpack.c.l.b16 %v23
  %v106 = vunpack.c.l.b16 %v24
  %v107 = vunpack.c.l.b16 %v25
  %v108 = vunpack.c.l.b16 %v26
  %v109 = vunpack.c.l.b16 %v27
  %v110 = vunpack.c.l.b16 %v28
  %v111 = vunpack.c.l.b16 %v29
  %v112 = vunpack.c.l.b16 %v30
  %v113 = vunpack.c.l.b16 %v31
  %v114 = vunpack.c.l.b16 %v32
  %v115 = vunpack.c.l.b16 %v33
  %v116 = vunpack.c.l.b16 %v34
  %v117 = vunpack.c.l.b16 %v35
  %v118 = vunpack.c.l.b16 %v36
  %v119 = vunpack.c.l.b16 %v37
  %v120 = vunpack.c.l.b16 %v38
  %v121 = vunpack.c.l.b16 %v39
  %v122 = vunpack.c.l.b16 %v40
  %v123 = vunpack.c.l.b16 %v41
  %v124 = vunpack.c.l.b16 %v42
  %v125 = vunpack.c.l.b16 %v43
  %v126 = vunpack.c.l.b16 %v44
  %v127 = vunpack.c.l.b16 %v45
  %v128 = vunpack.c.l.b16 %v46
  %v129 = vunpack.c.l.b16 %v47
  %v130 = vunpack.c.l.b16 %v48
  %v131 = vunpack.c.l.b16 %v49
  %v132 = vunpack.c.l.b16 %v50
  %v133 = vunpack.c.l.b16 %v51
  %v134 = vunpack.c.l.b16 %v52
  %v135 = vunpack.c.l.b16 %v53
  %v136 = vunpack.c.l.b16 %v54
  %v137 = vunpack.c.l.b16 %v55
  %v138 = vpack.c.b16 %v103, %v102
  %v139 = vpack.c.b16 %v105, %v104
  %v140 = vpack.c.b16 %v107, %v106
  %v141 = vpack.c.b16 %v109, %v108
  %v142 = vpack.c.b16 %v111, %v110
  %v143 = vpack.c.b16 %v113, %v112
  %v144 = vpack.c.b16 %v115, %v114
  %v145 = vpack.c.b16 %v117, %v116
  %v146 = vpack.c.b16 %v119, %v118
  %v147 = vpack.c.b16 %v121, %v120
  %v148 = vpack.c.b16 %v123, %v122
  %v149 = vpack.c.b16 %v125, %v124
  %v150 = vpack.c.b16 %v127, %v126
  %v151 = vpack.c.b16 %v129, %v128
  %v152 = vpack.c.b16 %v131, %v130
  %v153 = vpack.c.b16 %v133, %v132
  %v154 = vpack.c.b16 %v135, %v134
  %v155 = vpack.c.b16 %v137, %v136
  %vm174 = vcmask 261120
  %v176 = vsel %vm174, %v63, 0
  %178 = vmatprep.subr.bf16.mxu0 0
  %179 = vmatpush1.bf16.msra.mxu0 %v138
  %180 = vmatprep.subr.bf16.mxu0 0
  %181 = vmatpush1.bf16.msra.mxu0 %v139
  %182 = vmatprep.subr.bf16.mxu0 0
  %183 = vmatpush1.bf16.msra.mxu0 %v140
  %184 = vmatprep.subr.bf16.mxu0 0
  %185 = vmatpush1.bf16.msra.mxu0 %v141
  %186 = vmatprep.subr.bf16.mxu0 0
  %187 = vmatpush1.bf16.msra.mxu0 %v142
  %188 = vmatprep.subr.bf16.mxu0 0
  %189 = vmatpush1.bf16.msra.mxu0 %v143
  %190 = vmatprep.subr.bf16.mxu0 0
  %191 = vmatpush1.bf16.msra.mxu0 %v144
  %192 = vmatprep.subr.bf16.mxu0 0
  %193 = vmatpush1.bf16.msra.mxu0 %v145
  %194 = vmatprep.subr.bf16.mxu0 0
  %195 = vmatpush1.bf16.msra.mxu0 %v146
  %196 = vmatprep.subr.bf16.mxu0 0
  %197 = vmatpush1.bf16.msra.mxu0 %v147
  %198 = vmatprep.subr.bf16.mxu0 0
  %199 = vmatpush1.bf16.msra.mxu0 %v148
  %200 = vmatprep.subr.bf16.mxu0 0
  %201 = vmatpush1.bf16.msra.mxu0 %v149
  %202 = vmatprep.subr.bf16.mxu0 0
  %203 = vmatpush1.bf16.msra.mxu0 %v150
  %204 = vmatprep.subr.bf16.mxu0 0
  %205 = vmatpush1.bf16.msra.mxu0 %v151
  %206 = vmatprep.subr.bf16.mxu0 0
  %207 = vmatpush1.bf16.msra.mxu0 %v152
  %208 = vmatprep.subr.bf16.mxu0 0
  %209 = vmatpush1.bf16.msra.mxu0 %v153
  %210 = vmatprep.mubr.bf16.mxu0 %v62
  %211 = vmatmul.mubr.bf16.gmra.mrb[0].mxu0 %v61
  %v212 = vpop.f32.mrb[0].mxu0
  %v213 = vadd.f32 0.0, %v212
  %v214 = vpop.f32.mrb[0].mxu0
  %v215 = vpop.f32.mrb[0].mxu0
  %v216 = vpop.f32.mrb[0].mxu0
  %217 = vdwg.mxu0
  %218 = vmatprep.subr.bf16.mxu0 0
  %219 = vmatpush1.bf16.msra.mxu0 %v154
  %220 = vmatprep.subr.bf16.mxu0 0
  %221 = vmatpush1.bf16.msra.mxu0 %v155
  %222 = vmatprep.subr.bf16.mxu0 0
  %223 = vmatpush1.bf16.msra.mxu0 0
  %224 = vmatprep.subr.bf16.mxu0 0
  %225 = vmatpush1.bf16.msra.mxu0 0
  %226 = vmatprep.subr.bf16.mxu0 0
  %227 = vmatpush1.bf16.msra.mxu0 0
  %228 = vmatprep.subr.bf16.mxu0 0
  %229 = vmatpush1.bf16.msra.mxu0 0
  %230 = vmatprep.subr.bf16.mxu0 0
  %231 = vmatpush1.bf16.msra.mxu0 0
  %232 = vmatprep.subr.bf16.mxu0 0
  %233 = vmatpush1.bf16.msra.mxu0 0
  %234 = vmatprep.subr.bf16.mxu0 0
  %235 = vmatpush1.bf16.msra.mxu0 0
  %236 = vmatprep.subr.bf16.mxu0 0
  %237 = vmatpush1.bf16.msra.mxu0 0
  %238 = vmatprep.subr.bf16.mxu0 0
  %239 = vmatpush1.bf16.msra.mxu0 0
  %240 = vmatprep.subr.bf16.mxu0 0
  %241 = vmatpush1.bf16.msra.mxu0 0
  %242 = vmatprep.subr.bf16.mxu0 0
  %243 = vmatpush1.bf16.msra.mxu0 0
  %244 = vmatprep.subr.bf16.mxu0 0
  %245 = vmatpush1.bf16.msra.mxu0 0
  %246 = vmatprep.subr.bf16.mxu0 0
  %247 = vmatpush1.bf16.msra.mxu0 0
  %248 = vmatprep.subr.bf16.mxu0 0
  %249 = vmatpush1.bf16.msra.mxu0 0
  %250 = vmatprep.mubr.bf16.mxu0 0
  %251 = vmatmul.mubr.bf16.gmra.mrb[0].mxu0 %v176
  %v252 = vpop.f32.mrb[0].mxu0
  %v253 = vadd.f32 %v213, %v252
  %v254 = vpop.f32.mrb[0].mxu0
  %v255 = vpop.f32.mrb[0].mxu0
  %v256 = vpop.f32.mrb[0].mxu0
  %257 = vdwg.mxu0
  %v258 = vld [vmem:[%s2] sm:$0x1]
  %v259 = vld [vmem:[%s3] sm:$0x1]
  %vm260 = vcmask 523264
  %v261 = vsel %vm260, %v253, 0.0
  %v262 = vrot.slane %v261, 4
  %v263 = vadd.f32 %v261, %v262
  %v264 = vrot.slane %v263, 2
  %v265 = vadd.f32 %v263, %v264
  %v266 = vrot.slane %v265, 1
  %v267 = vadd.f32 %v265, %v266
  %v268 = vmul.f32 %v267, 0.125
  %v269 = vsub.f32 %v253, %v268
  %v270 = vmul.f32 %v269, %v269
  %v271 = vsel %vm260, %v270, 0.0
  %v272 = vrot.slane %v271, 4
  %v273 = vadd.f32 %v271, %v272
  %v274 = vrot.slane %v273, 2
  %v275 = vadd.f32 %v273, %v274
  %v276 = vrot.slane %v275, 1
  %v277 = vadd.f32 %v275, %v276
  %v278 = vmul.f32 %v277, 0.125
  %v279 = vadd.f32 %v278, 1e-05
  %v280 = vrsqrt.pop %v279
  %v281 = vmul.f32 %v258, %v280
  %v283 = vlaneseq
  %v284 = vshrl.u32 %v283, 7
  %v285 = vsub.s32 0, %v284
  %v286 = vrot.slane %v281, %v285
  %v288 = vmul.f32 %v269, %v286
  %v290 = vlaneseq
  %v291 = vshrl.u32 %v290, 7
  %v292 = vsub.s32 0, %v291
  %v293 = vrot.slane %v259, %v292
  %v295 = vadd.f32 %v288, %v293
  %296 = vst.msk [vmem:[%s4] sm:$0xff] %vm260, %v295
  // Predicated region
  $region18: #{encoder_forward.20} parent=0 // pred_check
    _
  $region19: #{encoder_forward.20} parent=0 // pred_check_branch
    %298 = sbr.rel (0) target = $region21
  $region20: #{encoder_forward.20} parent=0 // pred_region
    _
  $region21: #{encoder_forward.20} parent=0 // pred_fallthru
    _
  // Predicated region
  $region22: #{encoder_forward.20} parent=0 // pred_check
    _
  $region23: #{encoder_forward.20} parent=0 // pred_check_branch
    %300 = sbr.rel (0) target = $region25
  $region24: #{encoder_forward.20} parent=0 // pred_region
    _
  $region25: #{encoder_forward.20} parent=0 // pred_fallthru
    _

// kernel: encoder_forward.21
$region0: #{encoder_forward.21}
  #allocation0 [shape = 'u32[]', space=smem, size = 0x4, offset = 0x4, fixed_abs, tag = 'smem constant byte address 0x4 - core index']
  #allocation1 [shape = 'u32[144,128]{1,0:T(1,128)}', space=vmem, size = 0x12000, scoped, tag = 'internal scratch']
  %s0 = inlined_call_operand.vmem [shape: f32[8,64], index: 0, kind: input, shape index: {}]
  %s1 = inlined_call_operand.vmem [shape: bf16[8,576], index: 1, kind: input, shape index: {}]
  %s2 = inlined_call_operand.vmem [shape: bf16[576,64], index: 2, kind: input, shape index: {}]
  %s3 = inlined_call_operand.vmem [shape: f32[1,64], index: 3, kind: input, shape index: {}]
  %s4 = inlined_call_operand.vmem [shape: f32[1,64], index: 4, kind: input, shape index: {}]
  %s5 = inlined_call_operand.vmem [shape: bf16[64,64], index: 5, kind: input, shape index: {}]
  %s6 = inlined_call_operand.vmem [shape: f32[1,64], index: 6, kind: input, shape index: {}]
  %s7 = inlined_call_operand.vmem [shape: f32[1,64], index: 7, kind: input, shape index: {}]
  %s8 = inlined_call_operand.vmem [shape: f32[8,64], index: 8, kind: output, shape index: {}]
  %s9 = sld [smem:[#allocation0]]
  $region42: #{encoder_forward.21} parent=0
    _
  %s11 = ssub.s32 1, %s9
  %s12 = scalar_select 0, %s11, %s9
  // Predicated region
  $region2: #{encoder_forward.21} parent=0 // pred_check
    _
  $region3: #{encoder_forward.21} parent=0 // pred_check_branch
    %14 = sbr.rel (0) target = $region5
  $region4: #{encoder_forward.21} parent=0 // pred_region
    _
  $region5: #{encoder_forward.21} parent=0 // pred_fallthru
    _
  // Predicated region
  $region6: #{encoder_forward.21} parent=0 // pred_check
    _
  $region7: #{encoder_forward.21} parent=0 // pred_check_branch
    %16 = sbr.rel (0) target = $region9
  $region8: #{encoder_forward.21} parent=0 // pred_region
    _
  $region9: #{encoder_forward.21} parent=0 // pred_fallthru
    _
  // Predicated region
  $region10: #{encoder_forward.21} parent=0 // pred_check
    _
  $region11: #{encoder_forward.21} parent=0 // pred_check_branch
    %18 = sbr.rel (0) target = $region13
  $region12: #{encoder_forward.21} parent=0 // pred_region
    _
  $region13: #{encoder_forward.21} parent=0 // pred_fallthru
    _
  // Predicated region
  $region14: #{encoder_forward.21} parent=0 // pred_check
    _
  $region15: #{encoder_forward.21} parent=0 // pred_check_branch
    %20 = sbr.rel (0) target = $region17
  $region16: #{encoder_forward.21} parent=0 // pred_region
    _
  $region17: #{encoder_forward.21} parent=0 // pred_fallthru
    _
  // Predicated region
  $region18: #{encoder_forward.21} parent=0 // pred_check
    _
  $region19: #{encoder_forward.21} parent=0 // pred_check_branch
    %22 = sbr.rel (0) target = $region21
  $region20: #{encoder_forward.21} parent=0 // pred_region
    _
  $region21: #{encoder_forward.21} parent=0 // pred_fallthru
    _
  // Predicated region
  $region22: #{encoder_forward.21} parent=0 // pred_check
    _
  $region23: #{encoder_forward.21} parent=0 // pred_check_branch
    %24 = sbr.rel (0) target = $region25
  $region24: #{encoder_forward.21} parent=0 // pred_region
    _
  $region25: #{encoder_forward.21} parent=0 // pred_fallthru
    _
  // Predicated region
  $region26: #{encoder_forward.21} parent=0 // pred_check
    _
  $region27: #{encoder_forward.21} parent=0 // pred_check_branch
    %26 = sbr.rel (0) target = $region29
  $region28: #{encoder_forward.21} parent=0 // pred_region
    _
  $region29: #{encoder_forward.21} parent=0 // pred_fallthru
    _
  // Predicated region
  $region30: #{encoder_forward.21} parent=0 // pred_check
    _
  $region31: #{encoder_forward.21} parent=0 // pred_check_branch
    %28 = sbr.rel (0) target = $region33
  $region32: #{encoder_forward.21} parent=0 // pred_region
    _
  $region33: #{encoder_forward.21} parent=0 // pred_fallthru
    _
  %v30 = vld [vmem:[%s1] sm:$0xff]
  %v31 = vld [vmem:[%s1 + $0x8] sm:$0xff]
  %v32 = vld [vmem:[%s1 + $0x10] sm:$0xf]
  %v33 = vld [vmem:[%s2] sm:$0xf]
  %v34 = vld [vmem:[%s2 + $0x4] sm:$0xf]
  %v35 = vld [vmem:[%s2 + $0x8] sm:$0xf]
  %v36 = vld [vmem:[%s2 + $0xc] sm:$0xf]
  %v37 = vld [vmem:[%s2 + $0x10] sm:$0xf]
  %v38 = vld [vmem:[%s2 + $0x14] sm:$0xf]
  %v39 = vld [vmem:[%s2 + $0x18] sm:$0xf]
  %v40 = vld [vmem:[%s2 + $0x1c] sm:$0xf]
  %v41 = vld [vmem:[%s2 + $0x20] sm:$0xf]
  %v42 = vld [vmem:[%s2 + $0x24] sm:$0xf]
  %v43 = vld [vmem:[%s2 + $0x28] sm:$0xf]
  %v44 = vld [vmem:[%s2 + $0x2c] sm:$0xf]
  %v45 = vld [vmem:[%s2 + $0x30] sm:$0xf]
  %v46 = vld [vmem:[%s2 + $0x34] sm:$0xf]
  %v47 = vld [vmem:[%s2 + $0x38] sm:$0xf]
  %v48 = vld [vmem:[%s2 + $0x3c] sm:$0xf]
  %v49 = vld [vmem:[%s2 + $0x40] sm:$0xf]
  %v50 = vld [vmem:[%s2 + $0x44] sm:$0xf]
  %v51 = vld [vmem:[%s2 + $0x48] sm:$0xf]
  %v52 = vld [vmem:[%s2 + $0x4c] sm:$0xf]
  %v53 = vld [vmem:[%s2 + $0x50] sm:$0xf]
  %v54 = vld [vmem:[%s2 + $0x54] sm:$0xf]
  %v55 = vld [vmem:[%s2 + $0x58] sm:$0xf]
  %v56 = vld [vmem:[%s2 + $0x5c] sm:$0xf]
  %v57 = vld [vmem:[%s2 + $0x60] sm:$0xf]
  %v58 = vld [vmem:[%s2 + $0x64] sm:$0xf]
  %v59 = vld [vmem:[%s2 + $0x68] sm:$0xf]
  %v60 = vld [vmem:[%s2 + $0x6c] sm:$0xf]
  %v61 = vld [vmem:[%s2 + $0x70] sm:$0xf]
  %v62 = vld [vmem:[%s2 + $0x74] sm:$0xf]
  %v63 = vld [vmem:[%s2 + $0x78] sm:$0xf]
  %v64 = vld [vmem:[%s2 + $0x7c] sm:$0xf]
  %v65 = vld [vmem:[%s2 + $0x80] sm:$0xf]
  %v66 = vld [vmem:[%s2 + $0x84] sm:$0xf]
  %v67 = vld [vmem:[%s2 + $0x88] sm:$0xf]
  %v68 = vld [vmem:[%s2 + $0x8c] sm:$0xf]
  %v69 = vld [vmem:[%s2 + $0x90] sm:$0xf]
  %v70 = vld [vmem:[%s2 + $0x94] sm:$0xf]
  %v71 = vld [vmem:[%s2 + $0x98] sm:$0xf]
  %v72 = vld [vmem:[%s2 + $0x9c] sm:$0xf]
  %v73 = vld [vmem:[%s2 + $0xa0] sm:$0xf]
  %v74 = vld [vmem:[%s2 + $0xa4] sm:$0xf]
  %v75 = vld [vmem:[%s2 + $0xa8] sm:$0xf]
  %v76 = vld [vmem:[%s2 + $0xac] sm:$0xf]
  %v77 = vld [vmem:[%s2 + $0xb0] sm:$0xf]
  %v78 = vld [vmem:[%s2 + $0xb4] sm:$0xf]
  %v79 = vld [vmem:[%s2 + $0xb8] sm:$0xf]
  %v80 = vld [vmem:[%s2 + $0xbc] sm:$0xf]
  %v81 = vld [vmem:[%s2 + $0xc0] sm:$0xf]
  %v82 = vld [vmem:[%s2 + $0xc4] sm:$0xf]
  %v83 = vld [vmem:[%s2 + $0xc8] sm:$0xf]
  %v84 = vld [vmem:[%s2 + $0xcc] sm:$0xf]
  %v85 = vld [vmem:[%s2 + $0xd0] sm:$0xf]
  %v86 = vld [vmem:[%s2 + $0xd4] sm:$0xf]
  %v87 = vld [vmem:[%s2 + $0xd8] sm:$0xf]
  %v88 = vld [vmem:[%s2 + $0xdc] sm:$0xf]
  %v89 = vld [vmem:[%s2 + $0xe0] sm:$0xf]
  %v90 = vld [vmem:[%s2 + $0xe4] sm:$0xf]
  %v91 = vld [vmem:[%s2 + $0xe8] sm:$0xf]
  %v92 = vld [vmem:[%s2 + $0xec] sm:$0xf]
  %v93 = vld [vmem:[%s2 + $0xf0] sm:$0xf]
  %v94 = vld [vmem:[%s2 + $0xf4] sm:$0xf]
  %v95 = vld [vmem:[%s2 + $0xf8] sm:$0xf]
  %v96 = vld [vmem:[%s2 + $0xfc] sm:$0xf]
  %v97 = vld [vmem:[%s2 + $0x100] sm:$0xf]
  %v98 = vld [vmem:[%s2 + $0x104] sm:$0xf]
  %v99 = vld [vmem:[%s2 + $0x108] sm:$0xf]
  %v100 = vld [vmem:[%s2 + $0x10c] sm:$0xf]
  %v101 = vld [vmem:[%s2 + $0x110] sm:$0xf]
  %v102 = vld [vmem:[%s2 + $0x114] sm:$0xf]
  %v103 = vld [vmem:[%s2 + $0x118] sm:$0xf]
  %v104 = vld [vmem:[%s2 + $0x11c] sm:$0xf]
  %v108 = vunpack.c.l.b16 %v30
  %v109 = vunpack.c.h.b16 %v30
  %v110 = vunpack.c.l.b16 %v31
  %v111 = vunpack.c.h.b16 %v31
  %v112 = vunpack.c.l.b16 %v32
  %v113 = vpack.c.b16 %v108, %v108
  %v114 = vpack.c.b16 %v109, %v109
  %v115 = vpack.c.b16 %v110, %v110
  %v116 = vpack.c.b16 %v111, %v111
  %v117 = vpack.c.b16 %v112, %v112
  %v194 = vunpack.c.l.b16 %v33
  %v195 = vunpack.c.l.b16 %v34
  %v196 = vunpack.c.l.b16 %v35
  %v197 = vunpack.c.l.b16 %v36
  %v198 = vunpack.c.l.b16 %v37
  %v199 = vunpack.c.l.b16 %v38
  %v200 = vunpack.c.l.b16 %v39
  %v201 = vunpack.c.l.b16 %v40
  %v202 = vunpack.c.l.b16 %v41
  %v203 = vunpack.c.l.b16 %v42
  %v204 = vunpack.c.l.b16 %v43
  %v205 = vunpack.c.l.b16 %v44
  %v206 = vunpack.c.l.b16 %v45
  %v207 = vunpack.c.l.b16 %v46
  %v208 = vunpack.c.l.b16 %v47
  %v209 = vunpack.c.l.b16 %v48
  %v210 = vunpack.c.l.b16 %v49
  %v211 = vunpack.c.l.b16 %v50
  %v212 = vunpack.c.l.b16 %v51
  %v213 = vunpack.c.l.b16 %v52
  %v214 = vunpack.c.l.b16 %v53
  %v215 = vunpack.c.l.b16 %v54
  %v216 = vunpack.c.l.b16 %v55
  %v217 = vunpack.c.l.b16 %v56
  %v218 = vunpack.c.l.b16 %v57
  %v219 = vunpack.c.l.b16 %v58
  %v220 = vunpack.c.l.b16 %v59
  %v221 = vunpack.c.l.b16 %v60
  %v222 = vunpack.c.l.b16 %v61
  %v223 = vunpack.c.l.b16 %v62
  %v224 = vunpack.c.l.b16 %v63
  %v225 = vunpack.c.l.b16 %v64
  %v226 = vunpack.c.l.b16 %v65
  %v227 = vunpack.c.l.b16 %v66
  %v228 = vunpack.c.l.b16 %v67
  %v229 = vunpack.c.l.b16 %v68
  %v230 = vunpack.c.l.b16 %v69
  %v231 = vunpack.c.l.b16 %v70
  %v232 = vunpack.c.l.b16 %v71
  %v233 = vunpack.c.l.b16 %v72
  %v234 = vunpack.c.l.b16 %v73
  %v235 = vunpack.c.l.b16 %v74
  %v236 = vunpack.c.l.b16 %v75
  %v237 = vunpack.c.l.b16 %v76
  %v238 = vunpack.c.l.b16 %v77
  %v239 = vunpack.c.l.b16 %v78
  %v240 = vunpack.c.l.b16 %v79
  %v241 = vunpack.c.l.b16 %v80
  %v242 = vunpack.c.l.b16 %v81
  %v243 = vunpack.c.l.b16 %v82
  %v244 = vunpack.c.l.b16 %v83
  %v245 = vunpack.c.l.b16 %v84
  %v246 = vunpack.c.l.b16 %v85
  %v247 = vunpack.c.l.b16 %v86
  %v248 = vunpack.c.l.b16 %v87
  %v249 = vunpack.c.l.b16 %v88
  %v250 = vunpack.c.l.b16 %v89
  %v251 = vunpack.c.l.b16 %v90
  %v252 = vunpack.c.l.b16 %v91
  %v253 = vunpack.c.l.b16 %v92
  %v254 = vunpack.c.l.b16 %v93
  %v255 = vunpack.c.l.b16 %v94
  %v256 = vunpack.c.l.b16 %v95
  %v257 = vunpack.c.l.b16 %v96
  %v258 = vunpack.c.l.b16 %v97
  %v259 = vunpack.c.l.b16 %v98
  %v260 = vunpack.c.l.b16 %v99
  %v261 = vunpack.c.l.b16 %v100
  %v262 = vunpack.c.l.b16 %v101
  %v263 = vunpack.c.l.b16 %v102
  %v264 = vunpack.c.l.b16 %v103
  %v265 = vunpack.c.l.b16 %v104
  %v266 = vpack.c.b16 %v195, %v194
  %v267 = vpack.c.b16 %v197, %v196
  %v268 = vpack.c.b16 %v199, %v198
  %v269 = vpack.c.b16 %v201, %v200
  %v270 = vpack.c.b16 %v203, %v202
  %v271 = vpack.c.b16 %v205, %v204
  %v272 = vpack.c.b16 %v207, %v206
  %v273 = vpack.c.b16 %v209, %v208
  %v274 = vpack.c.b16 %v211, %v210
  %v275 = vpack.c.b16 %v213, %v212
  %v276 = vpack.c.b16 %v215, %v214
  %v277 = vpack.c.b16 %v217, %v216
  %v278 = vpack.c.b16 %v219, %v218
  %v279 = vpack.c.b16 %v221, %v220
  %v280 = vpack.c.b16 %v223, %v222
  %v281 = vpack.c.b16 %v225, %v224
  %v282 = vpack.c.b16 %v227, %v226
  %v283 = vpack.c.b16 %v229, %v228
  %v284 = vpack.c.b16 %v231, %v230
  %v285 = vpack.c.b16 %v233, %v232
  %v286 = vpack.c.b16 %v235, %v234
  %v287 = vpack.c.b16 %v237, %v236
  %v288 = vpack.c.b16 %v239, %v238
  %v289 = vpack.c.b16 %v241, %v240
  %v290 = vpack.c.b16 %v243, %v242
  %v291 = vpack.c.b16 %v245, %v244
  %v292 = vpack.c.b16 %v247, %v246
  %v293 = vpack.c.b16 %v249, %v248
  %v294 = vpack.c.b16 %v251, %v250
  %v295 = vpack.c.b16 %v253, %v252
  %v296 = vpack.c.b16 %v255, %v254
  %v297 = vpack.c.b16 %v257, %v256
  %v298 = vpack.c.b16 %v259, %v258
  %v299 = vpack.c.b16 %v261, %v260
  %v300 = vpack.c.b16 %v263, %v262
  %v301 = vpack.c.b16 %v265, %v264
  %vm338 = vcmask 523264
  %v340 = vsel %vm338, %v117, 0
  %342 = vmatprep.subr.bf16.mxu0 0
  %343 = vmatpush1.bf16.msra.mxu0 %v266
  %344 = vmatprep.subr.bf16.mxu0 0
  %345 = vmatpush1.bf16.msra.mxu0 %v267
  %346 = vmatprep.subr.bf16.mxu0 0
  %347 = vmatpush1.bf16.msra.mxu0 %v268
  %348 = vmatprep.subr.bf16.mxu0 0
  %349 = vmatpush1.bf16.msra.mxu0 %v269
  %350 = vmatprep.subr.bf16.mxu0 0
  %351 = vmatpush1.bf16.msra.mxu0 %v270
  %352 = vmatprep.subr.bf16.mxu0 0
  %353 = vmatpush1.bf16.msra.mxu0 %v271
  %354 = vmatprep.subr.bf16.mxu0 0
  %355 = vmatpush1.bf16.msra.mxu0 %v272
  %356 = vmatprep.subr.bf16.mxu0 0
  %357 = vmatpush1.bf16.msra.mxu0 %v273
  %358 = vmatprep.subr.bf16.mxu0 0
  %359 = vmatpush1.bf16.msra.mxu0 %v274
  %360 = vmatprep.subr.bf16.mxu0 0
  %361 = vmatpush1.bf16.msra.mxu0 %v275
  %362 = vmatprep.subr.bf16.mxu0 0
  %363 = vmatpush1.bf16.msra.mxu0 %v276
  %364 = vmatprep.subr.bf16.mxu0 0
  %365 = vmatpush1.bf16.msra.mxu0 %v277
  %366 = vmatprep.subr.bf16.mxu0 0
  %367 = vmatpush1.bf16.msra.mxu0 %v278
  %368 = vmatprep.subr.bf16.mxu0 0
  %369 = vmatpush1.bf16.msra.mxu0 %v279
  %370 = vmatprep.subr.bf16.mxu0 0
  %371 = vmatpush1.bf16.msra.mxu0 %v280
  %372 = vmatprep.subr.bf16.mxu0 0
  %373 = vmatpush1.bf16.msra.mxu0 %v281
  %374 = vmatprep.mubr.bf16.mxu0 %v114
  %375 = vmatmul.mubr.bf16.gmra.mrb[0].mxu0 %v113
  %v376 = vpop.f32.mrb[0].mxu0
  %v377 = vadd.f32 0.0, %v376
  %v378 = vpop.f32.mrb[0].mxu0
  %v379 = vpop.f32.mrb[0].mxu0
  %v380 = vpop.f32.mrb[0].mxu0
  %381 = vdwg.mxu0
  %382 = vmatprep.subr.bf16.mxu0 0
  %383 = vmatpush1.bf16.msra.mxu0 %v282
  %384 = vmatprep.subr.bf16.mxu0 0
  %385 = vmatpush1.bf16.msra.mxu0 %v283
  %386 = vmatprep.subr.bf16.mxu0 0
  %387 = vmatpush1.bf16.msra.mxu0 %v284
  %388 = vmatprep.subr.bf16.mxu0 0
  %389 = vmatpush1.bf16.msra.mxu0 %v285
  %390 = vmatprep.subr.bf16.mxu0 0
  %391 = vmatpush1.bf16.msra.mxu0 %v286
  %392 = vmatprep.subr.bf16.mxu0 0
  %393 = vmatpush1.bf16.msra.mxu0 %v287
  %394 = vmatprep.subr.bf16.mxu0 0
  %395 = vmatpush1.bf16.msra.mxu0 %v288
  %396 = vmatprep.subr.bf16.mxu0 0
  %397 = vmatpush1.bf16.msra.mxu0 %v289
  %398 = vmatprep.subr.bf16.mxu0 0
  %399 = vmatpush1.bf16.msra.mxu0 %v290
  %400 = vmatprep.subr.bf16.mxu0 0
  %401 = vmatpush1.bf16.msra.mxu0 %v291
  %402 = vmatprep.subr.bf16.mxu0 0
  %403 = vmatpush1.bf16.msra.mxu0 %v292
  %404 = vmatprep.subr.bf16.mxu0 0
  %405 = vmatpush1.bf16.msra.mxu0 %v293
  %406 = vmatprep.subr.bf16.mxu0 0
  %407 = vmatpush1.bf16.msra.mxu0 %v294
  %408 = vmatprep.subr.bf16.mxu0 0
  %409 = vmatpush1.bf16.msra.mxu0 %v295
  %410 = vmatprep.subr.bf16.mxu0 0
  %411 = vmatpush1.bf16.msra.mxu0 %v296
  %412 = vmatprep.subr.bf16.mxu0 0
  %413 = vmatpush1.bf16.msra.mxu0 %v297
  %414 = vmatprep.mubr.bf16.mxu0 %v116
  %415 = vmatmul.mubr.bf16.gmra.mrb[0].mxu0 %v115
  %v416 = vpop.f32.mrb[0].mxu0
  %v417 = vadd.f32 %v377, %v416
  %v418 = vpop.f32.mrb[0].mxu0
  %v419 = vpop.f32.mrb[0].mxu0
  %v420 = vpop.f32.mrb[0].mxu0
  %421 = vdwg.mxu0
  %422 = vmatprep.subr.bf16.mxu0 0
  %423 = vmatpush1.bf16.msra.mxu0 %v298
  %424 = vmatprep.subr.bf16.mxu0 0
  %425 = vmatpush1.bf16.msra.mxu0 %v299
  %426 = vmatprep.subr.bf16.mxu0 0
  %427 = vmatpush1.bf16.msra.mxu0 %v300
  %428 = vmatprep.subr.bf16.mxu0 0
  %429 = vmatpush1.bf16.msra.mxu0 %v301
  %430 = vmatprep.subr.bf16.mxu0 0
  %431 = vmatpush1.bf16.msra.mxu0 0
  %432 = vmatprep.subr.bf16.mxu0 0
  %433 = vmatpush1.bf16.msra.mxu0 0
  %434 = vmatprep.subr.bf16.mxu0 0
  %435 = vmatpush1.bf16.msra.mxu0 0
  %436 = vmatprep.subr.bf16.mxu0 0
  %437 = vmatpush1.bf16.msra.mxu0 0
  %438 = vmatprep.subr.bf16.mxu0 0
  %439 = vmatpush1.bf16.msra.mxu0 0
  %440 = vmatprep.subr.bf16.mxu0 0
  %441 = vmatpush1.bf16.msra.mxu0 0
  %442 = vmatprep.subr.bf16.mxu0 0
  %443 = vmatpush1.bf16.msra.mxu0 0
  %444 = vmatprep.subr.bf16.mxu0 0
  %445 = vmatpush1.bf16.msra.mxu0 0
  %446 = vmatprep.subr.bf16.mxu0 0
  %447 = vmatpush1.bf16.msra.mxu0 0
  %448 = vmatprep.subr.bf16.mxu0 0
  %449 = vmatpush1.bf16.msra.mxu0 0
  %450 = vmatprep.subr.bf16.mxu0 0
  %451 = vmatpush1.bf16.msra.mxu0 0
  %452 = vmatprep.subr.bf16.mxu0 0
  %453 = vmatpush1.bf16.msra.mxu0 0
  %454 = vmatprep.mubr.bf16.mxu0 0
  %455 = vmatmul.mubr.bf16.gmra.mrb[0].mxu0 %v340
  %v456 = vpop.f32.mrb[0].mxu0
  %v457 = vadd.f32 %v417, %v456
  %v458 = vpop.f32.mrb[0].mxu0
  %v459 = vpop.f32.mrb[0].mxu0
  %v460 = vpop.f32.mrb[0].mxu0
  %461 = vdwg.mxu0
  %v462 = vld [vmem:[%s3] sm:$0x1]
  %v463 = vld [vmem:[%s4] sm:$0x1]
  %v464 = vsel %vm338, %v457, 0.0
  %v465 = vrot.slane %v464, 4
  %v466 = vadd.f32 %v464, %v465
  %v467 = vrot.slane %v466, 2
  %v468 = vadd.f32 %v466, %v467
  %v469 = vrot.slane %v468, 1
  %v470 = vadd.f32 %v468, %v469
  %v471 = vmul.f32 %v470, 0.125
  %v472 = vsub.f32 %v457, %v471
  %v473 = vmul.f32 %v472, %v472
  %v474 = vsel %vm338, %v473, 0.0
  %v475 = vrot.slane %v474, 4
  %v476 = vadd.f32 %v474, %v475
  %v477 = vrot.slane %v476, 2
  %v478 = vadd.f32 %v476, %v477
  %v479 = vrot.slane %v478, 1
  %v480 = vadd.f32 %v478, %v479
  %v481 = vmul.f32 %v480, 0.125
  %v482 = vadd.f32 %v481, 1e-05
  %v483 = vrsqrt.pop %v482
  %v484 = vmul.f32 %v462, %v483
  %v486 = vlaneseq
  %v487 = vshrl.u32 %v486, 7
  %v488 = vsub.s32 0, %v487
  %v489 = vrot.slane %v484, %v488
  %v491 = vmul.f32 %v472, %v489
  %v493 = vlaneseq
  %v494 = vshrl.u32 %v493, 7
  %v495 = vsub.s32 0, %v494
  %v496 = vrot.slane %v463, %v495
  %v498 = vadd.f32 %v491, %v496
  %vm499 = vcmp.gt.f32.partialorder %v498, 0.0
  %v500 = vmul.f32 %v498, 0.01
  %v501 = vsel %vm499, %v498, %v500
  %v502 = vpack.c.bf16 %v501, %v501
  %v503 = vld [vmem:[%s5] sm:$0xf]
  %v504 = vld [vmem:[%s5 + $0x4] sm:$0xf]
  %v505 = vld [vmem:[%s5 + $0x8] sm:$0xf]
  %v506 = vld [vmem:[%s5 + $0xc] sm:$0xf]
  %v507 = vld [vmem:[%s5 + $0x10] sm:$0xf]
  %v508 = vld [vmem:[%s5 + $0x14] sm:$0xf]
  %v509 = vld [vmem:[%s5 + $0x18] sm:$0xf]
  %v510 = vld [vmem:[%s5 + $0x1c] sm:$0xf]
  %v519 = vunpack.c.l.b16 %v503
  %v520 = vunpack.c.l.b16 %v504
  %v521 = vunpack.c.l.b16 %v505
  %v522 = vunpack.c.l.b16 %v506
  %v523 = vunpack.c.l.b16 %v507
  %v524 = vunpack.c.l.b16 %v508
  %v525 = vunpack.c.l.b16 %v509
  %v526 = vunpack.c.l.b16 %v510
  %v527 = vpack.c.b16 %v520, %v519
  %v528 = vpack.c.b16 %v522, %v521
  %v529 = vpack.c.b16 %v524, %v523
  %v530 = vpack.c.b16 %v526, %v525
  %v536 = vsel %vm338, %v502, 0
  %538 = vmatprep.subr.bf16.mxu0 0
  %539 = vmatpush1.bf16.msra.mxu0 %v527
  %540 = vmatprep.subr.bf16.mxu0 0
  %541 = vmatpush1.bf16.msra.mxu0 %v528
  %542 = vmatprep.subr.bf16.mxu0 0
  %543 = vmatpush1.bf16.msra.mxu0 %v529
  %544 = vmatprep.subr.bf16.mxu0 0
  %545 = vmatpush1.bf16.msra.mxu0 %v530
  %546 = vmatprep.subr.bf16.mxu0 0
  %547 = vmatpush1.bf16.msra.mxu0 0
  %548 = vmatprep.subr.bf16.mxu0 0
  %549 = vmatpush1.bf16.msra.mxu0 0
  %550 = vmatprep.subr.bf16.mxu0 0
  %551 = vmatpush1.bf16.msra.mxu0 0
  %552 = vmatprep.subr.bf16.mxu0 0
  %553 = vmatpush1.bf16.msra.mxu0 0
  %554 = vmatprep.subr.bf16.mxu0 0
  %555 = vmatpush1.bf16.msra.mxu0 0
  %556 = vmatprep.subr.bf16.mxu0 0
  %557 = vmatpush1.bf16.msra.mxu0 0
  %558 = vmatprep.subr.bf16.mxu0 0
  %559 = vmatpush1.bf16.msra.mxu0 0
  %560 = vmatprep.subr.bf16.mxu0 0
  %561 = vmatpush1.bf16.msra.mxu0 0
  %562 = vmatprep.subr.bf16.mxu0 0
  %563 = vmatpush1.bf16.msra.mxu0 0
  %564 = vmatprep.subr.bf16.mxu0 0
  %565 = vmatpush1.bf16.msra.mxu0 0
  %566 = vmatprep.subr.bf16.mxu0 0
  %567 = vmatpush1.bf16.msra.mxu0 0
  %568 = vmatprep.subr.bf16.mxu0 0
  %569 = vmatpush1.bf16.msra.mxu0 0
  %570 = vmatprep.mubr.bf16.mxu0 0
  %571 = vmatmul.mubr.bf16.gmra.mrb[0].mxu0 %v536
  %v572 = vpop.f32.mrb[0].mxu0
  %v573 = vadd.f32 0.0, %v572
  %v574 = vpop.f32.mrb[0].mxu0
  %v575 = vpop.f32.mrb[0].mxu0
  %v576 = vpop.f32.mrb[0].mxu0
  %577 = vdwg.mxu0
  %v578 = vld [vmem:[%s6] sm:$0x1]
  %v579 = vld [vmem:[%s7] sm:$0x1]
  %v580 = vsel %vm338, %v573, 0.0
  %v581 = vrot.slane %v580, 4
  %v582 = vadd.f32 %v580, %v581
  %v583 = vrot.slane %v582, 2
  %v584 = vadd.f32 %v582, %v583
  %v585 = vrot.slane %v584, 1
  %v586 = vadd.f32 %v584, %v585
  %v587 = vmul.f32 %v586, 0.125
  %v588 = vsub.f32 %v573, %v587
  %v589 = vmul.f32 %v588, %v588
  %v590 = vsel %vm338, %v589, 0.0
  %v591 = vrot.slane %v590, 4
  %v592 = vadd.f32 %v590, %v591
  %v593 = vrot.slane %v592, 2
  %v594 = vadd.f32 %v592, %v593
  %v595 = vrot.slane %v594, 1
  %v596 = vadd.f32 %v594, %v595
  %v597 = vmul.f32 %v596, 0.125
  %v598 = vadd.f32 %v597, 1e-05
  %v599 = vrsqrt.pop %v598
  %v600 = vmul.f32 %v578, %v599
  %v602 = vlaneseq
  %v603 = vshrl.u32 %v602, 7
  %v604 = vsub.s32 0, %v603
  %v605 = vrot.slane %v600, %v604
  %v607 = vmul.f32 %v588, %v605
  %v609 = vlaneseq
  %v610 = vshrl.u32 %v609, 7
  %v611 = vsub.s32 0, %v610
  %v612 = vrot.slane %v579, %v611
  %v614 = vadd.f32 %v607, %v612
  %v615 = vld [vmem:[%s0] sm:$0xff]
  %v616 = vadd.f32 %v615, %v614
  %617 = vst.msk [vmem:[%s8] sm:$0xff] %vm338, %v616
  // Predicated region
  $region34: #{encoder_forward.21} parent=0 // pred_check
    _
  $region35: #{encoder_forward.21} parent=0 // pred_check_branch
    %619 = sbr.rel (0) target = $region37
  $region36: #{encoder_forward.21} parent=0 // pred_region
    _
  $region37: #{encoder_forward.21} parent=0 // pred_fallthru
    _
  // Predicated region
  $region38: #{encoder_forward.21} parent=0 // pred_check
    _
  $region39: #{encoder_forward.21} parent=0 // pred_check_branch
    %621 = sbr.rel (0) target = $region41
  $region40: #{encoder_forward.21} parent=0 // pred_region
    _
  $region41: #{encoder_forward.21} parent=0 // pred_fallthru
    _

// kernel: encoder_forward.24
$region0: #{encoder_forward.24}
  #allocation0 [shape = 'u32[]', space=smem, size = 0x4, offset = 0x4, fixed_abs, tag = 'smem constant byte address 0x4 - core index']
  #allocation1 [shape = 'u32[144,128]{1,0:T(1,128)}', space=vmem, size = 0x12000, scoped, tag = 'internal scratch']
  %s0 = inlined_call_operand.vmem [shape: f32[8,64], index: 0, kind: input, shape index: {}]
  %s1 = inlined_call_operand.vmem [shape: bf16[8,576], index: 1, kind: input, shape index: {}]
  %s2 = inlined_call_operand.vmem [shape: bf16[576,64], index: 2, kind: input, shape index: {}]
  %s3 = inlined_call_operand.vmem [shape: f32[1,64], index: 3, kind: input, shape index: {}]
  %s4 = inlined_call_operand.vmem [shape: f32[1,64], index: 4, kind: input, shape index: {}]
  %s5 = inlined_call_operand.vmem [shape: bf16[64,64], index: 5, kind: input, shape index: {}]
  %s6 = inlined_call_operand.vmem [shape: f32[1,64], index: 6, kind: input, shape index: {}]
  %s7 = inlined_call_operand.vmem [shape: f32[1,64], index: 7, kind: input, shape index: {}]
  %s8 = inlined_call_operand.vmem [shape: f32[8,64], index: 8, kind: output, shape index: {}]
  %s9 = sld [smem:[#allocation0]]
  $region42: #{encoder_forward.24} parent=0
    _
  %s11 = ssub.s32 1, %s9
  %s12 = scalar_select 0, %s11, %s9
  // Predicated region
  $region2: #{encoder_forward.24} parent=0 // pred_check
    _
  $region3: #{encoder_forward.24} parent=0 // pred_check_branch
    %14 = sbr.rel (0) target = $region5
  $region4: #{encoder_forward.24} parent=0 // pred_region
    _
  $region5: #{encoder_forward.24} parent=0 // pred_fallthru
    _
  // Predicated region
  $region6: #{encoder_forward.24} parent=0 // pred_check
    _
  $region7: #{encoder_forward.24} parent=0 // pred_check_branch
    %16 = sbr.rel (0) target = $region9
  $region8: #{encoder_forward.24} parent=0 // pred_region
    _
  $region9: #{encoder_forward.24} parent=0 // pred_fallthru
    _
  // Predicated region
  $region10: #{encoder_forward.24} parent=0 // pred_check
    _
  $region11: #{encoder_forward.24} parent=0 // pred_check_branch
    %18 = sbr.rel (0) target = $region13
  $region12: #{encoder_forward.24} parent=0 // pred_region
    _
  $region13: #{encoder_forward.24} parent=0 // pred_fallthru
    _
  // Predicated region
  $region14: #{encoder_forward.24} parent=0 // pred_check
    _
  $region15: #{encoder_forward.24} parent=0 // pred_check_branch
    %20 = sbr.rel (0) target = $region17
  $region16: #{encoder_forward.24} parent=0 // pred_region
    _
  $region17: #{encoder_forward.24} parent=0 // pred_fallthru
    _
  // Predicated region
  $region18: #{encoder_forward.24} parent=0 // pred_check
    _
  $region19: #{encoder_forward.24} parent=0 // pred_check_branch
    %22 = sbr.rel (0) target = $region21
  $region20: #{encoder_forward.24} parent=0 // pred_region
    _
  $region21: #{encoder_forward.24} parent=0 // pred_fallthru
    _
  // Predicated region
  $region22: #{encoder_forward.24} parent=0 // pred_check
    _
  $region23: #{encoder_forward.24} parent=0 // pred_check_branch
    %24 = sbr.rel (0) target = $region25
  $region24: #{encoder_forward.24} parent=0 // pred_region
    _
  $region25: #{encoder_forward.24} parent=0 // pred_fallthru
    _
  // Predicated region
  $region26: #{encoder_forward.24} parent=0 // pred_check
    _
  $region27: #{encoder_forward.24} parent=0 // pred_check_branch
    %26 = sbr.rel (0) target = $region29
  $region28: #{encoder_forward.24} parent=0 // pred_region
    _
  $region29: #{encoder_forward.24} parent=0 // pred_fallthru
    _
  // Predicated region
  $region30: #{encoder_forward.24} parent=0 // pred_check
    _
  $region31: #{encoder_forward.24} parent=0 // pred_check_branch
    %28 = sbr.rel (0) target = $region33
  $region32: #{encoder_forward.24} parent=0 // pred_region
    _
  $region33: #{encoder_forward.24} parent=0 // pred_fallthru
    _
  %v30 = vld [vmem:[%s1] sm:$0xff]
  %v31 = vld [vmem:[%s1 + $0x8] sm:$0xff]
  %v32 = vld [vmem:[%s1 + $0x10] sm:$0xf]
  %v33 = vld [vmem:[%s2] sm:$0xf]
  %v34 = vld [vmem:[%s2 + $0x4] sm:$0xf]
  %v35 = vld [vmem:[%s2 + $0x8] sm:$0xf]
  %v36 = vld [vmem:[%s2 + $0xc] sm:$0xf]
  %v37 = vld [vmem:[%s2 + $0x10] sm:$0xf]
  %v38 = vld [vmem:[%s2 + $0x14] sm:$0xf]
  %v39 = vld [vmem:[%s2 + $0x18] sm:$0xf]
  %v40 = vld [vmem:[%s2 + $0x1c] sm:$0xf]
  %v41 = vld [vmem:[%s2 + $0x20] sm:$0xf]
  %v42 = vld [vmem:[%s2 + $0x24] sm:$0xf]
  %v43 = vld [vmem:[%s2 + $0x28] sm:$0xf]
  %v44 = vld [vmem:[%s2 + $0x2c] sm:$0xf]
  %v45 = vld [vmem:[%s2 + $0x30] sm:$0xf]
  %v46 = vld [vmem:[%s2 + $0x34] sm:$0xf]
  %v47 = vld [vmem:[%s2 + $0x38] sm:$0xf]
  %v48 = vld [vmem:[%s2 + $0x3c] sm:$0xf]
  %v49 = vld [vmem:[%s2 + $0x40] sm:$0xf]
  %v50 = vld [vmem:[%s2 + $0x44] sm:$0xf]
  %v51 = vld [vmem:[%s2 + $0x48] sm:$0xf]
  %v52 = vld [vmem:[%s2 + $0x4c] sm:$0xf]
  %v53 = vld [vmem:[%s2 + $0x50] sm:$0xf]
  %v54 = vld [vmem:[%s2 + $0x54] sm:$0xf]
  %v55 = vld [vmem:[%s2 + $0x58] sm:$0xf]
  %v56 = vld [vmem:[%s2 + $0x5c] sm:$0xf]
  %v57 = vld [vmem:[%s2 + $0x60] sm:$0xf]
  %v58 = vld [vmem:[%s2 + $0x64] sm:$0xf]
  %v59 = vld [vmem:[%s2 + $0x68] sm:$0xf]
  %v60 = vld [vmem:[%s2 + $0x6c] sm:$0xf]
  %v61 = vld [vmem:[%s2 + $0x70] sm:$0xf]
  %v62 = vld [vmem:[%s2 + $0x74] sm:$0xf]
  %v63 = vld [vmem:[%s2 + $0x78] sm:$0xf]
  %v64 = vld [vmem:[%s2 + $0x7c] sm:$0xf]
  %v65 = vld [vmem:[%s2 + $0x80] sm:$0xf]
  %v66 = vld [vmem:[%s2 + $0x84] sm:$0xf]
  %v67 = vld [vmem:[%s2 + $0x88] sm:$0xf]
  %v68 = vld [vmem:[%s2 + $0x8c] sm:$0xf]
  %v69 = vld [vmem:[%s2 + $0x90] sm:$0xf]
  %v70 = vld [vmem:[%s2 + $0x94] sm:$0xf]
  %v71 = vld [vmem:[%s2 + $0x98] sm:$0xf]
  %v72 = vld [vmem:[%s2 + $0x9c] sm:$0xf]
  %v73 = vld [vmem:[%s2 + $0xa0] sm:$0xf]
  %v74 = vld [vmem:[%s2 + $0xa4] sm:$0xf]
  %v75 = vld [vmem:[%s2 + $0xa8] sm:$0xf]
  %v76 = vld [vmem:[%s2 + $0xac] sm:$0xf]
  %v77 = vld [vmem:[%s2 + $0xb0] sm:$0xf]
  %v78 = vld [vmem:[%s2 + $0xb4] sm:$0xf]
  %v79 = vld [vmem:[%s2 + $0xb8] sm:$0xf]
  %v80 = vld [vmem:[%s2 + $0xbc] sm:$0xf]
  %v81 = vld [vmem:[%s2 + $0xc0] sm:$0xf]
  %v82 = vld [vmem:[%s2 + $0xc4] sm:$0xf]
  %v83 = vld [vmem:[%s2 + $0xc8] sm:$0xf]
  %v84 = vld [vmem:[%s2 + $0xcc] sm:$0xf]
  %v85 = vld [vmem:[%s2 + $0xd0] sm:$0xf]
  %v86 = vld [vmem:[%s2 + $0xd4] sm:$0xf]
  %v87 = vld [vmem:[%s2 + $0xd8] sm:$0xf]
  %v88 = vld [vmem:[%s2 + $0xdc] sm:$0xf]
  %v89 = vld [vmem:[%s2 + $0xe0] sm:$0xf]
  %v90 = vld [vmem:[%s2 + $0xe4] sm:$0xf]
  %v91 = vld [vmem:[%s2 + $0xe8] sm:$0xf]
  %v92 = vld [vmem:[%s2 + $0xec] sm:$0xf]
  %v93 = vld [vmem:[%s2 + $0xf0] sm:$0xf]
  %v94 = vld [vmem:[%s2 + $0xf4] sm:$0xf]
  %v95 = vld [vmem:[%s2 + $0xf8] sm:$0xf]
  %v96 = vld [vmem:[%s2 + $0xfc] sm:$0xf]
  %v97 = vld [vmem:[%s2 + $0x100] sm:$0xf]
  %v98 = vld [vmem:[%s2 + $0x104] sm:$0xf]
  %v99 = vld [vmem:[%s2 + $0x108] sm:$0xf]
  %v100 = vld [vmem:[%s2 + $0x10c] sm:$0xf]
  %v101 = vld [vmem:[%s2 + $0x110] sm:$0xf]
  %v102 = vld [vmem:[%s2 + $0x114] sm:$0xf]
  %v103 = vld [vmem:[%s2 + $0x118] sm:$0xf]
  %v104 = vld [vmem:[%s2 + $0x11c] sm:$0xf]
  %v108 = vunpack.c.l.b16 %v30
  %v109 = vunpack.c.h.b16 %v30
  %v110 = vunpack.c.l.b16 %v31
  %v111 = vunpack.c.h.b16 %v31
  %v112 = vunpack.c.l.b16 %v32
  %v113 = vpack.c.b16 %v108, %v108
  %v114 = vpack.c.b16 %v109, %v109
  %v115 = vpack.c.b16 %v110, %v110
  %v116 = vpack.c.b16 %v111, %v111
  %v117 = vpack.c.b16 %v112, %v112
  %v194 = vunpack.c.l.b16 %v33
  %v195 = vunpack.c.l.b16 %v34
  %v196 = vunpack.c.l.b16 %v35
  %v197 = vunpack.c.l.b16 %v36
  %v198 = vunpack.c.l.b16 %v37
  %v199 = vunpack.c.l.b16 %v38
  %v200 = vunpack.c.l.b16 %v39
  %v201 = vunpack.c.l.b16 %v40
  %v202 = vunpack.c.l.b16 %v41
  %v203 = vunpack.c.l.b16 %v42
  %v204 = vunpack.c.l.b16 %v43
  %v205 = vunpack.c.l.b16 %v44
  %v206 = vunpack.c.l.b16 %v45
  %v207 = vunpack.c.l.b16 %v46
  %v208 = vunpack.c.l.b16 %v47
  %v209 = vunpack.c.l.b16 %v48
  %v210 = vunpack.c.l.b16 %v49
  %v211 = vunpack.c.l.b16 %v50
  %v212 = vunpack.c.l.b16 %v51
  %v213 = vunpack.c.l.b16 %v52
  %v214 = vunpack.c.l.b16 %v53
  %v215 = vunpack.c.l.b16 %v54
  %v216 = vunpack.c.l.b16 %v55
  %v217 = vunpack.c.l.b16 %v56
  %v218 = vunpack.c.l.b16 %v57
  %v219 = vunpack.c.l.b16 %v58
  %v220 = vunpack.c.l.b16 %v59
  %v221 = vunpack.c.l.b16 %v60
  %v222 = vunpack.c.l.b16 %v61
  %v223 = vunpack.c.l.b16 %v62
  %v224 = vunpack.c.l.b16 %v63
  %v225 = vunpack.c.l.b16 %v64
  %v226 = vunpack.c.l.b16 %v65
  %v227 = vunpack.c.l.b16 %v66
  %v228 = vunpack.c.l.b16 %v67
  %v229 = vunpack.c.l.b16 %v68
  %v230 = vunpack.c.l.b16 %v69
  %v231 = vunpack.c.l.b16 %v70
  %v232 = vunpack.c.l.b16 %v71
  %v233 = vunpack.c.l.b16 %v72
  %v234 = vunpack.c.l.b16 %v73
  %v235 = vunpack.c.l.b16 %v74
  %v236 = vunpack.c.l.b16 %v75
  %v237 = vunpack.c.l.b16 %v76
  %v238 = vunpack.c.l.b16 %v77
  %v239 = vunpack.c.l.b16 %v78
  %v240 = vunpack.c.l.b16 %v79
  %v241 = vunpack.c.l.b16 %v80
  %v242 = vunpack.c.l.b16 %v81
  %v243 = vunpack.c.l.b16 %v82
  %v244 = vunpack.c.l.b16 %v83
  %v245 = vunpack.c.l.b16 %v84
  %v246 = vunpack.c.l.b16 %v85
  %v247 = vunpack.c.l.b16 %v86
  %v248 = vunpack.c.l.b16 %v87
  %v249 = vunpack.c.l.b16 %v88
  %v250 = vunpack.c.l.b16 %v89
  %v251 = vunpack.c.l.b16 %v90
  %v252 = vunpack.c.l.b16 %v91
  %v253 = vunpack.c.l.b16 %v92
  %v254 = vunpack.c.l.b16 %v93
  %v255 = vunpack.c.l.b16 %v94
  %v256 = vunpack.c.l.b16 %v95
  %v257 = vunpack.c.l.b16 %v96
  %v258 = vunpack.c.l.b16 %v97
  %v259 = vunpack.c.l.b16 %v98
  %v260 = vunpack.c.l.b16 %v99
  %v261 = vunpack.c.l.b16 %v100
  %v262 = vunpack.c.l.b16 %v101
  %v263 = vunpack.c.l.b16 %v102
  %v264 = vunpack.c.l.b16 %v103
  %v265 = vunpack.c.l.b16 %v104
  %v266 = vpack.c.b16 %v195, %v194
  %v267 = vpack.c.b16 %v197, %v196
  %v268 = vpack.c.b16 %v199, %v198
  %v269 = vpack.c.b16 %v201, %v200
  %v270 = vpack.c.b16 %v203, %v202
  %v271 = vpack.c.b16 %v205, %v204
  %v272 = vpack.c.b16 %v207, %v206
  %v273 = vpack.c.b16 %v209, %v208
  %v274 = vpack.c.b16 %v211, %v210
  %v275 = vpack.c.b16 %v213, %v212
  %v276 = vpack.c.b16 %v215, %v214
  %v277 = vpack.c.b16 %v217, %v216
  %v278 = vpack.c.b16 %v219, %v218
  %v279 = vpack.c.b16 %v221, %v220
  %v280 = vpack.c.b16 %v223, %v222
  %v281 = vpack.c.b16 %v225, %v224
  %v282 = vpack.c.b16 %v227, %v226
  %v283 = vpack.c.b16 %v229, %v228
  %v284 = vpack.c.b16 %v231, %v230
  %v285 = vpack.c.b16 %v233, %v232
  %v286 = vpack.c.b16 %v235, %v234
  %v287 = vpack.c.b16 %v237, %v236
  %v288 = vpack.c.b16 %v239, %v238
  %v289 = vpack.c.b16 %v241, %v240
  %v290 = vpack.c.b16 %v243, %v242
  %v291 = vpack.c.b16 %v245, %v244
  %v292 = vpack.c.b16 %v247, %v246
  %v293 = vpack.c.b16 %v249, %v248
  %v294 = vpack.c.b16 %v251, %v250
  %v295 = vpack.c.b16 %v253, %v252
  %v296 = vpack.c.b16 %v255, %v254
  %v297 = vpack.c.b16 %v257, %v256
  %v298 = vpack.c.b16 %v259, %v258
  %v299 = vpack.c.b16 %v261, %v260
  %v300 = vpack.c.b16 %v263, %v262
  %v301 = vpack.c.b16 %v265, %v264
  %vm338 = vcmask 523264
  %v340 = vsel %vm338, %v117, 0
  %342 = vmatprep.subr.bf16.mxu0 0
  %343 = vmatpush1.bf16.msra.mxu0 %v266
  %344 = vmatprep.subr.bf16.mxu0 0
  %345 = vmatpush1.bf16.msra.mxu0 %v267
  %346 = vmatprep.subr.bf16.mxu0 0
  %347 = vmatpush1.bf16.msra.mxu0 %v268
  %348 = vmatprep.subr.bf16.mxu0 0
  %349 = vmatpush1.bf16.msra.mxu0 %v269
  %350 = vmatprep.subr.bf16.mxu0 0
  %351 = vmatpush1.bf16.msra.mxu0 %v270
  %352 = vmatprep.subr.bf16.mxu0 0
  %353 = vmatpush1.bf16.msra.mxu0 %v271
  %354 = vmatprep.subr.bf16.mxu0 0
  %355 = vmatpush1.bf16.msra.mxu0 %v272
  %356 = vmatprep.subr.bf16.mxu0 0
  %357 = vmatpush1.bf16.msra.mxu0 %v273
  %358 = vmatprep.subr.bf16.mxu0 0
  %359 = vmatpush1.bf16.msra.mxu0 %v274
  %360 = vmatprep.subr.bf16.mxu0 0
  %361 = vmatpush1.bf16.msra.mxu0 %v275
  %362 = vmatprep.subr.bf16.mxu0 0
  %363 = vmatpush1.bf16.msra.mxu0 %v276
  %364 = vmatprep.subr.bf16.mxu0 0
  %365 = vmatpush1.bf16.msra.mxu0 %v277
  %366 = vmatprep.subr.bf16.mxu0 0
  %367 = vmatpush1.bf16.msra.mxu0 %v278
  %368 = vmatprep.subr.bf16.mxu0 0
  %369 = vmatpush1.bf16.msra.mxu0 %v279
  %370 = vmatprep.subr.bf16.mxu0 0
  %371 = vmatpush1.bf16.msra.mxu0 %v280
  %372 = vmatprep.subr.bf16.mxu0 0
  %373 = vmatpush1.bf16.msra.mxu0 %v281
  %374 = vmatprep.mubr.bf16.mxu0 %v114
  %375 = vmatmul.mubr.bf16.gmra.mrb[0].mxu0 %v113
  %v376 = vpop.f32.mrb[0].mxu0
  %v377 = vadd.f32 0.0, %v376
  %v378 = vpop.f32.mrb[0].mxu0
  %v379 = vpop.f32.mrb[0].mxu0
  %v380 = vpop.f32.mrb[0].mxu0
  %381 = vdwg.mxu0
  %382 = vmatprep.subr.bf16.mxu0 0
  %383 = vmatpush1.bf16.msra.mxu0 %v282
  %384 = vmatprep.subr.bf16.mxu0 0
  %385 = vmatpush1.bf16.msra.mxu0 %v283
  %386 = vmatprep.subr.bf16.mxu0 0
  %387 = vmatpush1.bf16.msra.mxu0 %v284
  %388 = vmatprep.subr.bf16.mxu0 0
  %389 = vmatpush1.bf16.msra.mxu0 %v285
  %390 = vmatprep.subr.bf16.mxu0 0
  %391 = vmatpush1.bf16.msra.mxu0 %v286
  %392 = vmatprep.subr.bf16.mxu0 0
  %393 = vmatpush1.bf16.msra.mxu0 %v287
  %394 = vmatprep.subr.bf16.mxu0 0
  %395 = vmatpush1.bf16.msra.mxu0 %v288
  %396 = vmatprep.subr.bf16.mxu0 0
  %397 = vmatpush1.bf16.msra.mxu0 %v289
  %398 = vmatprep.subr.bf16.mxu0 0
  %399 = vmatpush1.bf16.msra.mxu0 %v290
  %400 = vmatprep.subr.bf16.mxu0 0
  %401 = vmatpush1.bf16.msra.mxu0 %v291
  %402 = vmatprep.subr.bf16.mxu0 0
  %403 = vmatpush1.bf16.msra.mxu0 %v292
  %404 = vmatprep.subr.bf16.mxu0 0
  %405 = vmatpush1.bf16.msra.mxu0 %v293
  %406 = vmatprep.subr.bf16.mxu0 0
  %407 = vmatpush1.bf16.msra.mxu0 %v294
  %408 = vmatprep.subr.bf16.mxu0 0
  %409 = vmatpush1.bf16.msra.mxu0 %v295
  %410 = vmatprep.subr.bf16.mxu0 0
  %411 = vmatpush1.bf16.msra.mxu0 %v296
  %412 = vmatprep.subr.bf16.mxu0 0
  %413 = vmatpush1.bf16.msra.mxu0 %v297
  %414 = vmatprep.mubr.bf16.mxu0 %v116
  %415 = vmatmul.mubr.bf16.gmra.mrb[0].mxu0 %v115
  %v416 = vpop.f32.mrb[0].mxu0
  %v417 = vadd.f32 %v377, %v416
  %v418 = vpop.f32.mrb[0].mxu0
  %v419 = vpop.f32.mrb[0].mxu0
  %v420 = vpop.f32.mrb[0].mxu0
  %421 = vdwg.mxu0
  %422 = vmatprep.subr.bf16.mxu0 0
  %423 = vmatpush1.bf16.msra.mxu0 %v298
  %424 = vmatprep.subr.bf16.mxu0 0
  %425 = vmatpush1.bf16.msra.mxu0 %v299
  %426 = vmatprep.subr.bf16.mxu0 0
  %427 = vmatpush1.bf16.msra.mxu0 %v300
  %428 = vmatprep.subr.bf16.mxu0 0
  %429 = vmatpush1.bf16.msra.mxu0 %v301
  %430 = vmatprep.subr.bf16.mxu0 0
  %431 = vmatpush1.bf16.msra.mxu0 0
  %432 = vmatprep.subr.bf16.mxu0 0
  %433 = vmatpush1.bf16.msra.mxu0 0
  %434 = vmatprep.subr.bf16.mxu0 0
  %435 = vmatpush1.bf16.msra.mxu0 0
  %436 = vmatprep.subr.bf16.mxu0 0
  %437 = vmatpush1.bf16.msra.mxu0 0
  %438 = vmatprep.subr.bf16.mxu0 0
  %439 = vmatpush1.bf16.msra.mxu0 0
  %440 = vmatprep.subr.bf16.mxu0 0
  %441 = vmatpush1.bf16.msra.mxu0 0
  %442 = vmatprep.subr.bf16.mxu0 0
  %443 = vmatpush1.bf16.msra.mxu0 0
  %444 = vmatprep.subr.bf16.mxu0 0
  %445 = vmatpush1.bf16.msra.mxu0 0
  %446 = vmatprep.subr.bf16.mxu0 0
  %447 = vmatpush1.bf16.msra.mxu0 0
  %448 = vmatprep.subr.bf16.mxu0 0
  %449 = vmatpush1.bf16.msra.mxu0 0
  %450 = vmatprep.subr.bf16.mxu0 0
  %451 = vmatpush1.bf16.msra.mxu0 0
  %452 = vmatprep.subr.bf16.mxu0 0
  %453 = vmatpush1.bf16.msra.mxu0 0
  %454 = vmatprep.mubr.bf16.mxu0 0
  %455 = vmatmul.mubr.bf16.gmra.mrb[0].mxu0 %v340
  %v456 = vpop.f32.mrb[0].mxu0
  %v457 = vadd.f32 %v417, %v456
  %v458 = vpop.f32.mrb[0].mxu0
  %v459 = vpop.f32.mrb[0].mxu0
  %v460 = vpop.f32.mrb[0].mxu0
  %461 = vdwg.mxu0
  %v462 = vld [vmem:[%s3] sm:$0x1]
  %v463 = vld [vmem:[%s4] sm:$0x1]
  %v464 = vsel %vm338, %v457, 0.0
  %v465 = vrot.slane %v464, 4
  %v466 = vadd.f32 %v464, %v465
  %v467 = vrot.slane %v466, 2
  %v468 = vadd.f32 %v466, %v467
  %v469 = vrot.slane %v468, 1
  %v470 = vadd.f32 %v468, %v469
  %v471 = vmul.f32 %v470, 0.125
  %v472 = vsub.f32 %v457, %v471
  %v473 = vmul.f32 %v472, %v472
  %v474 = vsel %vm338, %v473, 0.0
  %v475 = vrot.slane %v474, 4
  %v476 = vadd.f32 %v474, %v475
  %v477 = vrot.slane %v476, 2
  %v478 = vadd.f32 %v476, %v477
  %v479 = vrot.slane %v478, 1
  %v480 = vadd.f32 %v478, %v479
  %v481 = vmul.f32 %v480, 0.125
  %v482 = vadd.f32 %v481, 1e-05
  %v483 = vrsqrt.pop %v482
  %v484 = vmul.f32 %v462, %v483
  %v486 = vlaneseq
  %v487 = vshrl.u32 %v486, 7
  %v488 = vsub.s32 0, %v487
  %v489 = vrot.slane %v484, %v488
  %v491 = vmul.f32 %v472, %v489
  %v493 = vlaneseq
  %v494 = vshrl.u32 %v493, 7
  %v495 = vsub.s32 0, %v494
  %v496 = vrot.slane %v463, %v495
  %v498 = vadd.f32 %v491, %v496
  %vm499 = vcmp.gt.f32.partialorder %v498, 0.0
  %v500 = vmul.f32 %v498, 0.01
  %v501 = vsel %vm499, %v498, %v500
  %v502 = vpack.c.bf16 %v501, %v501
  %v503 = vld [vmem:[%s5] sm:$0xf]
  %v504 = vld [vmem:[%s5 + $0x4] sm:$0xf]
  %v505 = vld [vmem:[%s5 + $0x8] sm:$0xf]
  %v506 = vld [vmem:[%s5 + $0xc] sm:$0xf]
  %v507 = vld [vmem:[%s5 + $0x10] sm:$0xf]
  %v508 = vld [vmem:[%s5 + $0x14] sm:$0xf]
  %v509 = vld [vmem:[%s5 + $0x18] sm:$0xf]
  %v510 = vld [vmem:[%s5 + $0x1c] sm:$0xf]
  %v519 = vunpack.c.l.b16 %v503
  %v520 = vunpack.c.l.b16 %v504
  %v521 = vunpack.c.l.b16 %v505
  %v522 = vunpack.c.l.b16 %v506
  %v523 = vunpack.c.l.b16 %v507
  %v524 = vunpack.c.l.b16 %v508
  %v525 = vunpack.c.l.b16 %v509
  %v526 = vunpack.c.l.b16 %v510
  %v527 = vpack.c.b16 %v520, %v519
  %v528 = vpack.c.b16 %v522, %v521
  %v529 = vpack.c.b16 %v524, %v523
  %v530 = vpack.c.b16 %v526, %v525
  %v536 = vsel %vm338, %v502, 0
  %538 = vmatprep.subr.bf16.mxu0 0
  %539 = vmatpush1.bf16.msra.mxu0 %v527
  %540 = vmatprep.subr.bf16.mxu0 0
  %541 = vmatpush1.bf16.msra.mxu0 %v528
  %542 = vmatprep.subr.bf16.mxu0 0
  %543 = vmatpush1.bf16.msra.mxu0 %v529
  %544 = vmatprep.subr.bf16.mxu0 0
  %545 = vmatpush1.bf16.msra.mxu0 %v530
  %546 = vmatprep.subr.bf16.mxu0 0
  %547 = vmatpush1.bf16.msra.mxu0 0
  %548 = vmatprep.subr.bf16.mxu0 0
  %549 = vmatpush1.bf16.msra.mxu0 0
  %550 = vmatprep.subr.bf16.mxu0 0
  %551 = vmatpush1.bf16.msra.mxu0 0
  %552 = vmatprep.subr.bf16.mxu0 0
  %553 = vmatpush1.bf16.msra.mxu0 0
  %554 = vmatprep.subr.bf16.mxu0 0
  %555 = vmatpush1.bf16.msra.mxu0 0
  %556 = vmatprep.subr.bf16.mxu0 0
  %557 = vmatpush1.bf16.msra.mxu0 0
  %558 = vmatprep.subr.bf16.mxu0 0
  %559 = vmatpush1.bf16.msra.mxu0 0
  %560 = vmatprep.subr.bf16.mxu0 0
  %561 = vmatpush1.bf16.msra.mxu0 0
  %562 = vmatprep.subr.bf16.mxu0 0
  %563 = vmatpush1.bf16.msra.mxu0 0
  %564 = vmatprep.subr.bf16.mxu0 0
  %565 = vmatpush1.bf16.msra.mxu0 0
  %566 = vmatprep.subr.bf16.mxu0 0
  %567 = vmatpush1.bf16.msra.mxu0 0
  %568 = vmatprep.subr.bf16.mxu0 0
  %569 = vmatpush1.bf16.msra.mxu0 0
  %570 = vmatprep.mubr.bf16.mxu0 0
  %571 = vmatmul.mubr.bf16.gmra.mrb[0].mxu0 %v536
  %v572 = vpop.f32.mrb[0].mxu0
  %v573 = vadd.f32 0.0, %v572
  %v574 = vpop.f32.mrb[0].mxu0
  %v575 = vpop.f32.mrb[0].mxu0
  %v576 = vpop.f32.mrb[0].mxu0
  %577 = vdwg.mxu0
  %v578 = vld [vmem:[%s6] sm:$0x1]
  %v579 = vld [vmem:[%s7] sm:$0x1]
  %v580 = vsel %vm338, %v573, 0.0
  %v581 = vrot.slane %v580, 4
  %v582 = vadd.f32 %v580, %v581
  %v583 = vrot.slane %v582, 2
  %v584 = vadd.f32 %v582, %v583
  %v585 = vrot.slane %v584, 1
  %v586 = vadd.f32 %v584, %v585
  %v587 = vmul.f32 %v586, 0.125
  %v588 = vsub.f32 %v573, %v587
  %v589 = vmul.f32 %v588, %v588
  %v590 = vsel %vm338, %v589, 0.0
  %v591 = vrot.slane %v590, 4
  %v592 = vadd.f32 %v590, %v591
  %v593 = vrot.slane %v592, 2
  %v594 = vadd.f32 %v592, %v593
  %v595 = vrot.slane %v594, 1
  %v596 = vadd.f32 %v594, %v595
  %v597 = vmul.f32 %v596, 0.125
  %v598 = vadd.f32 %v597, 1e-05
  %v599 = vrsqrt.pop %v598
  %v600 = vmul.f32 %v578, %v599
  %v602 = vlaneseq
  %v603 = vshrl.u32 %v602, 7
  %v604 = vsub.s32 0, %v603
  %v605 = vrot.slane %v600, %v604
  %v607 = vmul.f32 %v588, %v605
  %v609 = vlaneseq
  %v610 = vshrl.u32 %v609, 7
  %v611 = vsub.s32 0, %v610
  %v612 = vrot.slane %v579, %v611
  %v614 = vadd.f32 %v607, %v612
  %v615 = vld [vmem:[%s0] sm:$0xff]
  %v616 = vadd.f32 %v615, %v614
  %vm617 = vcmp.gt.f32.partialorder %v616, 0.0
  %v618 = vmul.f32 %v616, 0.01
  %v619 = vsel %vm617, %v616, %v618
  %620 = vst.msk [vmem:[%s8] sm:$0xff] %vm338, %v619
  // Predicated region
  $region34: #{encoder_forward.24} parent=0 // pred_check
    _
  $region35: #{encoder_forward.24} parent=0 // pred_check_branch
    %622 = sbr.rel (0) target = $region37
  $region36: #{encoder_forward.24} parent=0 // pred_region
    _
  $region37: #{encoder_forward.24} parent=0 // pred_fallthru
    _
  // Predicated region
  $region38: #{encoder_forward.24} parent=0 // pred_check
    _
  $region39: #{encoder_forward.24} parent=0 // pred_check_branch
    %624 = sbr.rel (0) target = $region41
  $region40: #{encoder_forward.24} parent=0 // pred_region
    _
  $region41: #{encoder_forward.24} parent=0 // pred_fallthru
    _

// kernel: encoder_forward.25
$region0: #{encoder_forward.25}
  #allocation0 [shape = 'u32[]', space=smem, size = 0x4, offset = 0x4, fixed_abs, tag = 'smem constant byte address 0x4 - core index']
  #allocation1 [shape = 'u32[144,128]{1,0:T(1,128)}', space=vmem, size = 0x12000, scoped, tag = 'internal scratch']
  %s0 = inlined_call_operand.vmem [shape: bf16[2,256], index: 0, kind: input, shape index: {}]
  %s1 = inlined_call_operand.vmem [shape: bf16[256,10], index: 1, kind: input, shape index: {}]
  %s2 = inlined_call_operand.vmem [shape: f32[1,10], index: 2, kind: input, shape index: {}]
  %s3 = inlined_call_operand.hbm [shape: f32[2,10], index: 3, kind: output, shape index: {}]
  %s4 = sld [smem:[#allocation0]]
  $region22: #{encoder_forward.25} parent=0
    _
  %s6 = ssub.s32 1, %s4
  %s7 = scalar_select 0, %s6, %s4
  $region1: #{encoder_forward.25} parent=0
    #allocation2 [shape = 'u8[1024]{0}', space=vmem, size = 0x400, scoped, tag = 'output window, operand 0, single buffered']
    #allocation3 [shape = 's32[1]{0}', space=sflag, size = 0x4, scoped, tag = 'scoped memory for encoder_forward.25']
    %8 = vsyncpa [#allocation3], 0
    // Predicated region
    $region2: #{encoder_forward.25} parent=1 // pred_check
      _
    $region3: #{encoder_forward.25} parent=1 // pred_check_branch
      %10 = sbr.rel (0) target = $region5
    $region4: #{encoder_forward.25} parent=1 // pred_region
      _
    $region5: #{encoder_forward.25} parent=1 // pred_fallthru
      _
    // Predicated region
    $region6: #{encoder_forward.25} parent=1 // pred_check
      _
    $region7: #{encoder_forward.25} parent=1 // pred_check_branch
      %12 = sbr.rel (0) target = $region9
    $region8: #{encoder_forward.25} parent=1 // pred_region
      _
    $region9: #{encoder_forward.25} parent=1 // pred_fallthru
      _
    // Predicated region
    $region10: #{encoder_forward.25} parent=1 // pred_check
      _
    $region11: #{encoder_forward.25} parent=1 // pred_check_branch
      %14 = sbr.rel (0) target = $region13
    $region12: #{encoder_forward.25} parent=1 // pred_region
      _
    $region13: #{encoder_forward.25} parent=1 // pred_fallthru
      _
    %v16 = vld [vmem:[%s0] sm:$0x3]
    %v17 = vld [vmem:[%s1] sm:$0xf]
    %v18 = vld [vmem:[%s1 + $0x4] sm:$0xf]
    %v19 = vld [vmem:[%s1 + $0x8] sm:$0xf]
    %v20 = vld [vmem:[%s1 + $0xc] sm:$0xf]
    %v21 = vld [vmem:[%s1 + $0x10] sm:$0xf]
    %v22 = vld [vmem:[%s1 + $0x14] sm:$0xf]
    %v23 = vld [vmem:[%s1 + $0x18] sm:$0xf]
    %v24 = vld [vmem:[%s1 + $0x1c] sm:$0xf]
    %v25 = vld [vmem:[%s1 + $0x20] sm:$0xf]
    %v26 = vld [vmem:[%s1 + $0x24] sm:$0xf]
    %v27 = vld [vmem:[%s1 + $0x28] sm:$0xf]
    %v28 = vld [vmem:[%s1 + $0x2c] sm:$0xf]
    %v29 = vld [vmem:[%s1 + $0x30] sm:$0xf]
    %v30 = vld [vmem:[%s1 + $0x34] sm:$0xf]
    %v31 = vld [vmem:[%s1 + $0x38] sm:$0xf]
    %v32 = vld [vmem:[%s1 + $0x3c] sm:$0xf]
    %v33 = vld [vmem:[%s1 + $0x40] sm:$0xf]
    %v34 = vld [vmem:[%s1 + $0x44] sm:$0xf]
    %v35 = vld [vmem:[%s1 + $0x48] sm:$0xf]
    %v36 = vld [vmem:[%s1 + $0x4c] sm:$0xf]
    %v37 = vld [vmem:[%s1 + $0x50] sm:$0xf]
    %v38 = vld [vmem:[%s1 + $0x54] sm:$0xf]
    %v39 = vld [vmem:[%s1 + $0x58] sm:$0xf]
    %v40 = vld [vmem:[%s1 + $0x5c] sm:$0xf]
    %v41 = vld [vmem:[%s1 + $0x60] sm:$0xf]
    %v42 = vld [vmem:[%s1 + $0x64] sm:$0xf]
    %v43 = vld [vmem:[%s1 + $0x68] sm:$0xf]
    %v44 = vld [vmem:[%s1 + $0x6c] sm:$0xf]
    %v45 = vld [vmem:[%s1 + $0x70] sm:$0xf]
    %v46 = vld [vmem:[%s1 + $0x74] sm:$0xf]
    %v47 = vld [vmem:[%s1 + $0x78] sm:$0xf]
    %v48 = vld [vmem:[%s1 + $0x7c] sm:$0xf]
    %v49 = vld [vmem:[%s2] sm:$0x1]
    %v51 = vlaneseq
    %v52 = vshrl.u32 %v51, 7
    %v53 = vsub.s32 0, %v52
    %v54 = vrot.slane %v49, %v53
    %v58 = vunpack.c.l.s4 1966171168
    %v59 = vunpack.c.0.s8 %v58
    %v60 = vlaneseq
    %v61 = vshrl.u32 %v60, 7
    %v62 = vsub.s32 %v59, %v61
    %v63 = vrot.slane %v16, %v62
    %v64 = vcombine.high %v63, %v63
    %v66 = vunpack.c.l.s4 1966171168
    %v67 = vunpack.c.0.s8 %v66
    %v68 = vlaneseq
    %v69 = vshrl.u32 %v68, 7
    %v70 = vsub.s32 %v67, %v69
    %v71 = vrot.slane %v63, %v70
    %v73 = vunpack.c.l.s4 1966171168
    %v74 = vunpack.c.0.s8 %v73
    %v75 = vlaneseq
    %v76 = vshrl.u32 %v75, 7
    %v77 = vsub.s32 %v74, %v76
    %v78 = vrot.slane %v64, %v77
    %v113 = vunpack.c.l.b16 %v17
    %v114 = vunpack.c.l.b16 %v18
    %v115 = vunpack.c.l.b16 %v19
    %v116 = vunpack.c.l.b16 %v20
    %v117 = vunpack.c.l.b16 %v21
    %v118 = vunpack.c.l.b16 %v22
    %v119 = vunpack.c.l.b16 %v23
    %v120 = vunpack.c.l.b16 %v24
    %v121 = vunpack.c.l.b16 %v25
    %v122 = vunpack.c.l.b16 %v26
    %v123 = vunpack.c.l.b16 %v27
    %v124 = vunpack.c.l.b16 %v28
    %v125 = vunpack.c.l.b16 %v29
    %v126 = vunpack.c.l.b16 %v30
    %v127 = vunpack.c.l.b16 %v31
    %v128 = vunpack.c.l.b16 %v32
    %v129 = vunpack.c.l.b16 %v33
    %v130 = vunpack.c.l.b16 %v34
    %v131 = vunpack.c.l.b16 %v35
    %v132 = vunpack.c.l.b16 %v36
    %v133 = vunpack.c.l.b16 %v37
    %v134 = vunpack.c.l.b16 %v38
    %v135 = vunpack.c.l.b16 %v39
    %v136 = vunpack.c.l.b16 %v40
    %v137 = vunpack.c.l.b16 %v41
    %v138 = vunpack.c.l.b16 %v42
    %v139 = vunpack.c.l.b16 %v43
    %v140 = vunpack.c.l.b16 %v44
    %v141 = vunpack.c.l.b16 %v45
    %v142 = vunpack.c.l.b16 %v46
    %v143 = vunpack.c.l.b16 %v47
    %v144 = vunpack.c.l.b16 %v48
    %v145 = vpack.c.b16 %v114, %v113
    %v146 = vpack.c.b16 %v116, %v115
    %v147 = vpack.c.b16 %v118, %v117
    %v148 = vpack.c.b16 %v120, %v119
    %v149 = vpack.c.b16 %v122, %v121
    %v150 = vpack.c.b16 %v124, %v123
    %v151 = vpack.c.b16 %v126, %v125
    %v152 = vpack.c.b16 %v128, %v127
    %v153 = vpack.c.b16 %v130, %v129
    %v154 = vpack.c.b16 %v132, %v131
    %v155 = vpack.c.b16 %v134, %v133
    %v156 = vpack.c.b16 %v136, %v135
    %v157 = vpack.c.b16 %v138, %v137
    %v158 = vpack.c.b16 %v140, %v139
    %v159 = vpack.c.b16 %v142, %v141
    %v160 = vpack.c.b16 %v144, %v143
    %177 = vmatprep.subr.bf16.mxu0 0
    %178 = vmatpush1.bf16.msra.mxu0 %v145
    %179 = vmatprep.subr.bf16.mxu0 0
    %180 = vmatpush1.bf16.msra.mxu0 %v146
    %181 = vmatprep.subr.bf16.mxu0 0
    %182 = vmatpush1.bf16.msra.mxu0 %v147
    %183 = vmatprep.subr.bf16.mxu0 0
    %184 = vmatpush1.bf16.msra.mxu0 %v148
    %185 = vmatprep.subr.bf16.mxu0 0
    %186 = vmatpush1.bf16.msra.mxu0 %v149
    %187 = vmatprep.subr.bf16.mxu0 0
    %188 = vmatpush1.bf16.msra.mxu0 %v150
    %189 = vmatprep.subr.bf16.mxu0 0
    %190 = vmatpush1.bf16.msra.mxu0 %v151
    %191 = vmatprep.subr.bf16.mxu0 0
    %192 = vmatpush1.bf16.msra.mxu0 %v152
    %193 = vmatprep.subr.bf16.mxu0 0
    %194 = vmatpush1.bf16.msra.mxu0 %v153
    %195 = vmatprep.subr.bf16.mxu0 0
    %196 = vmatpush1.bf16.msra.mxu0 %v154
    %197 = vmatprep.subr.bf16.mxu0 0
    %198 = vmatpush1.bf16.msra.mxu0 %v155
    %199 = vmatprep.subr.bf16.mxu0 0
    %200 = vmatpush1.bf16.msra.mxu0 %v156
    %201 = vmatprep.subr.bf16.mxu0 0
    %202 = vmatpush1.bf16.msra.mxu0 %v157
    %203 = vmatprep.subr.bf16.mxu0 0
    %204 = vmatpush1.bf16.msra.mxu0 %v158
    %205 = vmatprep.subr.bf16.mxu0 0
    %206 = vmatpush1.bf16.msra.mxu0 %v159
    %207 = vmatprep.subr.bf16.mxu0 0
    %208 = vmatpush1.bf16.msra.mxu0 %v160
    %209 = vmatprep.mubr.bf16.mxu0 %v78
    %210 = vmatmul.mubr.bf16.gmra.mrb[0].mxu0 %v71
    %v211 = vpop.f32.mrb[0].mxu0
    %v212 = vadd.f32 %v54, %v211
    %v213 = vpop.f32.mrb[0].mxu0
    %v214 = vpop.f32.mrb[0].mxu0
    %v215 = vpop.f32.mrb[0].mxu0
    %216 = vdwg.mxu0
    %vm217 = vcmask 74752
    %218 = vst.msk [vmem:[#allocation2] sm:$0x3] %vm217, %v212
    // Predicated region
    $region14: #{encoder_forward.25} parent=1 // pred_check
      _
    $region15: #{encoder_forward.25} parent=1 // pred_check_branch
      %220 = sbr.rel (0) target = $region17
    $region16: #{encoder_forward.25} parent=1 // pred_region
      %s222 = ssub.s32 32, 32
      %223 = vsyncadd [#allocation3], %s222
      %s225 = sshll.u32 [#allocation2], 4
      %s226 = int_to_ptr.vmem [resolvable:$true] %s225
      %228 = dma.vmem_to_hbm [thread:$0]  %s226, 32, %s3, [#allocation3]
    $region17: #{encoder_forward.25} parent=1 // pred_fallthru
      _
    // Predicated region
    $region18: #{encoder_forward.25} parent=1 // pred_check
      _
    $region19: #{encoder_forward.25} parent=1 // pred_check_branch
      %230 = sbr.rel (0) target = $region21
    $region20: #{encoder_forward.25} parent=1 // pred_region
      %231 = dma.done [#allocation3], 32
    $region21: #{encoder_forward.25} parent=1 // pred_fallthru
      _
    %232 = vsyncpa [#allocation3], 1

</llo_original>
